<compile_context>
chip_gen: v5e
topology: v5e:2x2
jax: 0.10.0
libtpu: 0.0.40
codegen_flags: <defaults>
</compile_context>

<pallas_src>
import functools

import jax
import jax.numpy as jnp
from jax.experimental import pallas as pl
from jax.experimental.pallas import tpu as pltpu

EPS = 1e-5
VMEM_LIMIT = 48 * 1024 * 1024
_IM2COL_STRIP_BYTES = 4 * 1024 * 1024   # target f32 im2col bytes per row strip
_IM2COL_GROUP_BYTES = 8 * 1024 * 1024   # above this, split the 9 taps into dy groups


# --------------------------------------------------------------------------
# Kernel A: fused 3x3 conv -> {maxpool | affine+ReLU} (+ residual add)
# --------------------------------------------------------------------------
def _conv3x3_block_kernel(x_ref, w_ref, s_ref, b_ref, *rest, H, W, Cin, Cout,
                          pool, pool_first, relu, th, taps_per_group, has_res):
    if has_res:
        res_ref, o_ref, xpad_ref = rest
    else:
        res_ref = None
        o_ref, xpad_ref = rest

    Wo = W // pool
    tho = th // pool

    # Zero-halo staging buffer built inside the kernel (no HBM-side jnp.pad).
    xpad_ref[...] = jnp.zeros_like(xpad_ref)
    xpad_ref[1:H + 1, 1:W + 1, :] = x_ref[0]

    scale = s_ref[...].reshape(1, 1, Cout)
    bias = b_ref[...].reshape(1, 1, Cout)

    def do_pool(t):
        if pool == 1:
            return t
        t = t.reshape(th // pool, pool, Wo, pool, Cout)
        t = jnp.max(t, axis=3)
        return jnp.max(t, axis=1)

    def do_act(t):
        t = t * scale + bias
        return jnp.maximum(t, 0.0) if relu else t

    # Row-strip loop (static): bounds im2col / accumulator VMEM and vreg pressure.
    for r0 in range(0, H, th):
        acc = None
        # K-packed im2col: each matmul contracts over taps_per_group * Cin.
        for g0 in range(0, 9, taps_per_group):
            cols = []
            for t in range(g0, g0 + taps_per_group):
                dy, dx = t // 3, t % 3
                cols.append(xpad_ref[r0 + dy:r0 + dy + th, dx:dx + W, :]
                            .reshape(th * W, Cin))
            patch = cols[0] if len(cols) == 1 else jnp.concatenate(cols, axis=-1)
            part = jnp.dot(patch,
                           w_ref[g0 * Cin:(g0 + taps_per_group) * Cin, :],
                           preferred_element_type=jnp.float32)
            acc = part if acc is None else acc + part

        y = acc.reshape(th, W, Cout)
        y = do_act(do_pool(y)) if pool_first else do_pool(do_act(y))
        y = y.reshape(1, tho, Wo * Cout)       # lane-dense layout (Wo*Cout lanes)

        ro = r0 // pool
        if has_res:
            y = y + res_ref[:, ro:ro + tho, :].astype(jnp.float32)
        o_ref[:, ro:ro + tho, :] = y.astype(o_ref.dtype)


def _pick_strip_height(H, W, Cin, pool):
    row_bytes = W * 9 * Cin * 4
    th = max(1, min(H, _IM2COL_STRIP_BYTES // row_bytes))
    p2 = 1
    while p2 * 2 <= th:
        p2 *= 2
    th = max(p2, pool)
    if H % th != 0 or th % pool != 0:
        th = H  # fallback for non power-of-two shapes
    return th


def conv3x3_block(x, w, scale, bias, *, pool=1, pool_first=False, relu=True,
                  residual=None):
    """x: (N,H,W,Cin) NHWC; w: (9, Cin, Cout) with tap index dy*3+dx;
    scale/bias: (Cout,).  Optional residual: (N, H//pool, W//pool, Cout)."""
    N, H, W, Cin = x.shape
    Cout = w.shape[-1]
    assert H % pool == 0 and W % pool == 0
    Ho, Wo = H // pool, W // pool

    th = _pick_strip_height(H, W, Cin, pool)
    taps_per_group = 9 if th * W * 9 * Cin * 4 <= _IM2COL_GROUP_BYTES else 3

    args = [x, w.reshape(9 * Cin, Cout), scale.reshape(1, Cout),
            bias.reshape(1, Cout)]
    in_specs = [
        pl.BlockSpec((1, H, W, Cin), lambda n: (n, 0, 0, 0)),
        pl.BlockSpec((9 * Cin, Cout), lambda n: (0, 0)),
        pl.BlockSpec((1, Cout), lambda n: (0, 0)),
        pl.BlockSpec((1, Cout), lambda n: (0, 0)),
    ]
    has_res = residual is not None
    if has_res:
        args.append(residual.reshape(N, Ho, Wo * Cout))
        in_specs.append(pl.BlockSpec((1, Ho, Wo * Cout), lambda n: (n, 0, 0)))

    kern = functools.partial(
        _conv3x3_block_kernel, H=H, W=W, Cin=Cin, Cout=Cout, pool=pool,
        pool_first=pool_first, relu=relu, th=th,
        taps_per_group=taps_per_group, has_res=has_res)

    out = pl.pallas_call(
        kern,
        out_shape=jax.ShapeDtypeStruct((N, Ho, Wo * Cout), x.dtype),
        grid=(N,),
        in_specs=in_specs,
        out_specs=pl.BlockSpec((1, Ho, Wo * Cout), lambda n: (n, 0, 0)),
        scratch_shapes=[pltpu.VMEM((H + 2, W + 2, Cin), x.dtype)],
        compiler_params=pltpu.CompilerParams(
            dimension_semantics=("parallel",),
            vmem_limit_bytes=VMEM_LIMIT),
    )(*args)
    return out.reshape(N, Ho, Wo, Cout)


# --------------------------------------------------------------------------
# Kernel B: ConvTranspose2d(kernel=k, stride=k) / 1x1 OutConv (+ residual add)
# --------------------------------------------------------------------------
def _convT_kernel(x_ref, w_ref, s_ref, b_ref, *rest, relu, has_res):
    if has_res:
        res_ref, o_ref = rest
    else:
        res_ref = None
        (o_ref,) = rest
    _, H, W, Cin = x_ref.shape
    kCout = w_ref.shape[-1]

    x2 = x_ref[0].reshape(H * W, Cin)
    z = jnp.dot(x2, w_ref[0], preferred_element_type=jnp.float32)  # (H*W, k*Cout)
    z = z * s_ref[...] + b_ref[...]
    if relu:
        z = jnp.maximum(z, 0.0)
    z = z.reshape(1, H, 1, W, kCout)
    if has_res:
        z = z + res_ref[...].astype(jnp.float32)
    o_ref[...] = z.astype(o_ref.dtype)


def convT_taps_to_rows(w_taps, k):
    """(k*k, Cin, Cout) with tap index dy*k+dx -> (k, Cin, k*Cout) kernel layout.
    From a PyTorch ConvTranspose2d weight (Cin, Cout, kH, kW) the tap layout is
    w.permute(2, 3, 0, 1).reshape(k*k, Cin, Cout)."""
    k2, cin, cout = w_taps.shape
    assert k2 == k * k
    return jnp.transpose(w_taps.reshape(k, k, cin, cout),
                         (0, 2, 1, 3)).reshape(k, cin, k * cout)


def convT_rows_to_taps(w_rows, k):
    kk, cin, kcout = w_rows.shape
    cout = kcout // k
    return jnp.transpose(w_rows.reshape(k, cin, k, cout),
                         (0, 2, 1, 3)).reshape(k * k, cin, cout)


def convT_block(x, w_rows, scale, bias, *, k, relu, residual=None):
    """x: (N,H,W,Cin); w_rows: (k, Cin, k*Cout); scale/bias: (Cout,).
    Returns (N, k*H, k*W, Cout).  Optional residual has that output shape."""
    N, H, W, Cin = x.shape
    kk, Cin2, kCout = w_rows.shape
    assert kk == k and Cin2 == Cin and kCout % k == 0
    Cout = kCout // k

    s_r = jnp.tile(scale, k).reshape(1, kCout)
    b_r = jnp.tile(bias, k).reshape(1, kCout)

    args = [x, w_rows, s_r, b_r]
    in_specs = [
        pl.BlockSpec((1, H, W, Cin), lambda n, d: (n, 0, 0, 0)),
        pl.BlockSpec((1, Cin, kCout), lambda n, d: (d, 0, 0)),
        pl.BlockSpec((1, kCout), lambda n, d: (0, 0)),
        pl.BlockSpec((1, kCout), lambda n, d: (0, 0)),
    ]
    has_res = residual is not None
    if has_res:
        args.append(residual.reshape(N, H, k, W, kCout))
        in_specs.append(
            pl.BlockSpec((1, H, 1, W, kCout), lambda n, d: (n, 0, d, 0, 0)))

    out = pl.pallas_call(
        functools.partial(_convT_kernel, relu=relu, has_res=has_res),
        out_shape=jax.ShapeDtypeStruct((N, H, k, W, kCout), x.dtype),
        grid=(N, k),
        in_specs=in_specs,
        out_specs=pl.BlockSpec((1, H, 1, W, kCout), lambda n, d: (n, 0, d, 0, 0)),
        compiler_params=pltpu.CompilerParams(
            dimension_semantics=("parallel", "parallel"),
            vmem_limit_bytes=VMEM_LIMIT),
    )(*args)
    # (N, H, k, W, k*Cout) is row-major identical to (N, H*k, W*k, Cout): free reshape.
    return out.reshape(N, H * k, W * k, Cout)


# --------------------------------------------------------------------------
# Sub-module blocks (BatchNorm folded into a per-channel affine)
# --------------------------------------------------------------------------
def _bn_fold(prev_bias, bn):
    gamma, beta, mean, var = bn
    g = gamma * jax.lax.rsqrt(var + EPS)
    return g, g * (prev_bias - mean) + beta


def unet_encoder(x, p, residual=None):
    # Conv2d(3x3, pad=1) -> MaxPool2d(2,2) -> BatchNorm2d -> ReLU
    s, b = _bn_fold(p['conv_b'], p['bn'])
    return conv3x3_block(x, p['conv_w'], s, b, pool=2, pool_first=True,
                         relu=True, residual=residual)


def kinet_encoder(x, p, residual=None):
    # Conv2d(3x3, pad=1) -> ConvTranspose2d(2, stride=2) -> BatchNorm2d -> ReLU
    cout = p['conv_w'].shape[-1]
    y = conv3x3_block(x, p['conv_w'], jnp.ones((cout,), x.dtype), p['conv_b'],
                      pool=1, pool_first=False, relu=False)
    s, b = _bn_fold(p['ct_b'], p['bn'])
    return convT_block(y, p['ct_w'], s, b, k=2, relu=True, residual=residual)


def down_crfb(x, p, scale, residual=None):
    # Conv2d(3x3, pad=1) -> BatchNorm2d -> ReLU -> MaxPool2d(scale, scale)
    s, b = _bn_fold(p['conv_b'], p['bn'])
    return conv3x3_block(x, p['conv_w'], s, b, pool=scale, pool_first=False,
                         relu=True, residual=residual)


def up_crfb(x, p, scale, residual=None):
    # Conv2d(3x3, pad=1) -> BatchNorm2d -> ReLU -> ConvTranspose2d(scale, stride=scale)
    c = p['conv_w'].shape[-1]
    s, b = _bn_fold(p['conv_b'], p['bn'])
    y = conv3x3_block(x, p['conv_w'], s, b, pool=1, pool_first=False, relu=True)
    return convT_block(y, p['ct_w'], jnp.ones((c,), x.dtype), p['ct_b'],
                       k=scale, relu=False, residual=residual)


def out_conv(x, p):
    cout = p['b'].shape[0]
    return convT_block(x, p['w'], jnp.ones((cout,), x.dtype), p['b'],
                       k=1, relu=False)


# --------------------------------------------------------------------------
# Full reskiUNet forward (residual adds fused into the producing kernel)
# --------------------------------------------------------------------------
def reskiunet_forward(x_nchw, params):
    x = jnp.transpose(x_nchw, (0, 2, 3, 1))  # NCHW -> NHWC

    out = unet_encoder(x, params['uNetEncoder_1'])
    out1 = kinet_encoder(x, params['kiNetEncoder_1'])
    tmp = out
    out = down_crfb(out1, params['downCRFB_1'], 4, residual=out)
    out1 = up_crfb(tmp, params['upCRFB_1'], 4, residual=out1)
    u1, o1 = out, out1

    out = unet_encoder(out, params['uNetEncoder_2'])
    out1 = kinet_encoder(out1, params['kiNetEncoder_2'])
    tmp = out
    out = down_crfb(out1, params['downCRFB_2'], 16, residual=out)
    out1 = up_crfb(tmp, params['upCRFB_2'], 16, residual=out1)
    u2, o2 = out, out1

    out = unet_encoder(out, params['uNetEncoder_3'])
    out1 = kinet_encoder(out1, params['kiNetEncoder_3'])
    tmp = out
    out = down_crfb(out1, params['downCRFB_3'], 64, residual=out)
    out1 = up_crfb(tmp, params['upCRFB_3'], 64, residual=out1)

    out = kinet_encoder(out, params['uNetDecoder_1'])     # = kiNetEncoder(64, 32)
    out1 = unet_encoder(out1, params['kiNetDecoder_1'])   # = uNetEncoder(64, 32)
    tmp = out
    out = down_crfb(out1, params['downCRFB_4'], 16, residual=out)
    out1 = up_crfb(tmp, params['upCRFB_4'], 16, residual=out1)
    out = out + u2
    out1 = out1 + o2

    out = kinet_encoder(out, params['uNetDecoder_2'])
    out1 = unet_encoder(out1, params['kiNetDecoder_2'])
    tmp = out
    out = down_crfb(out1, params['downCRFB_5'], 4, residual=out)
    out1 = up_crfb(tmp, params['upCRFB_5'], 4, residual=out1)
    out = out + u1
    out1 = out1 + o1

    out = kinet_encoder(out, params['uNetDecoder_3'])
    out1 = unet_encoder(out1, params['kiNetDecoder_3'], residual=out)  # fused final add
    logits = out_conv(out1, params['outc'])
    return jnp.transpose(logits, (0, 3, 1, 2))  # back to NCHW


# --------------------------------------------------------------------------
# Deterministic parameter init (shapes per the module's __init__)
# --------------------------------------------------------------------------
def init_params(key, n_channels, n_classes):
    it = iter(jax.random.split(key, 200))

    def nk():
        return next(it)

    def conv3x3_p(cin, cout):
        w = jax.random.normal(nk(), (9, cin, cout), jnp.float32) / jnp.sqrt(9.0 * cin)
        b = 0.05 * jax.random.normal(nk(), (cout,), jnp.float32)
        return w, b

    def convT_p(cin, cout, k):
        w = jax.random.normal(nk(), (k * k, cin, cout), jnp.float32) / jnp.sqrt(float(k * k * cin))
        b = 0.05 * jax.random.normal(nk(), (cout,), jnp.float32)
        # store in the kernel's (k, Cin, k*Cout) layout so no per-forward transpose
        return convT_taps_to_rows(w, k), b

    def bn_p(c):
        gamma = 1.0 + 0.1 * jax.random.normal(nk(), (c,), jnp.float32)
        beta = 0.1 * jax.random.normal(nk(), (c,), jnp.float32)
        mean = 0.1 * jax.random.normal(nk(), (c,), jnp.float32)
        var = 0.5 + jax.random.uniform(nk(), (c,), jnp.float32)
        return gamma, beta, mean, var

    def unet_enc_p(cin, cout):
        w, b = conv3x3_p(cin, cout)
        return dict(conv_w=w, conv_b=b, bn=bn_p(cout))

    def kinet_enc_p(cin, cout):
        w, b = conv3x3_p(cin, cout)
        wt, bt = convT_p(cout, cout, 2)
        return dict(conv_w=w, conv_b=b, ct_w=wt, ct_b=bt, bn=bn_p(cout))

    def down_p(c):
        w, b = conv3x3_p(c, c)
        return dict(conv_w=w, conv_b=b, bn=bn_p(c))

    def up_p(c, k):
        w, b = conv3x3_p(c, c)
        wt, bt = convT_p(c, c, k)
        return dict(conv_w=w, conv_b=b, ct_w=wt, ct_b=bt, bn=bn_p(c))

    p = {
        'uNetEncoder_1': unet_enc_p(n_channels, 16),
        'kiNetEncoder_1': kinet_enc_p(n_channels, 16),
        'downCRFB_1': down_p(16),
        'upCRFB_1': up_p(16, 4),
        'uNetEncoder_2': unet_enc_p(16, 32),
        'kiNetEncoder_2': kinet_enc_p(16, 32),
        'downCRFB_2': down_p(32),
        'upCRFB_2': up_p(32, 16),
        'uNetEncoder_3': unet_enc_p(32, 64),
        'kiNetEncoder_3': kinet_enc_p(32, 64),
        'downCRFB_3': down_p(64),
        'upCRFB_3': up_p(64, 64),
        'uNetDecoder_1': kinet_enc_p(64, 32),
        'kiNetDecoder_1': unet_enc_p(64, 32),
        'downCRFB_4': down_p(32),
        'upCRFB_4': up_p(32, 16),
        'uNetDecoder_2': kinet_enc_p(32, 16),
        'kiNetDecoder_2': unet_enc_p(32, 16),
        'downCRFB_5': down_p(16),
        'upCRFB_5': up_p(16, 4),
        'uNetDecoder_3': kinet_enc_p(16, 8),
        'kiNetDecoder_3': unet_enc_p(16, 8),
    }
    wo, bo = convT_p(8, n_classes, 1)
    p['outc'] = dict(w=wo, b=bo)
    return p


# --------------------------------------------------------------------------
# Pure-JAX references (sanity checks of both kernels)
# --------------------------------------------------------------------------
def _ref_unet_encoder(x, p):
    cin, cout = p['conv_w'].shape[1], p['conv_w'].shape[2]
    w = p['conv_w'].reshape(3, 3, cin, cout)  # HWIO
    y = jax.lax.conv_general_dilated(
        x, w, window_strides=(1, 1), padding='SAME',
        dimension_numbers=('NHWC', 'HWIO', 'NHWC'),
        precision=jax.lax.Precision.HIGHEST)
    y = y + p['conv_b']
    y = jax.lax.reduce_window(y, -jnp.inf, jax.lax.max,
                              (1, 2, 2, 1), (1, 2, 2, 1), 'VALID')
    gamma, beta, mean, var = p['bn']
    y = (y - mean) * (gamma * jax.lax.rsqrt(var + EPS)) + beta
    return jnp.maximum(y, 0.0)


def _ref_convT_taps(x, w_taps, bias, k):
    N, H, W, Cin = x.shape
    Cout = w_taps.shape[-1]
    z = jnp.einsum('nhwi,pio->nhwpo', x, w_taps,
                   precision=jax.lax.Precision.HIGHEST)
    z = z.reshape(N, H, W, k, k, Cout)
    z = jnp.transpose(z, (0, 1, 3, 2, 4, 5)).reshape(N, H * k, W * k, Cout)
    return z + bias


if __name__ == "__main__":
    key = jax.random.PRNGKey(0)
    kp, kx, kr, kw, kb, kx2 = jax.random.split(key, 6)
    N, C, S = 2, 4, 16
    n_classes = 3

    params = init_params(kp, C, n_classes)
    x = jax.random.normal(kx, (N, C, S, S), jnp.float32)

    # Sanity check 1: fused conv3x3 + pool + BN + ReLU kernel (and fused residual).
    x_nhwc = jnp.transpose(x, (0, 2, 3, 1))
    p1 = params['uNetEncoder_1']
    ref = _ref_unet_encoder(x_nhwc, p1)
    got = unet_encoder(x_nhwc, p1)
    assert bool(jnp.allclose(got, ref, atol=1e-3, rtol=1e-3)), "conv3x3 kernel mismatch"
    r = jax.random.normal(kr, ref.shape, jnp.float32)
    got_r = unet_encoder(x_nhwc, p1, residual=r)
    assert bool(jnp.allclose(got_r, ref + r, atol=1e-3, rtol=1e-3)), "residual fuse mismatch"

    # Sanity check 2: ConvTranspose2d(k, stride=k) kernel vs pure-JAX reference.
    k_up, Ci, Co, Hs = 4, 8, 16, 4
    xt = jax.random.normal(kx2, (N, Hs, Hs, Ci), jnp.float32)
    wt = jax.random.normal(kw, (k_up * k_up, Ci, Co), jnp.float32) / jnp.sqrt(float(Ci))
    bt = 0.1 * jax.random.normal(kb, (Co,), jnp.float32)
    got_t = convT_block(xt, convT_taps_to_rows(wt, k_up),
                        jnp.ones((Co,), jnp.float32), bt, k=k_up, relu=False)
    ref_t = _ref_convT_taps(xt, wt, bt, k_up)
    assert bool(jnp.allclose(got_t, ref_t, atol=1e-3, rtol=1e-3)), "convT kernel mismatch"

    # Full forward.
    logits = jax.jit(reskiunet_forward)(x, params)
    logits = jax.block_until_ready(logits)
    assert logits.shape == (N, n_classes, S, S), logits.shape
    assert bool(jnp.all(jnp.isfinite(logits)))
    print("KERNEL_OK")
</pallas_src>

<mosaic_0001>
module attributes {stable_mosaic.version = 11 : i64} {
  func.func @_conv3x3_block_kernel(%arg0: i32, %arg1: memref<1x16x16x4xf32, #tpu.memory_space<vmem>>, %arg2: memref<36x16xf32, #tpu.memory_space<vmem>>, %arg3: memref<1x16xf32, #tpu.memory_space<vmem>>, %arg4: memref<1x16xf32, #tpu.memory_space<vmem>>, %arg5: memref<1x8x128xf32, #tpu.memory_space<vmem>>, %arg6: memref<18x18x4xf32, #tpu.memory_space<vmem>>) attributes {dimension_semantics = [#tpu.dimension_semantics<parallel>], iteration_bounds = array<i64: 2>, scalar_prefetch = 0 : i64, scratch_operands = 1 : i64, tpu.core_type = #tpu.core_type<tc>, window_params = [{transform_indices = @transform_0, window_bounds = array<i64: 1, 16, 16, 4>}, {pipeline_mode = #tpu.pipeline_mode<synchronous>, transform_indices = @transform_1, window_bounds = array<i64: 36, 16>}, {pipeline_mode = #tpu.pipeline_mode<synchronous>, transform_indices = @transform_2, window_bounds = array<i64: 1, 16>}, {pipeline_mode = #tpu.pipeline_mode<synchronous>, transform_indices = @transform_3, window_bounds = array<i64: 1, 16>}, {transform_indices = @transform_4, window_bounds = array<i64: 1, 8, 128>}]} {
    %cst = arith.constant 0.000000e+00 : f32
    %0 = vector.broadcast %cst : f32 to vector<18x18x4xf32>
    %c0 = arith.constant 0 : index
    %c0_0 = arith.constant 0 : index
    %c0_1 = arith.constant 0 : index
    %1 = vector.load %arg6[%c0, %c0_0, %c0_1] : memref<18x18x4xf32, #tpu.memory_space<vmem>>, vector<18x18x4xf32>
    tpu.vector_store %arg6[%c0, %c0_0, %c0_1], %0 {strides = array<i32>} : memref<18x18x4xf32, #tpu.memory_space<vmem>>, vector<18x18x4xf32>,
    %c0_2 = arith.constant 0 : index
    %c0_3 = arith.constant 0 : index
    %c0_4 = arith.constant 0 : index
    %c0_5 = arith.constant 0 : index
    %2 = vector.load %arg1[%c0_2, %c0_3, %c0_4, %c0_5] : memref<1x16x16x4xf32, #tpu.memory_space<vmem>>, vector<1x16x16x4xf32>
    %3 = vector.shape_cast %2 : vector<1x16x16x4xf32> to vector<16x16x4xf32>
    %c1 = arith.constant 1 : index
    %c1_6 = arith.constant 1 : index
    %c0_7 = arith.constant 0 : index
    %4 = vector.load %arg6[%c1, %c1_6, %c0_7] : memref<18x18x4xf32, #tpu.memory_space<vmem>>, vector<16x16x4xf32>
    tpu.vector_store %arg6[%c1, %c1_6, %c0_7], %3 {strides = array<i32>} : memref<18x18x4xf32, #tpu.memory_space<vmem>>, vector<16x16x4xf32>,
    %c0_8 = arith.constant 0 : index
    %c0_9 = arith.constant 0 : index
    %5 = vector.load %arg3[%c0_8, %c0_9] : memref<1x16xf32, #tpu.memory_space<vmem>>, vector<1x16xf32>
    %6 = vector.shape_cast %5 : vector<1x16xf32> to vector<1x1x16xf32>
    %c0_10 = arith.constant 0 : index
    %c0_11 = arith.constant 0 : index
    %7 = vector.load %arg4[%c0_10, %c0_11] : memref<1x16xf32, #tpu.memory_space<vmem>>, vector<1x16xf32>
    %8 = vector.shape_cast %7 : vector<1x16xf32> to vector<1x1x16xf32>
    %c0_12 = arith.constant 0 : index
    %c0_13 = arith.constant 0 : index
    %c0_14 = arith.constant 0 : index
    %9 = vector.load %arg6[%c0_12, %c0_13, %c0_14] : memref<18x18x4xf32, #tpu.memory_space<vmem>>, vector<16x16x4xf32>
    %10 = vector.shape_cast %9 : vector<16x16x4xf32> to vector<256x4xf32>
    %c0_15 = arith.constant 0 : index
    %c1_16 = arith.constant 1 : index
    %c0_17 = arith.constant 0 : index
    %11 = vector.load %arg6[%c0_15, %c1_16, %c0_17] : memref<18x18x4xf32, #tpu.memory_space<vmem>>, vector<16x16x4xf32>
    %12 = vector.shape_cast %11 : vector<16x16x4xf32> to vector<256x4xf32>
    %c0_18 = arith.constant 0 : index
    %c2 = arith.constant 2 : index
    %c0_19 = arith.constant 0 : index
    %13 = vector.load %arg6[%c0_18, %c2, %c0_19] : memref<18x18x4xf32, #tpu.memory_space<vmem>>, vector<16x16x4xf32>
    %14 = vector.shape_cast %13 : vector<16x16x4xf32> to vector<256x4xf32>
    %c1_20 = arith.constant 1 : index
    %c0_21 = arith.constant 0 : index
    %c0_22 = arith.constant 0 : index
    %15 = vector.load %arg6[%c1_20, %c0_21, %c0_22] : memref<18x18x4xf32, #tpu.memory_space<vmem>>, vector<16x16x4xf32>
    %16 = vector.shape_cast %15 : vector<16x16x4xf32> to vector<256x4xf32>
    %c1_23 = arith.constant 1 : index
    %c1_24 = arith.constant 1 : index
    %c0_25 = arith.constant 0 : index
    %17 = vector.load %arg6[%c1_23, %c1_24, %c0_25] : memref<18x18x4xf32, #tpu.memory_space<vmem>>, vector<16x16x4xf32>
    %18 = vector.shape_cast %17 : vector<16x16x4xf32> to vector<256x4xf32>
    %c1_26 = arith.constant 1 : index
    %c2_27 = arith.constant 2 : index
    %c0_28 = arith.constant 0 : index
    %19 = vector.load %arg6[%c1_26, %c2_27, %c0_28] : memref<18x18x4xf32, #tpu.memory_space<vmem>>, vector<16x16x4xf32>
    %20 = vector.shape_cast %19 : vector<16x16x4xf32> to vector<256x4xf32>
    %c2_29 = arith.constant 2 : index
    %c0_30 = arith.constant 0 : index
    %c0_31 = arith.constant 0 : index
    %21 = vector.load %arg6[%c2_29, %c0_30, %c0_31] : memref<18x18x4xf32, #tpu.memory_space<vmem>>, vector<16x16x4xf32>
    %22 = vector.shape_cast %21 : vector<16x16x4xf32> to vector<256x4xf32>
    %c2_32 = arith.constant 2 : index
    %c1_33 = arith.constant 1 : index
    %c0_34 = arith.constant 0 : index
    %23 = vector.load %arg6[%c2_32, %c1_33, %c0_34] : memref<18x18x4xf32, #tpu.memory_space<vmem>>, vector<16x16x4xf32>
    %24 = vector.shape_cast %23 : vector<16x16x4xf32> to vector<256x4xf32>
    %c2_35 = arith.constant 2 : index
    %c2_36 = arith.constant 2 : index
    %c0_37 = arith.constant 0 : index
    %25 = vector.load %arg6[%c2_35, %c2_36, %c0_37] : memref<18x18x4xf32, #tpu.memory_space<vmem>>, vector<16x16x4xf32>
    %26 = vector.shape_cast %25 : vector<16x16x4xf32> to vector<256x4xf32>
    %27 = tpu.concatenate %10, %12, %14, %16, %18, %20, %22, %24, %26 in 1 : vector<256x4xf32>, vector<256x4xf32>, vector<256x4xf32>, vector<256x4xf32>, vector<256x4xf32>, vector<256x4xf32>, vector<256x4xf32>, vector<256x4xf32>, vector<256x4xf32> -> vector<256x36xf32>
    %c0_38 = arith.constant 0 : index
    %c0_39 = arith.constant 0 : index
    %28 = vector.load %arg2[%c0_38, %c0_39] : memref<36x16xf32, #tpu.memory_space<vmem>>, vector<36x16xf32>
    %cst_40 = arith.constant dense<0.000000e+00> : vector<256x16xf32>
    %29 = tpu.matmul %27, %28, %cst_40 {dimension_numbers = #tpu.dot_dimension_numbers<[1], [0], [0], [1], [0, 0, 1, 1], [], []>} : vector<256x36xf32>, vector<36x16xf32>, vector<256x16xf32> -> vector<256x16xf32>
    %30 = vector.shape_cast %29 : vector<256x16xf32> to vector<16x16x16xf32>
    %31 = vector.shape_cast %30 : vector<16x16x16xf32> to vector<8x2x8x2x16xf32>
    %cst_41 = arith.constant dense<0xFF800000> : vector<8x2x8x16xf32>
    %32 = vector.multi_reduction <maximumf>, %31, %cst_41 [3] : vector<8x2x8x2x16xf32> to vector<8x2x8x16xf32>
    %cst_42 = arith.constant dense<0xFF800000> : vector<8x8x16xf32>
    %33 = vector.multi_reduction <maximumf>, %32, %cst_42 [1] : vector<8x2x8x16xf32> to vector<8x8x16xf32>
    %34 = vector.broadcast %6 : vector<1x1x16xf32> to vector<8x8x16xf32>
    %35 = arith.mulf %33, %34 : vector<8x8x16xf32>
    %36 = vector.broadcast %8 : vector<1x1x16xf32> to vector<8x8x16xf32>
    %37 = arith.addf %35, %36 : vector<8x8x16xf32>
    %cst_43 = arith.constant 0.000000e+00 : f32
    %38 = vector.broadcast %cst_43 : f32 to vector<8x8x16xf32>
    %39 = arith.maximumf %37, %38 : vector<8x8x16xf32>
    %40 = vector.shape_cast %39 : vector<8x8x16xf32> to vector<1x8x128xf32>
    %c0_44 = arith.constant 0 : index
    %c0_45 = arith.constant 0 : index
    %c0_46 = arith.constant 0 : index
    %41 = vector.load %arg5[%c0_44, %c0_45, %c0_46] : memref<1x8x128xf32, #tpu.memory_space<vmem>>, vector<1x8x128xf32>
    tpu.vector_store %arg5[%c0_44, %c0_45, %c0_46], %40 {strides = array<i32>} : memref<1x8x128xf32, #tpu.memory_space<vmem>>, vector<1x8x128xf32>,
    return
  }
  func.func @transform_0(%arg0: i32) -> (i32, i32, i32, i32) {
    %c0_i32 = arith.constant 0 : i32
    %c0_i32_0 = arith.constant 0 : i32
    %c0_i32_1 = arith.constant 0 : i32
    %c0_i32_2 = arith.constant 0 : i32
    return %arg0, %c0_i32, %c0_i32_0, %c0_i32_1 : i32, i32, i32, i32
  }
  func.func @transform_1(%arg0: i32) -> (i32, i32) {
    %c0_i32 = arith.constant 0 : i32
    %c0_i32_0 = arith.constant 0 : i32
    %c0_i32_1 = arith.constant 0 : i32
    return %c0_i32, %c0_i32_0 : i32, i32
  }
  func.func @transform_2(%arg0: i32) -> (i32, i32) {
    %c0_i32 = arith.constant 0 : i32
    %c0_i32_0 = arith.constant 0 : i32
    %c0_i32_1 = arith.constant 0 : i32
    return %c0_i32, %c0_i32_0 : i32, i32
  }
  func.func @transform_3(%arg0: i32) -> (i32, i32) {
    %c0_i32 = arith.constant 0 : i32
    %c0_i32_0 = arith.constant 0 : i32
    %c0_i32_1 = arith.constant 0 : i32
    return %c0_i32, %c0_i32_0 : i32, i32
  }
  func.func @transform_4(%arg0: i32) -> (i32, i32, i32) {
    %c0_i32 = arith.constant 0 : i32
    %c0_i32_0 = arith.constant 0 : i32
    %c0_i32_1 = arith.constant 0 : i32
    return %arg0, %c0_i32, %c0_i32_0 : i32, i32, i32
  }
}

</mosaic_0001>

<llo_original>
// kernel: tpu_custom_call.1
$region0: #{tpu_custom_call.1}
  #allocation0 [shape = 'u32[]', space=smem, size = 0x4, offset = 0x4, fixed_abs, tag = 'smem constant byte address 0x4 - core index']
  #allocation1 [shape = 'u32[72,128]{1,0:T(1,128)}', space=vmem, size = 0x9000, scoped, tag = 'internal scratch']
  #allocation2 [shape = 'f32[18,18,4]{2,1,0:T(8,128)}', space=vmem, size = 0x36000, scoped, tag = 'scratch operand']
  %s0 = inlined_call_operand.vmem [shape: f32[2,16,16,4], index: 0, kind: input, shape index: {}]
  %s1 = inlined_call_operand.vmem [shape: f32[36,16], index: 1, kind: input, shape index: {}]
  %s2 = inlined_call_operand.vmem [shape: f32[1,16], index: 2, kind: input, shape index: {}]
  %s3 = inlined_call_operand.vmem [shape: f32[1,16], index: 3, kind: input, shape index: {}]
  %s4 = inlined_call_operand.hbm [shape: f32[2,8,128], index: 4, kind: output, shape index: {}]
  %s5 = sld [smem:[#allocation0]]
  $region49: #{tpu_custom_call.1} parent=0
    _
  %s7 = ssub.s32 1, %s5
  %s8 = scalar_select 0, %s7, %s5
  $region1: #{tpu_custom_call.1} parent=0
    #allocation3 [shape = 'u8[8192]{0}', space=vmem, size = 0x2000, scoped, tag = 'output window, operand 0']
    #allocation4 [shape = 's32[2]{0}', space=sflag, size = 0x8, scoped, tag = 'scoped memory for tpu_custom_call.1']
    %9 = vsyncpa [#allocation4], 0
    %s10 = scalar_lea.sflag [#allocation4], 1
    %11 = vsyncpa %s10, 0
    loop: start=0, step=1, limit=4
    $region2: #{tpu_custom_call.1} parent=1 // loop_pre_header
      _
    $region3: #{tpu_custom_call.1} parent=1 // loop_header
      %s13 = sphi 0, %s17
      %p14 = scmp.ge.s32.totalorder %s13, 4
      %s23 = sphi 0, %s25
      %s26 = sphi 0, %s23
      %s27 = sphi 0, %s26
      %s43 = sphi 0, %s27
      %s47 = sphi 0, %s47
      %s49 = sphi 0, %s47
      %s50 = sphi 0, %s49
      %s64 = sphi 0, %s50
      %s68 = sphi 0, %s68
      %s70 = sphi 0, %s68
      %s71 = sphi 0, %s70
      %s85 = sphi 0, %s71
      %s89 = sphi 0, %s89
      %s91 = sphi 0, %s89
      %s92 = sphi 0, %s91
      %s106 = sphi 0, %s92
      %s112 = sphi 0, %s114
      %s115 = sphi 0, %s112
      %s116 = sphi 0, %s115
      %s132 = sphi 0, %s116
    $region4: #{tpu_custom_call.1} parent=1 // loop_header_branch
      %16 = sbr.rel (%p14) target = $region8
    $region5: #{tpu_custom_call.1} parent=1 // loop_body
      %s18 = ssub.s32 %s13, 1
      %s19 = ssub.s32 %s13, 2
      %s20 = sadd.s32 %s13, 1
      %s21 = ssub.s32 %s13, %s20
      %p22 = scmp.eq.s32.totalorder %s21, 0
      %s24 = sadd.s32 %s23, 1
      %s25 = scalar_select %p22, %s23, %s24
      %p28 = pneg %p22
      %p29 = scmp.eq.s32.totalorder %s13, 1
      %p30 = por %p28, %p29
      %p31 = scmp.ne.s32.totalorder %s23, %s26
      %p32 = scmp.eq.s32.totalorder %s13, 0
      %p33 = por %p31, %p32
      %p34 = scmp.ne.s32.totalorder %s23, %s26
      %p35 = scmp.eq.s32.totalorder %s18, 1
      %p36 = por %p34, %p35
      %p37 = scmp.ne.s32.totalorder %s26, %s27
      %p38 = scmp.eq.s32.totalorder %s18, 0
      %p39 = por %p37, %p38
      %p40 = scmp.ne.s32.totalorder %s26, %s27
      %p41 = scmp.eq.s32.totalorder %s19, 1
      %p42 = por %p40, %p41
      %p44 = scmp.ne.s32.totalorder %s27, %s43
      %p45 = scmp.eq.s32.totalorder %s19, 0
      %p46 = por %p44, %p45
      %s48 = sadd.s32 %s47, 1
      %p51 = scmp.eq.s32.totalorder %s13, 1
      %p52 = scmp.ne.s32.totalorder %s47, %s49
      %p53 = scmp.eq.s32.totalorder %s13, 0
      %p54 = por %p52, %p53
      %p55 = scmp.ne.s32.totalorder %s47, %s49
      %p56 = scmp.eq.s32.totalorder %s18, 1
      %p57 = por %p55, %p56
      %p58 = scmp.ne.s32.totalorder %s49, %s50
      %p59 = scmp.eq.s32.totalorder %s18, 0
      %p60 = por %p58, %p59
      %p61 = scmp.ne.s32.totalorder %s49, %s50
      %p62 = scmp.eq.s32.totalorder %s19, 1
      %p63 = por %p61, %p62
      %p65 = scmp.ne.s32.totalorder %s50, %s64
      %p66 = scmp.eq.s32.totalorder %s19, 0
      %p67 = por %p65, %p66
      %s69 = sadd.s32 %s68, 1
      %p72 = scmp.eq.s32.totalorder %s13, 1
      %p73 = scmp.ne.s32.totalorder %s68, %s70
      %p74 = scmp.eq.s32.totalorder %s13, 0
      %p75 = por %p73, %p74
      %p76 = scmp.ne.s32.totalorder %s68, %s70
      %p77 = scmp.eq.s32.totalorder %s18, 1
      %p78 = por %p76, %p77
      %p79 = scmp.ne.s32.totalorder %s70, %s71
      %p80 = scmp.eq.s32.totalorder %s18, 0
      %p81 = por %p79, %p80
      %p82 = scmp.ne.s32.totalorder %s70, %s71
      %p83 = scmp.eq.s32.totalorder %s19, 1
      %p84 = por %p82, %p83
      %p86 = scmp.ne.s32.totalorder %s71, %s85
      %p87 = scmp.eq.s32.totalorder %s19, 0
      %p88 = por %p86, %p87
      %s90 = sadd.s32 %s89, 1
      %p93 = scmp.eq.s32.totalorder %s13, 1
      %p94 = scmp.ne.s32.totalorder %s89, %s91
      %p95 = scmp.eq.s32.totalorder %s13, 0
      %p96 = por %p94, %p95
      %p97 = scmp.ne.s32.totalorder %s89, %s91
      %p98 = scmp.eq.s32.totalorder %s18, 1
      %p99 = por %p97, %p98
      %p100 = scmp.ne.s32.totalorder %s91, %s92
      %p101 = scmp.eq.s32.totalorder %s18, 0
      %p102 = por %p100, %p101
      %p103 = scmp.ne.s32.totalorder %s91, %s92
      %p104 = scmp.eq.s32.totalorder %s19, 1
      %p105 = por %p103, %p104
      %p107 = scmp.ne.s32.totalorder %s92, %s106
      %p108 = scmp.eq.s32.totalorder %s19, 0
      %p109 = por %p107, %p108
      %s110 = ssub.s32 %s13, %s20
      %p111 = scmp.eq.s32.totalorder %s110, 0
      %s113 = sadd.s32 %s112, 1
      %s114 = scalar_select %p111, %s112, %s113
      %p117 = pneg %p111
      %p118 = scmp.eq.s32.totalorder %s13, 1
      %p119 = por %p117, %p118
      %p120 = scmp.ne.s32.totalorder %s112, %s115
      %p121 = scmp.eq.s32.totalorder %s13, 0
      %p122 = por %p120, %p121
      %p123 = scmp.ne.s32.totalorder %s112, %s115
      %p124 = scmp.eq.s32.totalorder %s18, 1
      %p125 = por %p123, %p124
      %p126 = scmp.ne.s32.totalorder %s115, %s116
      %p127 = scmp.eq.s32.totalorder %s18, 0
      %p128 = por %p126, %p127
      %p129 = scmp.ne.s32.totalorder %s115, %s116
      %p130 = scmp.eq.s32.totalorder %s19, 1
      %p131 = por %p129, %p130
      %p133 = scmp.ne.s32.totalorder %s116, %s132
      %p134 = scmp.eq.s32.totalorder %s19, 0
      %p135 = por %p133, %p134
      %p136 = scmp.le.s32.totalorder 1, %s13
      %p137 = scmp.lt.s32.totalorder %s13, 3
      %p138 = pnand %p136, %p137
      %p139 = pneg %p138
      // Predicated region
      $region9: #{tpu_custom_call.1} parent=5 // pred_check
        _
      $region10: #{tpu_custom_call.1} parent=5 // pred_check_branch
        %141 = sbr.rel (%p138) target = $region12
      $region11: #{tpu_custom_call.1} parent=5 // pred_region
        %s142 = ssub.s32 %s13, 1
        // Predicated region
        $region13: #{tpu_custom_call.1} parent=11 // pred_check
          %p143 = pneg %p60
        $region14: #{tpu_custom_call.1} parent=11 // pred_check_branch
          %145 = sbr.rel (%p143) target = $region16
        $region15: #{tpu_custom_call.1} parent=11 // pred_region
          _
        $region16: #{tpu_custom_call.1} parent=11 // pred_fallthru
          _
        // Predicated region
        $region17: #{tpu_custom_call.1} parent=11 // pred_check
          %p146 = pneg %p81
        $region18: #{tpu_custom_call.1} parent=11 // pred_check_branch
          %148 = sbr.rel (%p146) target = $region20
        $region19: #{tpu_custom_call.1} parent=11 // pred_region
          _
        $region20: #{tpu_custom_call.1} parent=11 // pred_fallthru
          _
        // Predicated region
        $region21: #{tpu_custom_call.1} parent=11 // pred_check
          %p149 = pneg %p102
        $region22: #{tpu_custom_call.1} parent=11 // pred_check_branch
          %151 = sbr.rel (%p149) target = $region24
        $region23: #{tpu_custom_call.1} parent=11 // pred_region
          _
        $region24: #{tpu_custom_call.1} parent=11 // pred_fallthru
          _
      $region12: #{tpu_custom_call.1} parent=5 // pred_fallthru
        _
      %p152 = scmp.lt.s32.totalorder %s13, 2
      // Predicated region
      $region25: #{tpu_custom_call.1} parent=5 // pred_check
        %p153 = pneg %p152
      $region26: #{tpu_custom_call.1} parent=5 // pred_check_branch
        %155 = sbr.rel (%p153) target = $region28
      $region27: #{tpu_custom_call.1} parent=5 // pred_region
        // Predicated region
        $region29: #{tpu_custom_call.1} parent=27 // pred_check
          %p156 = pneg %p33
        $region30: #{tpu_custom_call.1} parent=27 // pred_check_branch
          %158 = sbr.rel (%p156) target = $region32
        $region31: #{tpu_custom_call.1} parent=27 // pred_region
          %p159 = scmp.lt.s32.totalorder %s13, 1
          %s160 = scalar_select %p159, %s13, 1
          %s161 = smul.addr %s160, 32
          %s162 = smul.addr %s161, 8
          %s163 = scalar_lea.vmem %s0, %s162
        $region32: #{tpu_custom_call.1} parent=27 // pred_fallthru
          _
      $region28: #{tpu_custom_call.1} parent=5 // pred_fallthru
        _
      %p164 = scmp.le.s32.totalorder 1, %s13
      %p165 = scmp.lt.s32.totalorder %s13, 3
      %p166 = pnand %p164, %p165
      %p167 = pneg %p166
      // Predicated region
      $region33: #{tpu_custom_call.1} parent=5 // pred_check
        _
      $region34: #{tpu_custom_call.1} parent=5 // pred_check_branch
        %169 = sbr.rel (%p166) target = $region36
      $region35: #{tpu_custom_call.1} parent=5 // pred_region
        %s170 = ssub.s32 %s13, 1
        %p171 = scmp.lt.s32.totalorder %s18, 1
        %s172 = scalar_select %p171, %s18, 1
        %s173 = smul.addr %s172, 32
        %s174 = smul.addr %s173, 8
        %s175 = scalar_lea.vmem %s0, %s174
        %p176 = pneg %p39
        %p177 = pneg %p36
        %p178 = pneg %p60
        %p179 = pneg %p57
        %p180 = pneg %p81
        %p181 = pneg %p78
        %p182 = pneg %p102
        %p183 = pneg %p99
        %p184 = pneg %p128
        %p185 = pneg %p125
        %s186 = sand.u32 %s115, 1
        %s187 = scalar_lea.sflag [#allocation4], %s186
        %s188 = sand.u32 %s115, 1
        %s189 = smul.addr %s188, 8
        %s190 = scalar_lea.vmem [#allocation3], %s189
        %p191 = scmp.lt.s32.totalorder %s18, 1
        %s192 = scalar_select %p191, %s18, 1
        %s193 = smul.addr %s192, 32
        %s194 = smul.addr %s193, 8
        %s195 = scalar_lea.vmem %s0, %s194
        %vm196 = vcmask 31744
        %197 = vst.msk [vmem:[#allocation2] sm:$0xff] %vm196, 0.0
        %198 = vst.msk [vmem:[#allocation2 + $0x8] sm:$0xff] %vm196, 0.0
        %vm199 = vcmask 25600
        %200 = vst.msk [vmem:[#allocation2 + $0x10] sm:$0x3] %vm199, 0.0
        %201 = vst.msk [vmem:[#allocation2 + $0x18] sm:$0xff] %vm196, 0.0
        %202 = vst.msk [vmem:[#allocation2 + $0x20] sm:$0xff] %vm196, 0.0
        %203 = vst.msk [vmem:[#allocation2 + $0x28] sm:$0x3] %vm199, 0.0
        %204 = vst.msk [vmem:[#allocation2 + $0x30] sm:$0xff] %vm196, 0.0
        %205 = vst.msk [vmem:[#allocation2 + $0x38] sm:$0xff] %vm196, 0.0
        %206 = vst.msk [vmem:[#allocation2 + $0x40] sm:$0x3] %vm199, 0.0
        %207 = vst.msk [vmem:[#allocation2 + $0x48] sm:$0xff] %vm196, 0.0
        %208 = vst.msk [vmem:[#allocation2 + $0x50] sm:$0xff] %vm196, 0.0
        %209 = vst.msk [vmem:[#allocation2 + $0x58] sm:$0x3] %vm199, 0.0
        %210 = vst.msk [vmem:[#allocation2 + $0x60] sm:$0xff] %vm196, 0.0
        %211 = vst.msk [vmem:[#allocation2 + $0x68] sm:$0xff] %vm196, 0.0
        %212 = vst.msk [vmem:[#allocation2 + $0x70] sm:$0x3] %vm199, 0.0
        %213 = vst.msk [vmem:[#allocation2 + $0x78] sm:$0xff] %vm196, 0.0
        %214 = vst.msk [vmem:[#allocation2 + $0x80] sm:$0xff] %vm196, 0.0
        %215 = vst.msk [vmem:[#allocation2 + $0x88] sm:$0x3] %vm199, 0.0
        %216 = vst.msk [vmem:[#allocation2 + $0x90] sm:$0xff] %vm196, 0.0
        %217 = vst.msk [vmem:[#allocation2 + $0x98] sm:$0xff] %vm196, 0.0
        %218 = vst.msk [vmem:[#allocation2 + $0xa0] sm:$0x3] %vm199, 0.0
        %219 = vst.msk [vmem:[#allocation2 + $0xa8] sm:$0xff] %vm196, 0.0
        %220 = vst.msk [vmem:[#allocation2 + $0xb0] sm:$0xff] %vm196, 0.0
        %221 = vst.msk [vmem:[#allocation2 + $0xb8] sm:$0x3] %vm199, 0.0
        %222 = vst.msk [vmem:[#allocation2 + $0xc0] sm:$0xff] %vm196, 0.0
        %223 = vst.msk [vmem:[#allocation2 + $0xc8] sm:$0xff] %vm196, 0.0
        %224 = vst.msk [vmem:[#allocation2 + $0xd0] sm:$0x3] %vm199, 0.0
        %225 = vst.msk [vmem:[#allocation2 + $0xd8] sm:$0xff] %vm196, 0.0
        %226 = vst.msk [vmem:[#allocation2 + $0xe0] sm:$0xff] %vm196, 0.0
        %227 = vst.msk [vmem:[#allocation2 + $0xe8] sm:$0x3] %vm199, 0.0
        %228 = vst.msk [vmem:[#allocation2 + $0xf0] sm:$0xff] %vm196, 0.0
        %229 = vst.msk [vmem:[#allocation2 + $0xf8] sm:$0xff] %vm196, 0.0
        %230 = vst.msk [vmem:[#allocation2 + $0x100] sm:$0x3] %vm199, 0.0
        %231 = vst.msk [vmem:[#allocation2 + $0x108] sm:$0xff] %vm196, 0.0
        %232 = vst.msk [vmem:[#allocation2 + $0x110] sm:$0xff] %vm196, 0.0
        %233 = vst.msk [vmem:[#allocation2 + $0x118] sm:$0x3] %vm199, 0.0
        %234 = vst.msk [vmem:[#allocation2 + $0x120] sm:$0xff] %vm196, 0.0
        %235 = vst.msk [vmem:[#allocation2 + $0x128] sm:$0xff] %vm196, 0.0
        %236 = vst.msk [vmem:[#allocation2 + $0x130] sm:$0x3] %vm199, 0.0
        %237 = vst.msk [vmem:[#allocation2 + $0x138] sm:$0xff] %vm196, 0.0
        %238 = vst.msk [vmem:[#allocation2 + $0x140] sm:$0xff] %vm196, 0.0
        %239 = vst.msk [vmem:[#allocation2 + $0x148] sm:$0x3] %vm199, 0.0
        %240 = vst.msk [vmem:[#allocation2 + $0x150] sm:$0xff] %vm196, 0.0
        %241 = vst.msk [vmem:[#allocation2 + $0x158] sm:$0xff] %vm196, 0.0
        %242 = vst.msk [vmem:[#allocation2 + $0x160] sm:$0x3] %vm199, 0.0
        %243 = vst.msk [vmem:[#allocation2 + $0x168] sm:$0xff] %vm196, 0.0
        %244 = vst.msk [vmem:[#allocation2 + $0x170] sm:$0xff] %vm196, 0.0
        %245 = vst.msk [vmem:[#allocation2 + $0x178] sm:$0x3] %vm199, 0.0
        %246 = vst.msk [vmem:[#allocation2 + $0x180] sm:$0xff] %vm196, 0.0
        %247 = vst.msk [vmem:[#allocation2 + $0x188] sm:$0xff] %vm196, 0.0
        %248 = vst.msk [vmem:[#allocation2 + $0x190] sm:$0x3] %vm199, 0.0
        %249 = vst.msk [vmem:[#allocation2 + $0x198] sm:$0xff] %vm196, 0.0
        %250 = vst.msk [vmem:[#allocation2 + $0x1a0] sm:$0xff] %vm196, 0.0
        %251 = vst.msk [vmem:[#allocation2 + $0x1a8] sm:$0x3] %vm199, 0.0
        %v252 = vld [vmem:[%s195] sm:$0xff]
        %v253 = vld [vmem:[%s195 + $0x8] sm:$0xff]
        %v254 = vld [vmem:[%s195 + $0x10] sm:$0xff]
        %v255 = vld [vmem:[%s195 + $0x18] sm:$0xff]
        %v256 = vld [vmem:[%s195 + $0x20] sm:$0xff]
        %v257 = vld [vmem:[%s195 + $0x28] sm:$0xff]
        %v258 = vld [vmem:[%s195 + $0x30] sm:$0xff]
        %v259 = vld [vmem:[%s195 + $0x38] sm:$0xff]
        %v260 = vld [vmem:[%s195 + $0x40] sm:$0xff]
        %v261 = vld [vmem:[%s195 + $0x48] sm:$0xff]
        %v262 = vld [vmem:[%s195 + $0x50] sm:$0xff]
        %v263 = vld [vmem:[%s195 + $0x58] sm:$0xff]
        %v264 = vld [vmem:[%s195 + $0x60] sm:$0xff]
        %v265 = vld [vmem:[%s195 + $0x68] sm:$0xff]
        %v266 = vld [vmem:[%s195 + $0x70] sm:$0xff]
        %v267 = vld [vmem:[%s195 + $0x78] sm:$0xff]
        %v268 = vld [vmem:[%s195 + $0x80] sm:$0xff]
        %v269 = vld [vmem:[%s195 + $0x88] sm:$0xff]
        %v270 = vld [vmem:[%s195 + $0x90] sm:$0xff]
        %v271 = vld [vmem:[%s195 + $0x98] sm:$0xff]
        %v272 = vld [vmem:[%s195 + $0xa0] sm:$0xff]
        %v273 = vld [vmem:[%s195 + $0xa8] sm:$0xff]
        %v274 = vld [vmem:[%s195 + $0xb0] sm:$0xff]
        %v275 = vld [vmem:[%s195 + $0xb8] sm:$0xff]
        %v276 = vld [vmem:[%s195 + $0xc0] sm:$0xff]
        %v277 = vld [vmem:[%s195 + $0xc8] sm:$0xff]
        %v278 = vld [vmem:[%s195 + $0xd0] sm:$0xff]
        %v279 = vld [vmem:[%s195 + $0xd8] sm:$0xff]
        %v280 = vld [vmem:[%s195 + $0xe0] sm:$0xff]
        %v281 = vld [vmem:[%s195 + $0xe8] sm:$0xff]
        %v282 = vld [vmem:[%s195 + $0xf0] sm:$0xff]
        %v283 = vld [vmem:[%s195 + $0xf8] sm:$0xff]
        %s284 = scalar_lea.vmem [#allocation2], 24
        %285 = vst.msk [vmem:[%s284 + $0x1] sm:$0xff] %vm196, %v252
        %286 = vst.msk [vmem:[%s284 + $0x9] sm:$0xff] %vm196, %v253
        %287 = vst.msk [vmem:[%s284 + $0x19] sm:$0xff] %vm196, %v254
        %288 = vst.msk [vmem:[%s284 + $0x21] sm:$0xff] %vm196, %v255
        %289 = vst.msk [vmem:[%s284 + $0x31] sm:$0xff] %vm196, %v256
        %290 = vst.msk [vmem:[%s284 + $0x39] sm:$0xff] %vm196, %v257
        %291 = vst.msk [vmem:[%s284 + $0x49] sm:$0xff] %vm196, %v258
        %292 = vst.msk [vmem:[%s284 + $0x51] sm:$0xff] %vm196, %v259
        %293 = vst.msk [vmem:[%s284 + $0x61] sm:$0xff] %vm196, %v260
        %294 = vst.msk [vmem:[%s284 + $0x69] sm:$0xff] %vm196, %v261
        %295 = vst.msk [vmem:[%s284 + $0x79] sm:$0xff] %vm196, %v262
        %296 = vst.msk [vmem:[%s284 + $0x81] sm:$0xff] %vm196, %v263
        %297 = vst.msk [vmem:[%s284 + $0x91] sm:$0xff] %vm196, %v264
        %298 = vst.msk [vmem:[%s284 + $0x99] sm:$0xff] %vm196, %v265
        %299 = vst.msk [vmem:[%s284 + $0xa9] sm:$0xff] %vm196, %v266
        %300 = vst.msk [vmem:[%s284 + $0xb1] sm:$0xff] %vm196, %v267
        %301 = vst.msk [vmem:[%s284 + $0xc1] sm:$0xff] %vm196, %v268
        %302 = vst.msk [vmem:[%s284 + $0xc9] sm:$0xff] %vm196, %v269
        %303 = vst.msk [vmem:[%s284 + $0xd9] sm:$0xff] %vm196, %v270
        %304 = vst.msk [vmem:[%s284 + $0xe1] sm:$0xff] %vm196, %v271
        %305 = vst.msk [vmem:[%s284 + $0xf1] sm:$0xff] %vm196, %v272
        %306 = vst.msk [vmem:[%s284 + $0xf9] sm:$0xff] %vm196, %v273
        %307 = vst.msk [vmem:[%s284 + $0x109] sm:$0xff] %vm196, %v274
        %308 = vst.msk [vmem:[%s284 + $0x111] sm:$0xff] %vm196, %v275
        %309 = vst.msk [vmem:[%s284 + $0x121] sm:$0xff] %vm196, %v276
        %310 = vst.msk [vmem:[%s284 + $0x129] sm:$0xff] %vm196, %v277
        %311 = vst.msk [vmem:[%s284 + $0x139] sm:$0xff] %vm196, %v278
        %312 = vst.msk [vmem:[%s284 + $0x141] sm:$0xff] %vm196, %v279
        %313 = vst.msk [vmem:[%s284 + $0x151] sm:$0xff] %vm196, %v280
        %314 = vst.msk [vmem:[%s284 + $0x159] sm:$0xff] %vm196, %v281
        %315 = vst.msk [vmem:[%s284 + $0x169] sm:$0xff] %vm196, %v282
        %316 = vst.msk [vmem:[%s284 + $0x171] sm:$0xff] %vm196, %v283
        %v317 = vld [vmem:[%s2] sm:$0x1]
        %v318 = vld [vmem:[%s3] sm:$0x1]
        %v319 = vld [vmem:[#allocation2] sm:$0xff]
        %v320 = vld [vmem:[#allocation2 + $0x8] sm:$0xff]
        %v321 = vld [vmem:[#allocation2 + $0x18] sm:$0xff]
        %v322 = vld [vmem:[#allocation2 + $0x20] sm:$0xff]
        %v323 = vld [vmem:[#allocation2 + $0x30] sm:$0xff]
        %v324 = vld [vmem:[#allocation2 + $0x38] sm:$0xff]
        %v325 = vld [vmem:[#allocation2 + $0x48] sm:$0xff]
        %v326 = vld [vmem:[#allocation2 + $0x50] sm:$0xff]
        %v327 = vld [vmem:[#allocation2 + $0x60] sm:$0xff]
        %v328 = vld [vmem:[#allocation2 + $0x68] sm:$0xff]
        %v329 = vld [vmem:[#allocation2 + $0x78] sm:$0xff]
        %v330 = vld [vmem:[#allocation2 + $0x80] sm:$0xff]
        %v331 = vld [vmem:[#allocation2 + $0x90] sm:$0xff]
        %v332 = vld [vmem:[#allocation2 + $0x98] sm:$0xff]
        %v333 = vld [vmem:[#allocation2 + $0xa8] sm:$0xff]
        %v334 = vld [vmem:[#allocation2 + $0xb0] sm:$0xff]
        %v335 = vld [vmem:[#allocation2 + $0xc0] sm:$0xff]
        %v336 = vld [vmem:[#allocation2 + $0xc8] sm:$0xff]
        %v337 = vld [vmem:[#allocation2 + $0xd8] sm:$0xff]
        %v338 = vld [vmem:[#allocation2 + $0xe0] sm:$0xff]
        %v339 = vld [vmem:[#allocation2 + $0xf0] sm:$0xff]
        %v340 = vld [vmem:[#allocation2 + $0xf8] sm:$0xff]
        %v341 = vld [vmem:[#allocation2 + $0x108] sm:$0xff]
        %v342 = vld [vmem:[#allocation2 + $0x110] sm:$0xff]
        %v343 = vld [vmem:[#allocation2 + $0x120] sm:$0xff]
        %v344 = vld [vmem:[#allocation2 + $0x128] sm:$0xff]
        %v345 = vld [vmem:[#allocation2 + $0x138] sm:$0xff]
        %v346 = vld [vmem:[#allocation2 + $0x140] sm:$0xff]
        %v347 = vld [vmem:[#allocation2 + $0x150] sm:$0xff]
        %v348 = vld [vmem:[#allocation2 + $0x158] sm:$0xff]
        %v349 = vld [vmem:[#allocation2 + $0x168] sm:$0xff]
        %v350 = vld [vmem:[#allocation2 + $0x170] sm:$0xff]
        %v351 = vld [vmem:[#allocation2 + $0x1] sm:$0xff]
        %v352 = vld [vmem:[#allocation2 + $0x9] sm:$0xff]
        %v353 = vld [vmem:[#allocation2 + $0x19] sm:$0xff]
        %v354 = vld [vmem:[#allocation2 + $0x21] sm:$0xff]
        %v355 = vld [vmem:[#allocation2 + $0x31] sm:$0xff]
        %v356 = vld [vmem:[#allocation2 + $0x39] sm:$0xff]
        %v357 = vld [vmem:[#allocation2 + $0x49] sm:$0xff]
        %v358 = vld [vmem:[#allocation2 + $0x51] sm:$0xff]
        %v359 = vld [vmem:[#allocation2 + $0x61] sm:$0xff]
        %v360 = vld [vmem:[#allocation2 + $0x69] sm:$0xff]
        %v361 = vld [vmem:[#allocation2 + $0x79] sm:$0xff]
        %v362 = vld [vmem:[#allocation2 + $0x81] sm:$0xff]
        %v363 = vld [vmem:[#allocation2 + $0x91] sm:$0xff]
        %v364 = vld [vmem:[#allocation2 + $0x99] sm:$0xff]
        %v365 = vld [vmem:[#allocation2 + $0xa9] sm:$0xff]
        %v366 = vld [vmem:[#allocation2 + $0xb1] sm:$0xff]
        %v367 = vld [vmem:[#allocation2 + $0xc1] sm:$0xff]
        %v368 = vld [vmem:[#allocation2 + $0xc9] sm:$0xff]
        %v369 = vld [vmem:[#allocation2 + $0xd9] sm:$0xff]
        %v370 = vld [vmem:[#allocation2 + $0xe1] sm:$0xff]
        %v371 = vld [vmem:[#allocation2 + $0xf1] sm:$0xff]
        %v372 = vld [vmem:[#allocation2 + $0xf9] sm:$0xff]
        %v373 = vld [vmem:[#allocation2 + $0x109] sm:$0xff]
        %v374 = vld [vmem:[#allocation2 + $0x111] sm:$0xff]
        %v375 = vld [vmem:[#allocation2 + $0x121] sm:$0xff]
        %v376 = vld [vmem:[#allocation2 + $0x129] sm:$0xff]
        %v377 = vld [vmem:[#allocation2 + $0x139] sm:$0xff]
        %v378 = vld [vmem:[#allocation2 + $0x141] sm:$0xff]
        %v379 = vld [vmem:[#allocation2 + $0x151] sm:$0xff]
        %v380 = vld [vmem:[#allocation2 + $0x159] sm:$0xff]
        %v381 = vld [vmem:[#allocation2 + $0x169] sm:$0xff]
        %v382 = vld [vmem:[#allocation2 + $0x171] sm:$0xff]
        %v383 = vld [vmem:[#allocation2 + $0x2] sm:$0xff]
        %v384 = vld [vmem:[#allocation2 + $0xa] sm:$0xff]
        %v385 = vld [vmem:[#allocation2 + $0x1a] sm:$0xff]
        %v386 = vld [vmem:[#allocation2 + $0x22] sm:$0xff]
        %v387 = vld [vmem:[#allocation2 + $0x32] sm:$0xff]
        %v388 = vld [vmem:[#allocation2 + $0x3a] sm:$0xff]
        %v389 = vld [vmem:[#allocation2 + $0x4a] sm:$0xff]
        %v390 = vld [vmem:[#allocation2 + $0x52] sm:$0xff]
        %v391 = vld [vmem:[#allocation2 + $0x62] sm:$0xff]
        %v392 = vld [vmem:[#allocation2 + $0x6a] sm:$0xff]
        %v393 = vld [vmem:[#allocation2 + $0x7a] sm:$0xff]
        %v394 = vld [vmem:[#allocation2 + $0x82] sm:$0xff]
        %v395 = vld [vmem:[#allocation2 + $0x92] sm:$0xff]
        %v396 = vld [vmem:[#allocation2 + $0x9a] sm:$0xff]
        %v397 = vld [vmem:[#allocation2 + $0xaa] sm:$0xff]
        %v398 = vld [vmem:[#allocation2 + $0xb2] sm:$0xff]
        %v399 = vld [vmem:[#allocation2 + $0xc2] sm:$0xff]
        %v400 = vld [vmem:[#allocation2 + $0xca] sm:$0xff]
        %v401 = vld [vmem:[#allocation2 + $0xda] sm:$0xff]
        %v402 = vld [vmem:[#allocation2 + $0xe2] sm:$0xff]
        %v403 = vld [vmem:[#allocation2 + $0xf2] sm:$0xff]
        %v404 = vld [vmem:[#allocation2 + $0xfa] sm:$0xff]
        %v405 = vld [vmem:[#allocation2 + $0x10a] sm:$0xff]
        %v406 = vld [vmem:[#allocation2 + $0x112] sm:$0xff]
        %v407 = vld [vmem:[#allocation2 + $0x122] sm:$0xff]
        %v408 = vld [vmem:[#allocation2 + $0x12a] sm:$0xff]
        %v409 = vld [vmem:[#allocation2 + $0x13a] sm:$0xff]
        %v410 = vld [vmem:[#allocation2 + $0x142] sm:$0xff]
        %v411 = vld [vmem:[#allocation2 + $0x152] sm:$0xff]
        %v412 = vld [vmem:[#allocation2 + $0x15a] sm:$0xff]
        %v413 = vld [vmem:[#allocation2 + $0x16a] sm:$0xff]
        %v414 = vld [vmem:[#allocation2 + $0x172] sm:$0xff]
        %v415 = vld [vmem:[%s284] sm:$0xff]
        %v416 = vld [vmem:[%s284 + $0x8] sm:$0xff]
        %v417 = vld [vmem:[%s284 + $0x18] sm:$0xff]
        %v418 = vld [vmem:[%s284 + $0x20] sm:$0xff]
        %v419 = vld [vmem:[%s284 + $0x30] sm:$0xff]
        %v420 = vld [vmem:[%s284 + $0x38] sm:$0xff]
        %v421 = vld [vmem:[%s284 + $0x48] sm:$0xff]
        %v422 = vld [vmem:[%s284 + $0x50] sm:$0xff]
        %v423 = vld [vmem:[%s284 + $0x60] sm:$0xff]
        %v424 = vld [vmem:[%s284 + $0x68] sm:$0xff]
        %v425 = vld [vmem:[%s284 + $0x78] sm:$0xff]
        %v426 = vld [vmem:[%s284 + $0x80] sm:$0xff]
        %v427 = vld [vmem:[%s284 + $0x90] sm:$0xff]
        %v428 = vld [vmem:[%s284 + $0x98] sm:$0xff]
        %v429 = vld [vmem:[%s284 + $0xa8] sm:$0xff]
        %v430 = vld [vmem:[%s284 + $0xb0] sm:$0xff]
        %v431 = vld [vmem:[%s284 + $0xc0] sm:$0xff]
        %v432 = vld [vmem:[%s284 + $0xc8] sm:$0xff]
        %v433 = vld [vmem:[%s284 + $0xd8] sm:$0xff]
        %v434 = vld [vmem:[%s284 + $0xe0] sm:$0xff]
        %v435 = vld [vmem:[%s284 + $0xf0] sm:$0xff]
        %v436 = vld [vmem:[%s284 + $0xf8] sm:$0xff]
        %v437 = vld [vmem:[%s284 + $0x108] sm:$0xff]
        %v438 = vld [vmem:[%s284 + $0x110] sm:$0xff]
        %v439 = vld [vmem:[%s284 + $0x120] sm:$0xff]
        %v440 = vld [vmem:[%s284 + $0x128] sm:$0xff]
        %v441 = vld [vmem:[%s284 + $0x138] sm:$0xff]
        %v442 = vld [vmem:[%s284 + $0x140] sm:$0xff]
        %v443 = vld [vmem:[%s284 + $0x150] sm:$0xff]
        %v444 = vld [vmem:[%s284 + $0x158] sm:$0xff]
        %v445 = vld [vmem:[%s284 + $0x168] sm:$0xff]
        %v446 = vld [vmem:[%s284 + $0x170] sm:$0xff]
        %v447 = vld [vmem:[%s284 + $0x1] sm:$0xff]
        %v448 = vld [vmem:[%s284 + $0x9] sm:$0xff]
        %v449 = vld [vmem:[%s284 + $0x19] sm:$0xff]
        %v450 = vld [vmem:[%s284 + $0x21] sm:$0xff]
        %v451 = vld [vmem:[%s284 + $0x31] sm:$0xff]
        %v452 = vld [vmem:[%s284 + $0x39] sm:$0xff]
        %v453 = vld [vmem:[%s284 + $0x49] sm:$0xff]
        %v454 = vld [vmem:[%s284 + $0x51] sm:$0xff]
        %v455 = vld [vmem:[%s284 + $0x61] sm:$0xff]
        %v456 = vld [vmem:[%s284 + $0x69] sm:$0xff]
        %v457 = vld [vmem:[%s284 + $0x79] sm:$0xff]
        %v458 = vld [vmem:[%s284 + $0x81] sm:$0xff]
        %v459 = vld [vmem:[%s284 + $0x91] sm:$0xff]
        %v460 = vld [vmem:[%s284 + $0x99] sm:$0xff]
        %v461 = vld [vmem:[%s284 + $0xa9] sm:$0xff]
        %v462 = vld [vmem:[%s284 + $0xb1] sm:$0xff]
        %v463 = vld [vmem:[%s284 + $0xc1] sm:$0xff]
        %v464 = vld [vmem:[%s284 + $0xc9] sm:$0xff]
        %v465 = vld [vmem:[%s284 + $0xd9] sm:$0xff]
        %v466 = vld [vmem:[%s284 + $0xe1] sm:$0xff]
        %v467 = vld [vmem:[%s284 + $0xf1] sm:$0xff]
        %v468 = vld [vmem:[%s284 + $0xf9] sm:$0xff]
        %v469 = vld [vmem:[%s284 + $0x109] sm:$0xff]
        %v470 = vld [vmem:[%s284 + $0x111] sm:$0xff]
        %v471 = vld [vmem:[%s284 + $0x121] sm:$0xff]
        %v472 = vld [vmem:[%s284 + $0x129] sm:$0xff]
        %v473 = vld [vmem:[%s284 + $0x139] sm:$0xff]
        %v474 = vld [vmem:[%s284 + $0x141] sm:$0xff]
        %v475 = vld [vmem:[%s284 + $0x151] sm:$0xff]
        %v476 = vld [vmem:[%s284 + $0x159] sm:$0xff]
        %v477 = vld [vmem:[%s284 + $0x169] sm:$0xff]
        %v478 = vld [vmem:[%s284 + $0x171] sm:$0xff]
        %v479 = vld [vmem:[%s284 + $0x2] sm:$0xff]
        %v480 = vld [vmem:[%s284 + $0xa] sm:$0xff]
        %v481 = vld [vmem:[%s284 + $0x1a] sm:$0xff]
        %v482 = vld [vmem:[%s284 + $0x22] sm:$0xff]
        %v483 = vld [vmem:[%s284 + $0x32] sm:$0xff]
        %v484 = vld [vmem:[%s284 + $0x3a] sm:$0xff]
        %v485 = vld [vmem:[%s284 + $0x4a] sm:$0xff]
        %v486 = vld [vmem:[%s284 + $0x52] sm:$0xff]
        %v487 = vld [vmem:[%s284 + $0x62] sm:$0xff]
        %v488 = vld [vmem:[%s284 + $0x6a] sm:$0xff]
        %v489 = vld [vmem:[%s284 + $0x7a] sm:$0xff]
        %v490 = vld [vmem:[%s284 + $0x82] sm:$0xff]
        %v491 = vld [vmem:[%s284 + $0x92] sm:$0xff]
        %v492 = vld [vmem:[%s284 + $0x9a] sm:$0xff]
        %v493 = vld [vmem:[%s284 + $0xaa] sm:$0xff]
        %v494 = vld [vmem:[%s284 + $0xb2] sm:$0xff]
        %v495 = vld [vmem:[%s284 + $0xc2] sm:$0xff]
        %v496 = vld [vmem:[%s284 + $0xca] sm:$0xff]
        %v497 = vld [vmem:[%s284 + $0xda] sm:$0xff]
        %v498 = vld [vmem:[%s284 + $0xe2] sm:$0xff]
        %v499 = vld [vmem:[%s284 + $0xf2] sm:$0xff]
        %v500 = vld [vmem:[%s284 + $0xfa] sm:$0xff]
        %v501 = vld [vmem:[%s284 + $0x10a] sm:$0xff]
        %v502 = vld [vmem:[%s284 + $0x112] sm:$0xff]
        %v503 = vld [vmem:[%s284 + $0x122] sm:$0xff]
        %v504 = vld [vmem:[%s284 + $0x12a] sm:$0xff]
        %v505 = vld [vmem:[%s284 + $0x13a] sm:$0xff]
        %v506 = vld [vmem:[%s284 + $0x142] sm:$0xff]
        %v507 = vld [vmem:[%s284 + $0x152] sm:$0xff]
        %v508 = vld [vmem:[%s284 + $0x15a] sm:$0xff]
        %v509 = vld [vmem:[%s284 + $0x16a] sm:$0xff]
        %v510 = vld [vmem:[%s284 + $0x172] sm:$0xff]
        %s511 = scalar_lea.vmem [#allocation2], 48
        %v512 = vld [vmem:[%s511] sm:$0xff]
        %v513 = vld [vmem:[%s511 + $0x8] sm:$0xff]
        %v514 = vld [vmem:[%s511 + $0x18] sm:$0xff]
        %v515 = vld [vmem:[%s511 + $0x20] sm:$0xff]
        %v516 = vld [vmem:[%s511 + $0x30] sm:$0xff]
        %v517 = vld [vmem:[%s511 + $0x38] sm:$0xff]
        %v518 = vld [vmem:[%s511 + $0x48] sm:$0xff]
        %v519 = vld [vmem:[%s511 + $0x50] sm:$0xff]
        %v520 = vld [vmem:[%s511 + $0x60] sm:$0xff]
        %v521 = vld [vmem:[%s511 + $0x68] sm:$0xff]
        %v522 = vld [vmem:[%s511 + $0x78] sm:$0xff]
        %v523 = vld [vmem:[%s511 + $0x80] sm:$0xff]
        %v524 = vld [vmem:[%s511 + $0x90] sm:$0xff]
        %v525 = vld [vmem:[%s511 + $0x98] sm:$0xff]
        %v526 = vld [vmem:[%s511 + $0xa8] sm:$0xff]
        %v527 = vld [vmem:[%s511 + $0xb0] sm:$0xff]
        %v528 = vld [vmem:[%s511 + $0xc0] sm:$0xff]
        %v529 = vld [vmem:[%s511 + $0xc8] sm:$0xff]
        %v530 = vld [vmem:[%s511 + $0xd8] sm:$0xff]
        %v531 = vld [vmem:[%s511 + $0xe0] sm:$0xff]
        %v532 = vld [vmem:[%s511 + $0xf0] sm:$0xff]
        %v533 = vld [vmem:[%s511 + $0xf8] sm:$0xff]
        %v534 = vld [vmem:[%s511 + $0x108] sm:$0xff]
        %v535 = vld [vmem:[%s511 + $0x110] sm:$0xff]
        %v536 = vld [vmem:[%s511 + $0x120] sm:$0xff]
        %v537 = vld [vmem:[%s511 + $0x128] sm:$0xff]
        %v538 = vld [vmem:[%s511 + $0x138] sm:$0xff]
        %v539 = vld [vmem:[%s511 + $0x140] sm:$0xff]
        %v540 = vld [vmem:[%s511 + $0x150] sm:$0xff]
        %v541 = vld [vmem:[%s511 + $0x158] sm:$0xff]
        %v542 = vld [vmem:[%s511 + $0x168] sm:$0xff]
        %v543 = vld [vmem:[%s511 + $0x170] sm:$0xff]
        %v544 = vld [vmem:[%s511 + $0x1] sm:$0xff]
        %v545 = vld [vmem:[%s511 + $0x9] sm:$0xff]
        %v546 = vld [vmem:[%s511 + $0x19] sm:$0xff]
        %v547 = vld [vmem:[%s511 + $0x21] sm:$0xff]
        %v548 = vld [vmem:[%s511 + $0x31] sm:$0xff]
        %v549 = vld [vmem:[%s511 + $0x39] sm:$0xff]
        %v550 = vld [vmem:[%s511 + $0x49] sm:$0xff]
        %v551 = vld [vmem:[%s511 + $0x51] sm:$0xff]
        %v552 = vld [vmem:[%s511 + $0x61] sm:$0xff]
        %v553 = vld [vmem:[%s511 + $0x69] sm:$0xff]
        %v554 = vld [vmem:[%s511 + $0x79] sm:$0xff]
        %v555 = vld [vmem:[%s511 + $0x81] sm:$0xff]
        %v556 = vld [vmem:[%s511 + $0x91] sm:$0xff]
        %v557 = vld [vmem:[%s511 + $0x99] sm:$0xff]
        %v558 = vld [vmem:[%s511 + $0xa9] sm:$0xff]
        %v559 = vld [vmem:[%s511 + $0xb1] sm:$0xff]
        %v560 = vld [vmem:[%s511 + $0xc1] sm:$0xff]
        %v561 = vld [vmem:[%s511 + $0xc9] sm:$0xff]
        %v562 = vld [vmem:[%s511 + $0xd9] sm:$0xff]
        %v563 = vld [vmem:[%s511 + $0xe1] sm:$0xff]
        %v564 = vld [vmem:[%s511 + $0xf1] sm:$0xff]
        %v565 = vld [vmem:[%s511 + $0xf9] sm:$0xff]
        %v566 = vld [vmem:[%s511 + $0x109] sm:$0xff]
        %v567 = vld [vmem:[%s511 + $0x111] sm:$0xff]
        %v568 = vld [vmem:[%s511 + $0x121] sm:$0xff]
        %v569 = vld [vmem:[%s511 + $0x129] sm:$0xff]
        %v570 = vld [vmem:[%s511 + $0x139] sm:$0xff]
        %v571 = vld [vmem:[%s511 + $0x141] sm:$0xff]
        %v572 = vld [vmem:[%s511 + $0x151] sm:$0xff]
        %v573 = vld [vmem:[%s511 + $0x159] sm:$0xff]
        %v574 = vld [vmem:[%s511 + $0x169] sm:$0xff]
        %v575 = vld [vmem:[%s511 + $0x171] sm:$0xff]
        %v576 = vld [vmem:[%s511 + $0x2] sm:$0xff]
        %v577 = vld [vmem:[%s511 + $0xa] sm:$0xff]
        %v578 = vld [vmem:[%s511 + $0x1a] sm:$0xff]
        %v579 = vld [vmem:[%s511 + $0x22] sm:$0xff]
        %v580 = vld [vmem:[%s511 + $0x32] sm:$0xff]
        %v581 = vld [vmem:[%s511 + $0x3a] sm:$0xff]
        %v582 = vld [vmem:[%s511 + $0x4a] sm:$0xff]
        %v583 = vld [vmem:[%s511 + $0x52] sm:$0xff]
        %v584 = vld [vmem:[%s511 + $0x62] sm:$0xff]
        %v585 = vld [vmem:[%s511 + $0x6a] sm:$0xff]
        %v586 = vld [vmem:[%s511 + $0x7a] sm:$0xff]
        %v587 = vld [vmem:[%s511 + $0x82] sm:$0xff]
        %v588 = vld [vmem:[%s511 + $0x92] sm:$0xff]
        %v589 = vld [vmem:[%s511 + $0x9a] sm:$0xff]
        %v590 = vld [vmem:[%s511 + $0xaa] sm:$0xff]
        %v591 = vld [vmem:[%s511 + $0xb2] sm:$0xff]
        %v592 = vld [vmem:[%s511 + $0xc2] sm:$0xff]
        %v593 = vld [vmem:[%s511 + $0xca] sm:$0xff]
        %v594 = vld [vmem:[%s511 + $0xda] sm:$0xff]
        %v595 = vld [vmem:[%s511 + $0xe2] sm:$0xff]
        %v596 = vld [vmem:[%s511 + $0xf2] sm:$0xff]
        %v597 = vld [vmem:[%s511 + $0xfa] sm:$0xff]
        %v598 = vld [vmem:[%s511 + $0x10a] sm:$0xff]
        %v599 = vld [vmem:[%s511 + $0x112] sm:$0xff]
        %v600 = vld [vmem:[%s511 + $0x122] sm:$0xff]
        %v601 = vld [vmem:[%s511 + $0x12a] sm:$0xff]
        %v602 = vld [vmem:[%s511 + $0x13a] sm:$0xff]
        %v603 = vld [vmem:[%s511 + $0x142] sm:$0xff]
        %v604 = vld [vmem:[%s511 + $0x152] sm:$0xff]
        %v605 = vld [vmem:[%s511 + $0x15a] sm:$0xff]
        %v606 = vld [vmem:[%s511 + $0x16a] sm:$0xff]
        %v607 = vld [vmem:[%s511 + $0x172] sm:$0xff]
        %640 = vrot.lane.b32.xlu0 %v351, 4
        %v641 = vpop.permute.xlu0 %640
        %642 = vrot.lane.b32.xlu0 %v352, 4
        %v643 = vpop.permute.xlu0 %642
        %644 = vrot.lane.b32.xlu0 %v353, 4
        %v645 = vpop.permute.xlu0 %644
        %646 = vrot.lane.b32.xlu0 %v354, 4
        %v647 = vpop.permute.xlu0 %646
        %648 = vrot.lane.b32.xlu0 %v355, 4
        %v649 = vpop.permute.xlu0 %648
        %650 = vrot.lane.b32.xlu0 %v356, 4
        %v651 = vpop.permute.xlu0 %650
        %652 = vrot.lane.b32.xlu0 %v357, 4
        %v653 = vpop.permute.xlu0 %652
        %654 = vrot.lane.b32.xlu0 %v358, 4
        %v655 = vpop.permute.xlu0 %654
        %656 = vrot.lane.b32.xlu0 %v359, 4
        %v657 = vpop.permute.xlu0 %656
        %658 = vrot.lane.b32.xlu0 %v360, 4
        %v659 = vpop.permute.xlu0 %658
        %660 = vrot.lane.b32.xlu0 %v361, 4
        %v661 = vpop.permute.xlu0 %660
        %662 = vrot.lane.b32.xlu0 %v362, 4
        %v663 = vpop.permute.xlu0 %662
        %664 = vrot.lane.b32.xlu0 %v363, 4
        %v665 = vpop.permute.xlu0 %664
        %666 = vrot.lane.b32.xlu0 %v364, 4
        %v667 = vpop.permute.xlu0 %666
        %668 = vrot.lane.b32.xlu0 %v365, 4
        %v669 = vpop.permute.xlu0 %668
        %670 = vrot.lane.b32.xlu0 %v366, 4
        %v671 = vpop.permute.xlu0 %670
        %672 = vrot.lane.b32.xlu0 %v367, 4
        %v673 = vpop.permute.xlu0 %672
        %674 = vrot.lane.b32.xlu0 %v368, 4
        %v675 = vpop.permute.xlu0 %674
        %676 = vrot.lane.b32.xlu0 %v369, 4
        %v677 = vpop.permute.xlu0 %676
        %678 = vrot.lane.b32.xlu0 %v370, 4
        %v679 = vpop.permute.xlu0 %678
        %680 = vrot.lane.b32.xlu0 %v371, 4
        %v681 = vpop.permute.xlu0 %680
        %682 = vrot.lane.b32.xlu0 %v372, 4
        %v683 = vpop.permute.xlu0 %682
        %684 = vrot.lane.b32.xlu0 %v373, 4
        %v685 = vpop.permute.xlu0 %684
        %686 = vrot.lane.b32.xlu0 %v374, 4
        %v687 = vpop.permute.xlu0 %686
        %688 = vrot.lane.b32.xlu0 %v375, 4
        %v689 = vpop.permute.xlu0 %688
        %690 = vrot.lane.b32.xlu0 %v376, 4
        %v691 = vpop.permute.xlu0 %690
        %692 = vrot.lane.b32.xlu0 %v377, 4
        %v693 = vpop.permute.xlu0 %692
        %694 = vrot.lane.b32.xlu0 %v378, 4
        %v695 = vpop.permute.xlu0 %694
        %696 = vrot.lane.b32.xlu0 %v379, 4
        %v697 = vpop.permute.xlu0 %696
        %698 = vrot.lane.b32.xlu0 %v380, 4
        %v699 = vpop.permute.xlu0 %698
        %700 = vrot.lane.b32.xlu0 %v381, 4
        %v701 = vpop.permute.xlu0 %700
        %702 = vrot.lane.b32.xlu0 %v382, 4
        %v703 = vpop.permute.xlu0 %702
        %768 = vrot.lane.b32.xlu0 %v383, 8
        %v769 = vpop.permute.xlu0 %768
        %770 = vrot.lane.b32.xlu0 %v384, 8
        %v771 = vpop.permute.xlu0 %770
        %772 = vrot.lane.b32.xlu0 %v385, 8
        %v773 = vpop.permute.xlu0 %772
        %774 = vrot.lane.b32.xlu0 %v386, 8
        %v775 = vpop.permute.xlu0 %774
        %776 = vrot.lane.b32.xlu0 %v387, 8
        %v777 = vpop.permute.xlu0 %776
        %778 = vrot.lane.b32.xlu0 %v388, 8
        %v779 = vpop.permute.xlu0 %778
        %780 = vrot.lane.b32.xlu0 %v389, 8
        %v781 = vpop.permute.xlu0 %780
        %782 = vrot.lane.b32.xlu0 %v390, 8
        %v783 = vpop.permute.xlu0 %782
        %784 = vrot.lane.b32.xlu0 %v391, 8
        %v785 = vpop.permute.xlu0 %784
        %786 = vrot.lane.b32.xlu0 %v392, 8
        %v787 = vpop.permute.xlu0 %786
        %788 = vrot.lane.b32.xlu0 %v393, 8
        %v789 = vpop.permute.xlu0 %788
        %790 = vrot.lane.b32.xlu0 %v394, 8
        %v791 = vpop.permute.xlu0 %790
        %792 = vrot.lane.b32.xlu0 %v395, 8
        %v793 = vpop.permute.xlu0 %792
        %794 = vrot.lane.b32.xlu0 %v396, 8
        %v795 = vpop.permute.xlu0 %794
        %796 = vrot.lane.b32.xlu0 %v397, 8
        %v797 = vpop.permute.xlu0 %796
        %798 = vrot.lane.b32.xlu0 %v398, 8
        %v799 = vpop.permute.xlu0 %798
        %800 = vrot.lane.b32.xlu0 %v399, 8
        %v801 = vpop.permute.xlu0 %800
        %802 = vrot.lane.b32.xlu0 %v400, 8
        %v803 = vpop.permute.xlu0 %802
        %804 = vrot.lane.b32.xlu0 %v401, 8
        %v805 = vpop.permute.xlu0 %804
        %806 = vrot.lane.b32.xlu0 %v402, 8
        %v807 = vpop.permute.xlu0 %806
        %808 = vrot.lane.b32.xlu0 %v403, 8
        %v809 = vpop.permute.xlu0 %808
        %810 = vrot.lane.b32.xlu0 %v404, 8
        %v811 = vpop.permute.xlu0 %810
        %812 = vrot.lane.b32.xlu0 %v405, 8
        %v813 = vpop.permute.xlu0 %812
        %814 = vrot.lane.b32.xlu0 %v406, 8
        %v815 = vpop.permute.xlu0 %814
        %816 = vrot.lane.b32.xlu0 %v407, 8
        %v817 = vpop.permute.xlu0 %816
        %818 = vrot.lane.b32.xlu0 %v408, 8
        %v819 = vpop.permute.xlu0 %818
        %820 = vrot.lane.b32.xlu0 %v409, 8
        %v821 = vpop.permute.xlu0 %820
        %822 = vrot.lane.b32.xlu0 %v410, 8
        %v823 = vpop.permute.xlu0 %822
        %824 = vrot.lane.b32.xlu0 %v411, 8
        %v825 = vpop.permute.xlu0 %824
        %826 = vrot.lane.b32.xlu0 %v412, 8
        %v827 = vpop.permute.xlu0 %826
        %828 = vrot.lane.b32.xlu0 %v413, 8
        %v829 = vpop.permute.xlu0 %828
        %830 = vrot.lane.b32.xlu0 %v414, 8
        %v831 = vpop.permute.xlu0 %830
        %896 = vrot.lane.b32.xlu0 %v415, 12
        %v897 = vpop.permute.xlu0 %896
        %898 = vrot.lane.b32.xlu0 %v416, 12
        %v899 = vpop.permute.xlu0 %898
        %900 = vrot.lane.b32.xlu0 %v417, 12
        %v901 = vpop.permute.xlu0 %900
        %902 = vrot.lane.b32.xlu0 %v418, 12
        %v903 = vpop.permute.xlu0 %902
        %904 = vrot.lane.b32.xlu0 %v419, 12
        %v905 = vpop.permute.xlu0 %904
        %906 = vrot.lane.b32.xlu0 %v420, 12
        %v907 = vpop.permute.xlu0 %906
        %908 = vrot.lane.b32.xlu0 %v421, 12
        %v909 = vpop.permute.xlu0 %908
        %910 = vrot.lane.b32.xlu0 %v422, 12
        %v911 = vpop.permute.xlu0 %910
        %912 = vrot.lane.b32.xlu0 %v423, 12
        %v913 = vpop.permute.xlu0 %912
        %914 = vrot.lane.b32.xlu0 %v424, 12
        %v915 = vpop.permute.xlu0 %914
        %916 = vrot.lane.b32.xlu0 %v425, 12
        %v917 = vpop.permute.xlu0 %916
        %918 = vrot.lane.b32.xlu0 %v426, 12
        %v919 = vpop.permute.xlu0 %918
        %920 = vrot.lane.b32.xlu0 %v427, 12
        %v921 = vpop.permute.xlu0 %920
        %922 = vrot.lane.b32.xlu0 %v428, 12
        %v923 = vpop.permute.xlu0 %922
        %924 = vrot.lane.b32.xlu0 %v429, 12
        %v925 = vpop.permute.xlu0 %924
        %926 = vrot.lane.b32.xlu0 %v430, 12
        %v927 = vpop.permute.xlu0 %926
        %928 = vrot.lane.b32.xlu0 %v431, 12
        %v929 = vpop.permute.xlu0 %928
        %930 = vrot.lane.b32.xlu0 %v432, 12
        %v931 = vpop.permute.xlu0 %930
        %932 = vrot.lane.b32.xlu0 %v433, 12
        %v933 = vpop.permute.xlu0 %932
        %934 = vrot.lane.b32.xlu0 %v434, 12
        %v935 = vpop.permute.xlu0 %934
        %936 = vrot.lane.b32.xlu0 %v435, 12
        %v937 = vpop.permute.xlu0 %936
        %938 = vrot.lane.b32.xlu0 %v436, 12
        %v939 = vpop.permute.xlu0 %938
        %940 = vrot.lane.b32.xlu0 %v437, 12
        %v941 = vpop.permute.xlu0 %940
        %942 = vrot.lane.b32.xlu0 %v438, 12
        %v943 = vpop.permute.xlu0 %942
        %944 = vrot.lane.b32.xlu0 %v439, 12
        %v945 = vpop.permute.xlu0 %944
        %946 = vrot.lane.b32.xlu0 %v440, 12
        %v947 = vpop.permute.xlu0 %946
        %948 = vrot.lane.b32.xlu0 %v441, 12
        %v949 = vpop.permute.xlu0 %948
        %950 = vrot.lane.b32.xlu0 %v442, 12
        %v951 = vpop.permute.xlu0 %950
        %952 = vrot.lane.b32.xlu0 %v443, 12
        %v953 = vpop.permute.xlu0 %952
        %954 = vrot.lane.b32.xlu0 %v444, 12
        %v955 = vpop.permute.xlu0 %954
        %956 = vrot.lane.b32.xlu0 %v445, 12
        %v957 = vpop.permute.xlu0 %956
        %958 = vrot.lane.b32.xlu0 %v446, 12
        %v959 = vpop.permute.xlu0 %958
        %1024 = vrot.lane.b32.xlu0 %v447, 16
        %v1025 = vpop.permute.xlu0 %1024
        %1026 = vrot.lane.b32.xlu0 %v448, 16
        %v1027 = vpop.permute.xlu0 %1026
        %1028 = vrot.lane.b32.xlu0 %v449, 16
        %v1029 = vpop.permute.xlu0 %1028
        %1030 = vrot.lane.b32.xlu0 %v450, 16
        %v1031 = vpop.permute.xlu0 %1030
        %1032 = vrot.lane.b32.xlu0 %v451, 16
        %v1033 = vpop.permute.xlu0 %1032
        %1034 = vrot.lane.b32.xlu0 %v452, 16
        %v1035 = vpop.permute.xlu0 %1034
        %1036 = vrot.lane.b32.xlu0 %v453, 16
        %v1037 = vpop.permute.xlu0 %1036
        %1038 = vrot.lane.b32.xlu0 %v454, 16
        %v1039 = vpop.permute.xlu0 %1038
        %1040 = vrot.lane.b32.xlu0 %v455, 16
        %v1041 = vpop.permute.xlu0 %1040
        %1042 = vrot.lane.b32.xlu0 %v456, 16
        %v1043 = vpop.permute.xlu0 %1042
        %1044 = vrot.lane.b32.xlu0 %v457, 16
        %v1045 = vpop.permute.xlu0 %1044
        %1046 = vrot.lane.b32.xlu0 %v458, 16
        %v1047 = vpop.permute.xlu0 %1046
        %1048 = vrot.lane.b32.xlu0 %v459, 16
        %v1049 = vpop.permute.xlu0 %1048
        %1050 = vrot.lane.b32.xlu0 %v460, 16
        %v1051 = vpop.permute.xlu0 %1050
        %1052 = vrot.lane.b32.xlu0 %v461, 16
        %v1053 = vpop.permute.xlu0 %1052
        %1054 = vrot.lane.b32.xlu0 %v462, 16
        %v1055 = vpop.permute.xlu0 %1054
        %1056 = vrot.lane.b32.xlu0 %v463, 16
        %v1057 = vpop.permute.xlu0 %1056
        %1058 = vrot.lane.b32.xlu0 %v464, 16
        %v1059 = vpop.permute.xlu0 %1058
        %1060 = vrot.lane.b32.xlu0 %v465, 16
        %v1061 = vpop.permute.xlu0 %1060
        %1062 = vrot.lane.b32.xlu0 %v466, 16
        %v1063 = vpop.permute.xlu0 %1062
        %1064 = vrot.lane.b32.xlu0 %v467, 16
        %v1065 = vpop.permute.xlu0 %1064
        %1066 = vrot.lane.b32.xlu0 %v468, 16
        %v1067 = vpop.permute.xlu0 %1066
        %1068 = vrot.lane.b32.xlu0 %v469, 16
        %v1069 = vpop.permute.xlu0 %1068
        %1070 = vrot.lane.b32.xlu0 %v470, 16
        %v1071 = vpop.permute.xlu0 %1070
        %1072 = vrot.lane.b32.xlu0 %v471, 16
        %v1073 = vpop.permute.xlu0 %1072
        %1074 = vrot.lane.b32.xlu0 %v472, 16
        %v1075 = vpop.permute.xlu0 %1074
        %1076 = vrot.lane.b32.xlu0 %v473, 16
        %v1077 = vpop.permute.xlu0 %1076
        %1078 = vrot.lane.b32.xlu0 %v474, 16
        %v1079 = vpop.permute.xlu0 %1078
        %1080 = vrot.lane.b32.xlu0 %v475, 16
        %v1081 = vpop.permute.xlu0 %1080
        %1082 = vrot.lane.b32.xlu0 %v476, 16
        %v1083 = vpop.permute.xlu0 %1082
        %1084 = vrot.lane.b32.xlu0 %v477, 16
        %v1085 = vpop.permute.xlu0 %1084
        %1086 = vrot.lane.b32.xlu0 %v478, 16
        %v1087 = vpop.permute.xlu0 %1086
        %1152 = vrot.lane.b32.xlu0 %v479, 20
        %v1153 = vpop.permute.xlu0 %1152
        %1154 = vrot.lane.b32.xlu0 %v480, 20
        %v1155 = vpop.permute.xlu0 %1154
        %1156 = vrot.lane.b32.xlu0 %v481, 20
        %v1157 = vpop.permute.xlu0 %1156
        %1158 = vrot.lane.b32.xlu0 %v482, 20
        %v1159 = vpop.permute.xlu0 %1158
        %1160 = vrot.lane.b32.xlu0 %v483, 20
        %v1161 = vpop.permute.xlu0 %1160
        %1162 = vrot.lane.b32.xlu0 %v484, 20
        %v1163 = vpop.permute.xlu0 %1162
        %1164 = vrot.lane.b32.xlu0 %v485, 20
        %v1165 = vpop.permute.xlu0 %1164
        %1166 = vrot.lane.b32.xlu0 %v486, 20
        %v1167 = vpop.permute.xlu0 %1166
        %1168 = vrot.lane.b32.xlu0 %v487, 20
        %v1169 = vpop.permute.xlu0 %1168
        %1170 = vrot.lane.b32.xlu0 %v488, 20
        %v1171 = vpop.permute.xlu0 %1170
        %1172 = vrot.lane.b32.xlu0 %v489, 20
        %v1173 = vpop.permute.xlu0 %1172
        %1174 = vrot.lane.b32.xlu0 %v490, 20
        %v1175 = vpop.permute.xlu0 %1174
        %1176 = vrot.lane.b32.xlu0 %v491, 20
        %v1177 = vpop.permute.xlu0 %1176
        %1178 = vrot.lane.b32.xlu0 %v492, 20
        %v1179 = vpop.permute.xlu0 %1178
        %1180 = vrot.lane.b32.xlu0 %v493, 20
        %v1181 = vpop.permute.xlu0 %1180
        %1182 = vrot.lane.b32.xlu0 %v494, 20
        %v1183 = vpop.permute.xlu0 %1182
        %1184 = vrot.lane.b32.xlu0 %v495, 20
        %v1185 = vpop.permute.xlu0 %1184
        %1186 = vrot.lane.b32.xlu0 %v496, 20
        %v1187 = vpop.permute.xlu0 %1186
        %1188 = vrot.lane.b32.xlu0 %v497, 20
        %v1189 = vpop.permute.xlu0 %1188
        %1190 = vrot.lane.b32.xlu0 %v498, 20
        %v1191 = vpop.permute.xlu0 %1190
        %1192 = vrot.lane.b32.xlu0 %v499, 20
        %v1193 = vpop.permute.xlu0 %1192
        %1194 = vrot.lane.b32.xlu0 %v500, 20
        %v1195 = vpop.permute.xlu0 %1194
        %1196 = vrot.lane.b32.xlu0 %v501, 20
        %v1197 = vpop.permute.xlu0 %1196
        %1198 = vrot.lane.b32.xlu0 %v502, 20
        %v1199 = vpop.permute.xlu0 %1198
        %1200 = vrot.lane.b32.xlu0 %v503, 20
        %v1201 = vpop.permute.xlu0 %1200
        %1202 = vrot.lane.b32.xlu0 %v504, 20
        %v1203 = vpop.permute.xlu0 %1202
        %1204 = vrot.lane.b32.xlu0 %v505, 20
        %v1205 = vpop.permute.xlu0 %1204
        %1206 = vrot.lane.b32.xlu0 %v506, 20
        %v1207 = vpop.permute.xlu0 %1206
        %1208 = vrot.lane.b32.xlu0 %v507, 20
        %v1209 = vpop.permute.xlu0 %1208
        %1210 = vrot.lane.b32.xlu0 %v508, 20
        %v1211 = vpop.permute.xlu0 %1210
        %1212 = vrot.lane.b32.xlu0 %v509, 20
        %v1213 = vpop.permute.xlu0 %1212
        %1214 = vrot.lane.b32.xlu0 %v510, 20
        %v1215 = vpop.permute.xlu0 %1214
        %1280 = vrot.lane.b32.xlu0 %v512, 24
        %v1281 = vpop.permute.xlu0 %1280
        %1282 = vrot.lane.b32.xlu0 %v513, 24
        %v1283 = vpop.permute.xlu0 %1282
        %1284 = vrot.lane.b32.xlu0 %v514, 24
        %v1285 = vpop.permute.xlu0 %1284
        %1286 = vrot.lane.b32.xlu0 %v515, 24
        %v1287 = vpop.permute.xlu0 %1286
        %1288 = vrot.lane.b32.xlu0 %v516, 24
        %v1289 = vpop.permute.xlu0 %1288
        %1290 = vrot.lane.b32.xlu0 %v517, 24
        %v1291 = vpop.permute.xlu0 %1290
        %1292 = vrot.lane.b32.xlu0 %v518, 24
        %v1293 = vpop.permute.xlu0 %1292
        %1294 = vrot.lane.b32.xlu0 %v519, 24
        %v1295 = vpop.permute.xlu0 %1294
        %1296 = vrot.lane.b32.xlu0 %v520, 24
        %v1297 = vpop.permute.xlu0 %1296
        %1298 = vrot.lane.b32.xlu0 %v521, 24
        %v1299 = vpop.permute.xlu0 %1298
        %1300 = vrot.lane.b32.xlu0 %v522, 24
        %v1301 = vpop.permute.xlu0 %1300
        %1302 = vrot.lane.b32.xlu0 %v523, 24
        %v1303 = vpop.permute.xlu0 %1302
        %1304 = vrot.lane.b32.xlu0 %v524, 24
        %v1305 = vpop.permute.xlu0 %1304
        %1306 = vrot.lane.b32.xlu0 %v525, 24
        %v1307 = vpop.permute.xlu0 %1306
        %1308 = vrot.lane.b32.xlu0 %v526, 24
        %v1309 = vpop.permute.xlu0 %1308
        %1310 = vrot.lane.b32.xlu0 %v527, 24
        %v1311 = vpop.permute.xlu0 %1310
        %1312 = vrot.lane.b32.xlu0 %v528, 24
        %v1313 = vpop.permute.xlu0 %1312
        %1314 = vrot.lane.b32.xlu0 %v529, 24
        %v1315 = vpop.permute.xlu0 %1314
        %1316 = vrot.lane.b32.xlu0 %v530, 24
        %v1317 = vpop.permute.xlu0 %1316
        %1318 = vrot.lane.b32.xlu0 %v531, 24
        %v1319 = vpop.permute.xlu0 %1318
        %1320 = vrot.lane.b32.xlu0 %v532, 24
        %v1321 = vpop.permute.xlu0 %1320
        %1322 = vrot.lane.b32.xlu0 %v533, 24
        %v1323 = vpop.permute.xlu0 %1322
        %1324 = vrot.lane.b32.xlu0 %v534, 24
        %v1325 = vpop.permute.xlu0 %1324
        %1326 = vrot.lane.b32.xlu0 %v535, 24
        %v1327 = vpop.permute.xlu0 %1326
        %1328 = vrot.lane.b32.xlu0 %v536, 24
        %v1329 = vpop.permute.xlu0 %1328
        %1330 = vrot.lane.b32.xlu0 %v537, 24
        %v1331 = vpop.permute.xlu0 %1330
        %1332 = vrot.lane.b32.xlu0 %v538, 24
        %v1333 = vpop.permute.xlu0 %1332
        %1334 = vrot.lane.b32.xlu0 %v539, 24
        %v1335 = vpop.permute.xlu0 %1334
        %1336 = vrot.lane.b32.xlu0 %v540, 24
        %v1337 = vpop.permute.xlu0 %1336
        %1338 = vrot.lane.b32.xlu0 %v541, 24
        %v1339 = vpop.permute.xlu0 %1338
        %1340 = vrot.lane.b32.xlu0 %v542, 24
        %v1341 = vpop.permute.xlu0 %1340
        %1342 = vrot.lane.b32.xlu0 %v543, 24
        %v1343 = vpop.permute.xlu0 %1342
        %1408 = vrot.lane.b32.xlu0 %v544, 28
        %v1409 = vpop.permute.xlu0 %1408
        %1410 = vrot.lane.b32.xlu0 %v545, 28
        %v1411 = vpop.permute.xlu0 %1410
        %1412 = vrot.lane.b32.xlu0 %v546, 28
        %v1413 = vpop.permute.xlu0 %1412
        %1414 = vrot.lane.b32.xlu0 %v547, 28
        %v1415 = vpop.permute.xlu0 %1414
        %1416 = vrot.lane.b32.xlu0 %v548, 28
        %v1417 = vpop.permute.xlu0 %1416
        %1418 = vrot.lane.b32.xlu0 %v549, 28
        %v1419 = vpop.permute.xlu0 %1418
        %1420 = vrot.lane.b32.xlu0 %v550, 28
        %v1421 = vpop.permute.xlu0 %1420
        %1422 = vrot.lane.b32.xlu0 %v551, 28
        %v1423 = vpop.permute.xlu0 %1422
        %1424 = vrot.lane.b32.xlu0 %v552, 28
        %v1425 = vpop.permute.xlu0 %1424
        %1426 = vrot.lane.b32.xlu0 %v553, 28
        %v1427 = vpop.permute.xlu0 %1426
        %1428 = vrot.lane.b32.xlu0 %v554, 28
        %v1429 = vpop.permute.xlu0 %1428
        %1430 = vrot.lane.b32.xlu0 %v555, 28
        %v1431 = vpop.permute.xlu0 %1430
        %1432 = vrot.lane.b32.xlu0 %v556, 28
        %v1433 = vpop.permute.xlu0 %1432
        %1434 = vrot.lane.b32.xlu0 %v557, 28
        %v1435 = vpop.permute.xlu0 %1434
        %1436 = vrot.lane.b32.xlu0 %v558, 28
        %v1437 = vpop.permute.xlu0 %1436
        %1438 = vrot.lane.b32.xlu0 %v559, 28
        %v1439 = vpop.permute.xlu0 %1438
        %1440 = vrot.lane.b32.xlu0 %v560, 28
        %v1441 = vpop.permute.xlu0 %1440
        %1442 = vrot.lane.b32.xlu0 %v561, 28
        %v1443 = vpop.permute.xlu0 %1442
        %1444 = vrot.lane.b32.xlu0 %v562, 28
        %v1445 = vpop.permute.xlu0 %1444
        %1446 = vrot.lane.b32.xlu0 %v563, 28
        %v1447 = vpop.permute.xlu0 %1446
        %1448 = vrot.lane.b32.xlu0 %v564, 28
        %v1449 = vpop.permute.xlu0 %1448
        %1450 = vrot.lane.b32.xlu0 %v565, 28
        %v1451 = vpop.permute.xlu0 %1450
        %1452 = vrot.lane.b32.xlu0 %v566, 28
        %v1453 = vpop.permute.xlu0 %1452
        %1454 = vrot.lane.b32.xlu0 %v567, 28
        %v1455 = vpop.permute.xlu0 %1454
        %1456 = vrot.lane.b32.xlu0 %v568, 28
        %v1457 = vpop.permute.xlu0 %1456
        %1458 = vrot.lane.b32.xlu0 %v569, 28
        %v1459 = vpop.permute.xlu0 %1458
        %1460 = vrot.lane.b32.xlu0 %v570, 28
        %v1461 = vpop.permute.xlu0 %1460
        %1462 = vrot.lane.b32.xlu0 %v571, 28
        %v1463 = vpop.permute.xlu0 %1462
        %1464 = vrot.lane.b32.xlu0 %v572, 28
        %v1465 = vpop.permute.xlu0 %1464
        %1466 = vrot.lane.b32.xlu0 %v573, 28
        %v1467 = vpop.permute.xlu0 %1466
        %1468 = vrot.lane.b32.xlu0 %v574, 28
        %v1469 = vpop.permute.xlu0 %1468
        %1470 = vrot.lane.b32.xlu0 %v575, 28
        %v1471 = vpop.permute.xlu0 %1470
        %1536 = vrot.lane.b32.xlu0 %v576, 32
        %v1537 = vpop.permute.xlu0 %1536
        %1538 = vrot.lane.b32.xlu0 %v577, 32
        %v1539 = vpop.permute.xlu0 %1538
        %1540 = vrot.lane.b32.xlu0 %v578, 32
        %v1541 = vpop.permute.xlu0 %1540
        %1542 = vrot.lane.b32.xlu0 %v579, 32
        %v1543 = vpop.permute.xlu0 %1542
        %1544 = vrot.lane.b32.xlu0 %v580, 32
        %v1545 = vpop.permute.xlu0 %1544
        %1546 = vrot.lane.b32.xlu0 %v581, 32
        %v1547 = vpop.permute.xlu0 %1546
        %1548 = vrot.lane.b32.xlu0 %v582, 32
        %v1549 = vpop.permute.xlu0 %1548
        %1550 = vrot.lane.b32.xlu0 %v583, 32
        %v1551 = vpop.permute.xlu0 %1550
        %1552 = vrot.lane.b32.xlu0 %v584, 32
        %v1553 = vpop.permute.xlu0 %1552
        %1554 = vrot.lane.b32.xlu0 %v585, 32
        %v1555 = vpop.permute.xlu0 %1554
        %1556 = vrot.lane.b32.xlu0 %v586, 32
        %v1557 = vpop.permute.xlu0 %1556
        %1558 = vrot.lane.b32.xlu0 %v587, 32
        %v1559 = vpop.permute.xlu0 %1558
        %1560 = vrot.lane.b32.xlu0 %v588, 32
        %v1561 = vpop.permute.xlu0 %1560
        %1562 = vrot.lane.b32.xlu0 %v589, 32
        %v1563 = vpop.permute.xlu0 %1562
        %1564 = vrot.lane.b32.xlu0 %v590, 32
        %v1565 = vpop.permute.xlu0 %1564
        %1566 = vrot.lane.b32.xlu0 %v591, 32
        %v1567 = vpop.permute.xlu0 %1566
        %1568 = vrot.lane.b32.xlu0 %v592, 32
        %v1569 = vpop.permute.xlu0 %1568
        %1570 = vrot.lane.b32.xlu0 %v593, 32
        %v1571 = vpop.permute.xlu0 %1570
        %1572 = vrot.lane.b32.xlu0 %v594, 32
        %v1573 = vpop.permute.xlu0 %1572
        %1574 = vrot.lane.b32.xlu0 %v595, 32
        %v1575 = vpop.permute.xlu0 %1574
        %1576 = vrot.lane.b32.xlu0 %v596, 32
        %v1577 = vpop.permute.xlu0 %1576
        %1578 = vrot.lane.b32.xlu0 %v597, 32
        %v1579 = vpop.permute.xlu0 %1578
        %1580 = vrot.lane.b32.xlu0 %v598, 32
        %v1581 = vpop.permute.xlu0 %1580
        %1582 = vrot.lane.b32.xlu0 %v599, 32
        %v1583 = vpop.permute.xlu0 %1582
        %1584 = vrot.lane.b32.xlu0 %v600, 32
        %v1585 = vpop.permute.xlu0 %1584
        %1586 = vrot.lane.b32.xlu0 %v601, 32
        %v1587 = vpop.permute.xlu0 %1586
        %1588 = vrot.lane.b32.xlu0 %v602, 32
        %v1589 = vpop.permute.xlu0 %1588
        %1590 = vrot.lane.b32.xlu0 %v603, 32
        %v1591 = vpop.permute.xlu0 %1590
        %1592 = vrot.lane.b32.xlu0 %v604, 32
        %v1593 = vpop.permute.xlu0 %1592
        %1594 = vrot.lane.b32.xlu0 %v605, 32
        %v1595 = vpop.permute.xlu0 %1594
        %1596 = vrot.lane.b32.xlu0 %v606, 32
        %v1597 = vpop.permute.xlu0 %1596
        %1598 = vrot.lane.b32.xlu0 %v607, 32
        %v1599 = vpop.permute.xlu0 %1598
        %v1632 = vsel %vm196, %v319, %v641
        %v1633 = vsel %vm196, %v320, %v643
        %v1634 = vsel %vm196, %v321, %v645
        %v1635 = vsel %vm196, %v322, %v647
        %v1636 = vsel %vm196, %v323, %v649
        %v1637 = vsel %vm196, %v324, %v651
        %v1638 = vsel %vm196, %v325, %v653
        %v1639 = vsel %vm196, %v326, %v655
        %v1640 = vsel %vm196, %v327, %v657
        %v1641 = vsel %vm196, %v328, %v659
        %v1642 = vsel %vm196, %v329, %v661
        %v1643 = vsel %vm196, %v330, %v663
        %v1644 = vsel %vm196, %v331, %v665
        %v1645 = vsel %vm196, %v332, %v667
        %v1646 = vsel %vm196, %v333, %v669
        %v1647 = vsel %vm196, %v334, %v671
        %v1648 = vsel %vm196, %v335, %v673
        %v1649 = vsel %vm196, %v336, %v675
        %v1650 = vsel %vm196, %v337, %v677
        %v1651 = vsel %vm196, %v338, %v679
        %v1652 = vsel %vm196, %v339, %v681
        %v1653 = vsel %vm196, %v340, %v683
        %v1654 = vsel %vm196, %v341, %v685
        %v1655 = vsel %vm196, %v342, %v687
        %v1656 = vsel %vm196, %v343, %v689
        %v1657 = vsel %vm196, %v344, %v691
        %v1658 = vsel %vm196, %v345, %v693
        %v1659 = vsel %vm196, %v346, %v695
        %v1660 = vsel %vm196, %v347, %v697
        %v1661 = vsel %vm196, %v348, %v699
        %v1662 = vsel %vm196, %v349, %v701
        %v1663 = vsel %vm196, %v350, %v703
        %vm1664 = vcmask 64512
        %v1665 = vsel %vm1664, %v1632, %v769
        %v1666 = vsel %vm1664, %v1633, %v771
        %v1667 = vsel %vm1664, %v1634, %v773
        %v1668 = vsel %vm1664, %v1635, %v775
        %v1669 = vsel %vm1664, %v1636, %v777
        %v1670 = vsel %vm1664, %v1637, %v779
        %v1671 = vsel %vm1664, %v1638, %v781
        %v1672 = vsel %vm1664, %v1639, %v783
        %v1673 = vsel %vm1664, %v1640, %v785
        %v1674 = vsel %vm1664, %v1641, %v787
        %v1675 = vsel %vm1664, %v1642, %v789
        %v1676 = vsel %vm1664, %v1643, %v791
        %v1677 = vsel %vm1664, %v1644, %v793
        %v1678 = vsel %vm1664, %v1645, %v795
        %v1679 = vsel %vm1664, %v1646, %v797
        %v1680 = vsel %vm1664, %v1647, %v799
        %v1681 = vsel %vm1664, %v1648, %v801
        %v1682 = vsel %vm1664, %v1649, %v803
        %v1683 = vsel %vm1664, %v1650, %v805
        %v1684 = vsel %vm1664, %v1651, %v807
        %v1685 = vsel %vm1664, %v1652, %v809
        %v1686 = vsel %vm1664, %v1653, %v811
        %v1687 = vsel %vm1664, %v1654, %v813
        %v1688 = vsel %vm1664, %v1655, %v815
        %v1689 = vsel %vm1664, %v1656, %v817
        %v1690 = vsel %vm1664, %v1657, %v819
        %v1691 = vsel %vm1664, %v1658, %v821
        %v1692 = vsel %vm1664, %v1659, %v823
        %v1693 = vsel %vm1664, %v1660, %v825
        %v1694 = vsel %vm1664, %v1661, %v827
        %v1695 = vsel %vm1664, %v1662, %v829
        %v1696 = vsel %vm1664, %v1663, %v831
        %vm1697 = vcmask 97280
        %v1698 = vsel %vm1697, %v1665, %v897
        %v1699 = vsel %vm1697, %v1666, %v899
        %v1700 = vsel %vm1697, %v1667, %v901
        %v1701 = vsel %vm1697, %v1668, %v903
        %v1702 = vsel %vm1697, %v1669, %v905
        %v1703 = vsel %vm1697, %v1670, %v907
        %v1704 = vsel %vm1697, %v1671, %v909
        %v1705 = vsel %vm1697, %v1672, %v911
        %v1706 = vsel %vm1697, %v1673, %v913
        %v1707 = vsel %vm1697, %v1674, %v915
        %v1708 = vsel %vm1697, %v1675, %v917
        %v1709 = vsel %vm1697, %v1676, %v919
        %v1710 = vsel %vm1697, %v1677, %v921
        %v1711 = vsel %vm1697, %v1678, %v923
        %v1712 = vsel %vm1697, %v1679, %v925
        %v1713 = vsel %vm1697, %v1680, %v927
        %v1714 = vsel %vm1697, %v1681, %v929
        %v1715 = vsel %vm1697, %v1682, %v931
        %v1716 = vsel %vm1697, %v1683, %v933
        %v1717 = vsel %vm1697, %v1684, %v935
        %v1718 = vsel %vm1697, %v1685, %v937
        %v1719 = vsel %vm1697, %v1686, %v939
        %v1720 = vsel %vm1697, %v1687, %v941
        %v1721 = vsel %vm1697, %v1688, %v943
        %v1722 = vsel %vm1697, %v1689, %v945
        %v1723 = vsel %vm1697, %v1690, %v947
        %v1724 = vsel %vm1697, %v1691, %v949
        %v1725 = vsel %vm1697, %v1692, %v951
        %v1726 = vsel %vm1697, %v1693, %v953
        %v1727 = vsel %vm1697, %v1694, %v955
        %v1728 = vsel %vm1697, %v1695, %v957
        %v1729 = vsel %vm1697, %v1696, %v959
        %vm1730 = vcmask 130048
        %v1731 = vsel %vm1730, %v1698, %v1025
        %v1732 = vsel %vm1730, %v1699, %v1027
        %v1733 = vsel %vm1730, %v1700, %v1029
        %v1734 = vsel %vm1730, %v1701, %v1031
        %v1735 = vsel %vm1730, %v1702, %v1033
        %v1736 = vsel %vm1730, %v1703, %v1035
        %v1737 = vsel %vm1730, %v1704, %v1037
        %v1738 = vsel %vm1730, %v1705, %v1039
        %v1739 = vsel %vm1730, %v1706, %v1041
        %v1740 = vsel %vm1730, %v1707, %v1043
        %v1741 = vsel %vm1730, %v1708, %v1045
        %v1742 = vsel %vm1730, %v1709, %v1047
        %v1743 = vsel %vm1730, %v1710, %v1049
        %v1744 = vsel %vm1730, %v1711, %v1051
        %v1745 = vsel %vm1730, %v1712, %v1053
        %v1746 = vsel %vm1730, %v1713, %v1055
        %v1747 = vsel %vm1730, %v1714, %v1057
        %v1748 = vsel %vm1730, %v1715, %v1059
        %v1749 = vsel %vm1730, %v1716, %v1061
        %v1750 = vsel %vm1730, %v1717, %v1063
        %v1751 = vsel %vm1730, %v1718, %v1065
        %v1752 = vsel %vm1730, %v1719, %v1067
        %v1753 = vsel %vm1730, %v1720, %v1069
        %v1754 = vsel %vm1730, %v1721, %v1071
        %v1755 = vsel %vm1730, %v1722, %v1073
        %v1756 = vsel %vm1730, %v1723, %v1075
        %v1757 = vsel %vm1730, %v1724, %v1077
        %v1758 = vsel %vm1730, %v1725, %v1079
        %v1759 = vsel %vm1730, %v1726, %v1081
        %v1760 = vsel %vm1730, %v1727, %v1083
        %v1761 = vsel %vm1730, %v1728, %v1085
        %v1762 = vsel %vm1730, %v1729, %v1087
        %vm1763 = vcmask 162816
        %v1764 = vsel %vm1763, %v1731, %v1153
        %v1765 = vsel %vm1763, %v1732, %v1155
        %v1766 = vsel %vm1763, %v1733, %v1157
        %v1767 = vsel %vm1763, %v1734, %v1159
        %v1768 = vsel %vm1763, %v1735, %v1161
        %v1769 = vsel %vm1763, %v1736, %v1163
        %v1770 = vsel %vm1763, %v1737, %v1165
        %v1771 = vsel %vm1763, %v1738, %v1167
        %v1772 = vsel %vm1763, %v1739, %v1169
        %v1773 = vsel %vm1763, %v1740, %v1171
        %v1774 = vsel %vm1763, %v1741, %v1173
        %v1775 = vsel %vm1763, %v1742, %v1175
        %v1776 = vsel %vm1763, %v1743, %v1177
        %v1777 = vsel %vm1763, %v1744, %v1179
        %v1778 = vsel %vm1763, %v1745, %v1181
        %v1779 = vsel %vm1763, %v1746, %v1183
        %v1780 = vsel %vm1763, %v1747, %v1185
        %v1781 = vsel %vm1763, %v1748, %v1187
        %v1782 = vsel %vm1763, %v1749, %v1189
        %v1783 = vsel %vm1763, %v1750, %v1191
        %v1784 = vsel %vm1763, %v1751, %v1193
        %v1785 = vsel %vm1763, %v1752, %v1195
        %v1786 = vsel %vm1763, %v1753, %v1197
        %v1787 = vsel %vm1763, %v1754, %v1199
        %v1788 = vsel %vm1763, %v1755, %v1201
        %v1789 = vsel %vm1763, %v1756, %v1203
        %v1790 = vsel %vm1763, %v1757, %v1205
        %v1791 = vsel %vm1763, %v1758, %v1207
        %v1792 = vsel %vm1763, %v1759, %v1209
        %v1793 = vsel %vm1763, %v1760, %v1211
        %v1794 = vsel %vm1763, %v1761, %v1213
        %v1795 = vsel %vm1763, %v1762, %v1215
        %vm1796 = vcmask 195584
        %v1797 = vsel %vm1796, %v1764, %v1281
        %v1798 = vsel %vm1796, %v1765, %v1283
        %v1799 = vsel %vm1796, %v1766, %v1285
        %v1800 = vsel %vm1796, %v1767, %v1287
        %v1801 = vsel %vm1796, %v1768, %v1289
        %v1802 = vsel %vm1796, %v1769, %v1291
        %v1803 = vsel %vm1796, %v1770, %v1293
        %v1804 = vsel %vm1796, %v1771, %v1295
        %v1805 = vsel %vm1796, %v1772, %v1297
        %v1806 = vsel %vm1796, %v1773, %v1299
        %v1807 = vsel %vm1796, %v1774, %v1301
        %v1808 = vsel %vm1796, %v1775, %v1303
        %v1809 = vsel %vm1796, %v1776, %v1305
        %v1810 = vsel %vm1796, %v1777, %v1307
        %v1811 = vsel %vm1796, %v1778, %v1309
        %v1812 = vsel %vm1796, %v1779, %v1311
        %v1813 = vsel %vm1796, %v1780, %v1313
        %v1814 = vsel %vm1796, %v1781, %v1315
        %v1815 = vsel %vm1796, %v1782, %v1317
        %v1816 = vsel %vm1796, %v1783, %v1319
        %v1817 = vsel %vm1796, %v1784, %v1321
        %v1818 = vsel %vm1796, %v1785, %v1323
        %v1819 = vsel %vm1796, %v1786, %v1325
        %v1820 = vsel %vm1796, %v1787, %v1327
        %v1821 = vsel %vm1796, %v1788, %v1329
        %v1822 = vsel %vm1796, %v1789, %v1331
        %v1823 = vsel %vm1796, %v1790, %v1333
        %v1824 = vsel %vm1796, %v1791, %v1335
        %v1825 = vsel %vm1796, %v1792, %v1337
        %v1826 = vsel %vm1796, %v1793, %v1339
        %v1827 = vsel %vm1796, %v1794, %v1341
        %v1828 = vsel %vm1796, %v1795, %v1343
        %vm1829 = vcmask 228352
        %v1830 = vsel %vm1829, %v1797, %v1409
        %v1831 = vsel %vm1829, %v1798, %v1411
        %v1832 = vsel %vm1829, %v1799, %v1413
        %v1833 = vsel %vm1829, %v1800, %v1415
        %v1834 = vsel %vm1829, %v1801, %v1417
        %v1835 = vsel %vm1829, %v1802, %v1419
        %v1836 = vsel %vm1829, %v1803, %v1421
        %v1837 = vsel %vm1829, %v1804, %v1423
        %v1838 = vsel %vm1829, %v1805, %v1425
        %v1839 = vsel %vm1829, %v1806, %v1427
        %v1840 = vsel %vm1829, %v1807, %v1429
        %v1841 = vsel %vm1829, %v1808, %v1431
        %v1842 = vsel %vm1829, %v1809, %v1433
        %v1843 = vsel %vm1829, %v1810, %v1435
        %v1844 = vsel %vm1829, %v1811, %v1437
        %v1845 = vsel %vm1829, %v1812, %v1439
        %v1846 = vsel %vm1829, %v1813, %v1441
        %v1847 = vsel %vm1829, %v1814, %v1443
        %v1848 = vsel %vm1829, %v1815, %v1445
        %v1849 = vsel %vm1829, %v1816, %v1447
        %v1850 = vsel %vm1829, %v1817, %v1449
        %v1851 = vsel %vm1829, %v1818, %v1451
        %v1852 = vsel %vm1829, %v1819, %v1453
        %v1853 = vsel %vm1829, %v1820, %v1455
        %v1854 = vsel %vm1829, %v1821, %v1457
        %v1855 = vsel %vm1829, %v1822, %v1459
        %v1856 = vsel %vm1829, %v1823, %v1461
        %v1857 = vsel %vm1829, %v1824, %v1463
        %v1858 = vsel %vm1829, %v1825, %v1465
        %v1859 = vsel %vm1829, %v1826, %v1467
        %v1860 = vsel %vm1829, %v1827, %v1469
        %v1861 = vsel %vm1829, %v1828, %v1471
        %vm1862 = vcmask 261120
        %v1863 = vsel %vm1862, %v1830, %v1537
        %v1864 = vsel %vm1862, %v1831, %v1539
        %v1865 = vsel %vm1862, %v1832, %v1541
        %v1866 = vsel %vm1862, %v1833, %v1543
        %v1867 = vsel %vm1862, %v1834, %v1545
        %v1868 = vsel %vm1862, %v1835, %v1547
        %v1869 = vsel %vm1862, %v1836, %v1549
        %v1870 = vsel %vm1862, %v1837, %v1551
        %v1871 = vsel %vm1862, %v1838, %v1553
        %v1872 = vsel %vm1862, %v1839, %v1555
        %v1873 = vsel %vm1862, %v1840, %v1557
        %v1874 = vsel %vm1862, %v1841, %v1559
        %v1875 = vsel %vm1862, %v1842, %v1561
        %v1876 = vsel %vm1862, %v1843, %v1563
        %v1877 = vsel %vm1862, %v1844, %v1565
        %v1878 = vsel %vm1862, %v1845, %v1567
        %v1879 = vsel %vm1862, %v1846, %v1569
        %v1880 = vsel %vm1862, %v1847, %v1571
        %v1881 = vsel %vm1862, %v1848, %v1573
        %v1882 = vsel %vm1862, %v1849, %v1575
        %v1883 = vsel %vm1862, %v1850, %v1577
        %v1884 = vsel %vm1862, %v1851, %v1579
        %v1885 = vsel %vm1862, %v1852, %v1581
        %v1886 = vsel %vm1862, %v1853, %v1583
        %v1887 = vsel %vm1862, %v1854, %v1585
        %v1888 = vsel %vm1862, %v1855, %v1587
        %v1889 = vsel %vm1862, %v1856, %v1589
        %v1890 = vsel %vm1862, %v1857, %v1591
        %v1891 = vsel %vm1862, %v1858, %v1593
        %v1892 = vsel %vm1862, %v1859, %v1595
        %v1893 = vsel %vm1862, %v1860, %v1597
        %v1894 = vsel %vm1862, %v1861, %v1599
        %v1895 = vld [vmem:[%s1] sm:$0xff]
        %v1896 = vld [vmem:[%s1 + $0x8] sm:$0xff]
        %v1897 = vld [vmem:[%s1 + $0x10] sm:$0xff]
        %v1898 = vld [vmem:[%s1 + $0x18] sm:$0xff]
        %v1899 = vld [vmem:[%s1 + $0x20] sm:$0xf]
        %vm1900 = vcmask 293888
        %v1902 = vsel %vm1900, %v1863, 0
        %v1905 = vsel %vm1900, %v1864, 0
        %v1908 = vsel %vm1900, %v1865, 0
        %v1911 = vsel %vm1900, %v1866, 0
        %v1914 = vsel %vm1900, %v1867, 0
        %v1917 = vsel %vm1900, %v1868, 0
        %v1920 = vsel %vm1900, %v1869, 0
        %v1923 = vsel %vm1900, %v1870, 0
        %v1926 = vsel %vm1900, %v1871, 0
        %v1929 = vsel %vm1900, %v1872, 0
        %v1932 = vsel %vm1900, %v1873, 0
        %v1935 = vsel %vm1900, %v1874, 0
        %v1938 = vsel %vm1900, %v1875, 0
        %v1941 = vsel %vm1900, %v1876, 0
        %v1944 = vsel %vm1900, %v1877, 0
        %v1947 = vsel %vm1900, %v1878, 0
        %v1950 = vsel %vm1900, %v1879, 0
        %v1953 = vsel %vm1900, %v1880, 0
        %v1956 = vsel %vm1900, %v1881, 0
        %v1959 = vsel %vm1900, %v1882, 0
        %v1962 = vsel %vm1900, %v1883, 0
        %v1965 = vsel %vm1900, %v1884, 0
        %v1968 = vsel %vm1900, %v1885, 0
        %v1971 = vsel %vm1900, %v1886, 0
        %v1974 = vsel %vm1900, %v1887, 0
        %v1977 = vsel %vm1900, %v1888, 0
        %v1980 = vsel %vm1900, %v1889, 0
        %v1983 = vsel %vm1900, %v1890, 0
        %v1986 = vsel %vm1900, %v1891, 0
        %v1989 = vsel %vm1900, %v1892, 0
        %v1992 = vsel %vm1900, %v1893, 0
        %v1995 = vsel %vm1900, %v1894, 0
        %vm1997 = vcmask 1043456
        %v1999 = vsel %vm1997, %v1899, 0
        %2001 = vmatpush.msra.mxu0 0.0
        %2002 = vmatpush.msra.mxu0 0.0
        %2003 = vmatpush.msra.mxu0 0.0
        %2004 = vmatpush.msra.mxu0 0.0
        %2005 = vmatpush.msra.mxu0 0.0
        %2006 = vmatpush.msra.mxu0 0.0
        %2007 = vmatpush.msra.mxu0 0.0
        %2008 = vmatpush.msra.mxu0 0.0
        %2009 = vmatpush.msra.mxu0 0.0
        %2010 = vmatpush.msra.mxu0 0.0
        %2011 = vmatpush.msra.mxu0 0.0
        %2012 = vmatpush.msra.mxu0 %v1999
        %2013 = vmatpush.msra.mxu0 %v1898
        %2014 = vmatpush.msra.mxu0 %v1897
        %2015 = vmatpush.msra.mxu0 %v1896
        %2016 = vmatpush.msra.mxu0 %v1895
        %2017 = vmatmul.f32.gmra.mxu0 %v1902
        %v2018 = vpop.f32.mrf.mxu0
        %v2019 = vadd.f32 0.0, %v2018
        %2020 = vmatmul.f32.gmra.mxu0 %v1905
        %v2021 = vpop.f32.mrf.mxu0
        %v2022 = vadd.f32 0.0, %v2021
        %2023 = vmatmul.f32.gmra.mxu0 %v1908
        %v2024 = vpop.f32.mrf.mxu0
        %v2025 = vadd.f32 0.0, %v2024
        %2026 = vmatmul.f32.gmra.mxu0 %v1911
        %v2027 = vpop.f32.mrf.mxu0
        %v2028 = vadd.f32 0.0, %v2027
        %2029 = vmatmul.f32.gmra.mxu0 %v1914
        %v2030 = vpop.f32.mrf.mxu0
        %v2031 = vadd.f32 0.0, %v2030
        %2032 = vmatmul.f32.gmra.mxu0 %v1917
        %v2033 = vpop.f32.mrf.mxu0
        %v2034 = vadd.f32 0.0, %v2033
        %2035 = vmatmul.f32.gmra.mxu0 %v1920
        %v2036 = vpop.f32.mrf.mxu0
        %v2037 = vadd.f32 0.0, %v2036
        %2038 = vmatmul.f32.gmra.mxu0 %v1923
        %v2039 = vpop.f32.mrf.mxu0
        %v2040 = vadd.f32 0.0, %v2039
        %2041 = vmatmul.f32.gmra.mxu0 %v1926
        %v2042 = vpop.f32.mrf.mxu0
        %v2043 = vadd.f32 0.0, %v2042
        %2044 = vmatmul.f32.gmra.mxu0 %v1929
        %v2045 = vpop.f32.mrf.mxu0
        %v2046 = vadd.f32 0.0, %v2045
        %2047 = vmatmul.f32.gmra.mxu0 %v1932
        %v2048 = vpop.f32.mrf.mxu0
        %v2049 = vadd.f32 0.0, %v2048
        %2050 = vmatmul.f32.gmra.mxu0 %v1935
        %v2051 = vpop.f32.mrf.mxu0
        %v2052 = vadd.f32 0.0, %v2051
        %2053 = vmatmul.f32.gmra.mxu0 %v1938
        %v2054 = vpop.f32.mrf.mxu0
        %v2055 = vadd.f32 0.0, %v2054
        %2056 = vmatmul.f32.gmra.mxu0 %v1941
        %v2057 = vpop.f32.mrf.mxu0
        %v2058 = vadd.f32 0.0, %v2057
        %2059 = vmatmul.f32.gmra.mxu0 %v1944
        %v2060 = vpop.f32.mrf.mxu0
        %v2061 = vadd.f32 0.0, %v2060
        %2062 = vmatmul.f32.gmra.mxu0 %v1947
        %v2063 = vpop.f32.mrf.mxu0
        %v2064 = vadd.f32 0.0, %v2063
        %2065 = vmatmul.f32.gmra.mxu0 %v1950
        %v2066 = vpop.f32.mrf.mxu0
        %v2067 = vadd.f32 0.0, %v2066
        %2068 = vmatmul.f32.gmra.mxu0 %v1953
        %v2069 = vpop.f32.mrf.mxu0
        %v2070 = vadd.f32 0.0, %v2069
        %2071 = vmatmul.f32.gmra.mxu0 %v1956
        %v2072 = vpop.f32.mrf.mxu0
        %v2073 = vadd.f32 0.0, %v2072
        %2074 = vmatmul.f32.gmra.mxu0 %v1959
        %v2075 = vpop.f32.mrf.mxu0
        %v2076 = vadd.f32 0.0, %v2075
        %2077 = vmatmul.f32.gmra.mxu0 %v1962
        %v2078 = vpop.f32.mrf.mxu0
        %v2079 = vadd.f32 0.0, %v2078
        %2080 = vmatmul.f32.gmra.mxu0 %v1965
        %v2081 = vpop.f32.mrf.mxu0
        %v2082 = vadd.f32 0.0, %v2081
        %2083 = vmatmul.f32.gmra.mxu0 %v1968
        %v2084 = vpop.f32.mrf.mxu0
        %v2085 = vadd.f32 0.0, %v2084
        %2086 = vmatmul.f32.gmra.mxu0 %v1971
        %v2087 = vpop.f32.mrf.mxu0
        %v2088 = vadd.f32 0.0, %v2087
        %2089 = vmatmul.f32.gmra.mxu0 %v1974
        %v2090 = vpop.f32.mrf.mxu0
        %v2091 = vadd.f32 0.0, %v2090
        %2092 = vmatmul.f32.gmra.mxu0 %v1977
        %v2093 = vpop.f32.mrf.mxu0
        %v2094 = vadd.f32 0.0, %v2093
        %2095 = vmatmul.f32.gmra.mxu0 %v1980
        %v2096 = vpop.f32.mrf.mxu0
        %v2097 = vadd.f32 0.0, %v2096
        %2098 = vmatmul.f32.gmra.mxu0 %v1983
        %v2099 = vpop.f32.mrf.mxu0
        %v2100 = vadd.f32 0.0, %v2099
        %2101 = vmatmul.f32.gmra.mxu0 %v1986
        %v2102 = vpop.f32.mrf.mxu0
        %v2103 = vadd.f32 0.0, %v2102
        %2104 = vmatmul.f32.gmra.mxu0 %v1989
        %v2105 = vpop.f32.mrf.mxu0
        %v2106 = vadd.f32 0.0, %v2105
        %2107 = vmatmul.f32.gmra.mxu0 %v1992
        %v2108 = vpop.f32.mrf.mxu0
        %v2109 = vadd.f32 0.0, %v2108
        %2110 = vmatmul.f32.gmra.mxu0 %v1995
        %v2111 = vpop.f32.mrf.mxu0
        %v2112 = vadd.f32 0.0, %v2111
        %2113 = vdwg.mxu0
        %v2146 = vrot.slane %v2019, 2
        %v2147 = vrot.slane %v2019, 4
        %v2148 = vrot.slane %v2019, 6
        %v2149 = vrot.slane %v2022, 2
        %v2150 = vrot.slane %v2022, 4
        %v2151 = vrot.slane %v2022, 6
        %v2152 = vrot.slane %v2025, 2
        %v2153 = vrot.slane %v2025, 4
        %v2154 = vrot.slane %v2025, 6
        %v2155 = vrot.slane %v2028, 2
        %v2156 = vrot.slane %v2028, 4
        %v2157 = vrot.slane %v2028, 6
        %v2158 = vrot.slane %v2031, 2
        %v2159 = vrot.slane %v2031, 4
        %v2160 = vrot.slane %v2031, 6
        %v2161 = vrot.slane %v2034, 2
        %v2162 = vrot.slane %v2034, 4
        %v2163 = vrot.slane %v2034, 6
        %v2164 = vrot.slane %v2037, 2
        %v2165 = vrot.slane %v2037, 4
        %v2166 = vrot.slane %v2037, 6
        %v2167 = vrot.slane %v2040, 2
        %v2168 = vrot.slane %v2040, 4
        %v2169 = vrot.slane %v2040, 6
        %v2170 = vrot.slane %v2043, 2
        %v2171 = vrot.slane %v2043, 4
        %v2172 = vrot.slane %v2043, 6
        %v2173 = vrot.slane %v2046, 2
        %v2174 = vrot.slane %v2046, 4
        %v2175 = vrot.slane %v2046, 6
        %v2176 = vrot.slane %v2049, 2
        %v2177 = vrot.slane %v2049, 4
        %v2178 = vrot.slane %v2049, 6
        %v2179 = vrot.slane %v2052, 2
        %v2180 = vrot.slane %v2052, 4
        %v2181 = vrot.slane %v2052, 6
        %v2182 = vrot.slane %v2055, 2
        %v2183 = vrot.slane %v2055, 4
        %v2184 = vrot.slane %v2055, 6
        %v2185 = vrot.slane %v2058, 2
        %v2186 = vrot.slane %v2058, 4
        %v2187 = vrot.slane %v2058, 6
        %v2188 = vrot.slane %v2061, 2
        %v2189 = vrot.slane %v2061, 4
        %v2190 = vrot.slane %v2061, 6
        %v2191 = vrot.slane %v2064, 2
        %v2192 = vrot.slane %v2064, 4
        %v2193 = vrot.slane %v2064, 6
        %v2194 = vrot.slane %v2067, 2
        %v2195 = vrot.slane %v2067, 4
        %v2196 = vrot.slane %v2067, 6
        %v2197 = vrot.slane %v2070, 2
        %v2198 = vrot.slane %v2070, 4
        %v2199 = vrot.slane %v2070, 6
        %v2200 = vrot.slane %v2073, 2
        %v2201 = vrot.slane %v2073, 4
        %v2202 = vrot.slane %v2073, 6
        %v2203 = vrot.slane %v2076, 2
        %v2204 = vrot.slane %v2076, 4
        %v2205 = vrot.slane %v2076, 6
        %v2206 = vrot.slane %v2079, 2
        %v2207 = vrot.slane %v2079, 4
        %v2208 = vrot.slane %v2079, 6
        %v2209 = vrot.slane %v2082, 2
        %v2210 = vrot.slane %v2082, 4
        %v2211 = vrot.slane %v2082, 6
        %v2212 = vrot.slane %v2085, 2
        %v2213 = vrot.slane %v2085, 4
        %v2214 = vrot.slane %v2085, 6
        %v2215 = vrot.slane %v2088, 2
        %v2216 = vrot.slane %v2088, 4
        %v2217 = vrot.slane %v2088, 6
        %v2218 = vrot.slane %v2091, 2
        %v2219 = vrot.slane %v2091, 4
        %v2220 = vrot.slane %v2091, 6
        %v2221 = vrot.slane %v2094, 2
        %v2222 = vrot.slane %v2094, 4
        %v2223 = vrot.slane %v2094, 6
        %v2224 = vrot.slane %v2097, 2
        %v2225 = vrot.slane %v2097, 4
        %v2226 = vrot.slane %v2097, 6
        %v2227 = vrot.slane %v2100, 2
        %v2228 = vrot.slane %v2100, 4
        %v2229 = vrot.slane %v2100, 6
        %v2230 = vrot.slane %v2103, 2
        %v2231 = vrot.slane %v2103, 4
        %v2232 = vrot.slane %v2103, 6
        %v2233 = vrot.slane %v2106, 2
        %v2234 = vrot.slane %v2106, 4
        %v2235 = vrot.slane %v2106, 6
        %v2236 = vrot.slane %v2109, 2
        %v2237 = vrot.slane %v2109, 4
        %v2238 = vrot.slane %v2109, 6
        %v2239 = vrot.slane %v2112, 2
        %v2240 = vrot.slane %v2112, 4
        %v2241 = vrot.slane %v2112, 6
        %vm2338 = vcmask 123904
        %v2339 = vsel %vm2338, %v2019, -inf
        %v2340 = vrot.slane %v2339, 4
        %v2341 = vmax.f32 %v2339, %v2340
        %v2342 = vrot.slane %v2341, 2
        %v2343 = vmax.f32 %v2341, %v2342
        %v2344 = vrot.slane %v2343, 1
        %v2345 = vmax.f32 %v2343, %v2344
        %v2346 = vsel %vm2338, %v2146, -inf
        %v2347 = vrot.slane %v2346, 4
        %v2348 = vmax.f32 %v2346, %v2347
        %v2349 = vrot.slane %v2348, 2
        %v2350 = vmax.f32 %v2348, %v2349
        %v2351 = vrot.slane %v2350, 1
        %v2352 = vmax.f32 %v2350, %v2351
        %v2353 = vsel %vm2338, %v2147, -inf
        %v2354 = vrot.slane %v2353, 4
        %v2355 = vmax.f32 %v2353, %v2354
        %v2356 = vrot.slane %v2355, 2
        %v2357 = vmax.f32 %v2355, %v2356
        %v2358 = vrot.slane %v2357, 1
        %v2359 = vmax.f32 %v2357, %v2358
        %v2360 = vsel %vm2338, %v2148, -inf
        %v2361 = vrot.slane %v2360, 4
        %v2362 = vmax.f32 %v2360, %v2361
        %v2363 = vrot.slane %v2362, 2
        %v2364 = vmax.f32 %v2362, %v2363
        %v2365 = vrot.slane %v2364, 1
        %v2366 = vmax.f32 %v2364, %v2365
        %v2367 = vsel %vm2338, %v2022, -inf
        %v2368 = vrot.slane %v2367, 4
        %v2369 = vmax.f32 %v2367, %v2368
        %v2370 = vrot.slane %v2369, 2
        %v2371 = vmax.f32 %v2369, %v2370
        %v2372 = vrot.slane %v2371, 1
        %v2373 = vmax.f32 %v2371, %v2372
        %v2374 = vsel %vm2338, %v2149, -inf
        %v2375 = vrot.slane %v2374, 4
        %v2376 = vmax.f32 %v2374, %v2375
        %v2377 = vrot.slane %v2376, 2
        %v2378 = vmax.f32 %v2376, %v2377
        %v2379 = vrot.slane %v2378, 1
        %v2380 = vmax.f32 %v2378, %v2379
        %v2381 = vsel %vm2338, %v2150, -inf
        %v2382 = vrot.slane %v2381, 4
        %v2383 = vmax.f32 %v2381, %v2382
        %v2384 = vrot.slane %v2383, 2
        %v2385 = vmax.f32 %v2383, %v2384
        %v2386 = vrot.slane %v2385, 1
        %v2387 = vmax.f32 %v2385, %v2386
        %v2388 = vsel %vm2338, %v2151, -inf
        %v2389 = vrot.slane %v2388, 4
        %v2390 = vmax.f32 %v2388, %v2389
        %v2391 = vrot.slane %v2390, 2
        %v2392 = vmax.f32 %v2390, %v2391
        %v2393 = vrot.slane %v2392, 1
        %v2394 = vmax.f32 %v2392, %v2393
        %v2395 = vsel %vm2338, %v2025, -inf
        %v2396 = vrot.slane %v2395, 4
        %v2397 = vmax.f32 %v2395, %v2396
        %v2398 = vrot.slane %v2397, 2
        %v2399 = vmax.f32 %v2397, %v2398
        %v2400 = vrot.slane %v2399, 1
        %v2401 = vmax.f32 %v2399, %v2400
        %v2402 = vsel %vm2338, %v2152, -inf
        %v2403 = vrot.slane %v2402, 4
        %v2404 = vmax.f32 %v2402, %v2403
        %v2405 = vrot.slane %v2404, 2
        %v2406 = vmax.f32 %v2404, %v2405
        %v2407 = vrot.slane %v2406, 1
        %v2408 = vmax.f32 %v2406, %v2407
        %v2409 = vsel %vm2338, %v2153, -inf
        %v2410 = vrot.slane %v2409, 4
        %v2411 = vmax.f32 %v2409, %v2410
        %v2412 = vrot.slane %v2411, 2
        %v2413 = vmax.f32 %v2411, %v2412
        %v2414 = vrot.slane %v2413, 1
        %v2415 = vmax.f32 %v2413, %v2414
        %v2416 = vsel %vm2338, %v2154, -inf
        %v2417 = vrot.slane %v2416, 4
        %v2418 = vmax.f32 %v2416, %v2417
        %v2419 = vrot.slane %v2418, 2
        %v2420 = vmax.f32 %v2418, %v2419
        %v2421 = vrot.slane %v2420, 1
        %v2422 = vmax.f32 %v2420, %v2421
        %v2423 = vsel %vm2338, %v2028, -inf
        %v2424 = vrot.slane %v2423, 4
        %v2425 = vmax.f32 %v2423, %v2424
        %v2426 = vrot.slane %v2425, 2
        %v2427 = vmax.f32 %v2425, %v2426
        %v2428 = vrot.slane %v2427, 1
        %v2429 = vmax.f32 %v2427, %v2428
        %v2430 = vsel %vm2338, %v2155, -inf
        %v2431 = vrot.slane %v2430, 4
        %v2432 = vmax.f32 %v2430, %v2431
        %v2433 = vrot.slane %v2432, 2
        %v2434 = vmax.f32 %v2432, %v2433
        %v2435 = vrot.slane %v2434, 1
        %v2436 = vmax.f32 %v2434, %v2435
        %v2437 = vsel %vm2338, %v2156, -inf
        %v2438 = vrot.slane %v2437, 4
        %v2439 = vmax.f32 %v2437, %v2438
        %v2440 = vrot.slane %v2439, 2
        %v2441 = vmax.f32 %v2439, %v2440
        %v2442 = vrot.slane %v2441, 1
        %v2443 = vmax.f32 %v2441, %v2442
        %v2444 = vsel %vm2338, %v2157, -inf
        %v2445 = vrot.slane %v2444, 4
        %v2446 = vmax.f32 %v2444, %v2445
        %v2447 = vrot.slane %v2446, 2
        %v2448 = vmax.f32 %v2446, %v2447
        %v2449 = vrot.slane %v2448, 1
        %v2450 = vmax.f32 %v2448, %v2449
        %v2451 = vsel %vm2338, %v2031, -inf
        %v2452 = vrot.slane %v2451, 4
        %v2453 = vmax.f32 %v2451, %v2452
        %v2454 = vrot.slane %v2453, 2
        %v2455 = vmax.f32 %v2453, %v2454
        %v2456 = vrot.slane %v2455, 1
        %v2457 = vmax.f32 %v2455, %v2456
        %v2458 = vsel %vm2338, %v2158, -inf
        %v2459 = vrot.slane %v2458, 4
        %v2460 = vmax.f32 %v2458, %v2459
        %v2461 = vrot.slane %v2460, 2
        %v2462 = vmax.f32 %v2460, %v2461
        %v2463 = vrot.slane %v2462, 1
        %v2464 = vmax.f32 %v2462, %v2463
        %v2465 = vsel %vm2338, %v2159, -inf
        %v2466 = vrot.slane %v2465, 4
        %v2467 = vmax.f32 %v2465, %v2466
        %v2468 = vrot.slane %v2467, 2
        %v2469 = vmax.f32 %v2467, %v2468
        %v2470 = vrot.slane %v2469, 1
        %v2471 = vmax.f32 %v2469, %v2470
        %v2472 = vsel %vm2338, %v2160, -inf
        %v2473 = vrot.slane %v2472, 4
        %v2474 = vmax.f32 %v2472, %v2473
        %v2475 = vrot.slane %v2474, 2
        %v2476 = vmax.f32 %v2474, %v2475
        %v2477 = vrot.slane %v2476, 1
        %v2478 = vmax.f32 %v2476, %v2477
        %v2479 = vsel %vm2338, %v2034, -inf
        %v2480 = vrot.slane %v2479, 4
        %v2481 = vmax.f32 %v2479, %v2480
        %v2482 = vrot.slane %v2481, 2
        %v2483 = vmax.f32 %v2481, %v2482
        %v2484 = vrot.slane %v2483, 1
        %v2485 = vmax.f32 %v2483, %v2484
        %v2486 = vsel %vm2338, %v2161, -inf
        %v2487 = vrot.slane %v2486, 4
        %v2488 = vmax.f32 %v2486, %v2487
        %v2489 = vrot.slane %v2488, 2
        %v2490 = vmax.f32 %v2488, %v2489
        %v2491 = vrot.slane %v2490, 1
        %v2492 = vmax.f32 %v2490, %v2491
        %v2493 = vsel %vm2338, %v2162, -inf
        %v2494 = vrot.slane %v2493, 4
        %v2495 = vmax.f32 %v2493, %v2494
        %v2496 = vrot.slane %v2495, 2
        %v2497 = vmax.f32 %v2495, %v2496
        %v2498 = vrot.slane %v2497, 1
        %v2499 = vmax.f32 %v2497, %v2498
        %v2500 = vsel %vm2338, %v2163, -inf
        %v2501 = vrot.slane %v2500, 4
        %v2502 = vmax.f32 %v2500, %v2501
        %v2503 = vrot.slane %v2502, 2
        %v2504 = vmax.f32 %v2502, %v2503
        %v2505 = vrot.slane %v2504, 1
        %v2506 = vmax.f32 %v2504, %v2505
        %v2507 = vsel %vm2338, %v2037, -inf
        %v2508 = vrot.slane %v2507, 4
        %v2509 = vmax.f32 %v2507, %v2508
        %v2510 = vrot.slane %v2509, 2
        %v2511 = vmax.f32 %v2509, %v2510
        %v2512 = vrot.slane %v2511, 1
        %v2513 = vmax.f32 %v2511, %v2512
        %v2514 = vsel %vm2338, %v2164, -inf
        %v2515 = vrot.slane %v2514, 4
        %v2516 = vmax.f32 %v2514, %v2515
        %v2517 = vrot.slane %v2516, 2
        %v2518 = vmax.f32 %v2516, %v2517
        %v2519 = vrot.slane %v2518, 1
        %v2520 = vmax.f32 %v2518, %v2519
        %v2521 = vsel %vm2338, %v2165, -inf
        %v2522 = vrot.slane %v2521, 4
        %v2523 = vmax.f32 %v2521, %v2522
        %v2524 = vrot.slane %v2523, 2
        %v2525 = vmax.f32 %v2523, %v2524
        %v2526 = vrot.slane %v2525, 1
        %v2527 = vmax.f32 %v2525, %v2526
        %v2528 = vsel %vm2338, %v2166, -inf
        %v2529 = vrot.slane %v2528, 4
        %v2530 = vmax.f32 %v2528, %v2529
        %v2531 = vrot.slane %v2530, 2
        %v2532 = vmax.f32 %v2530, %v2531
        %v2533 = vrot.slane %v2532, 1
        %v2534 = vmax.f32 %v2532, %v2533
        %v2535 = vsel %vm2338, %v2040, -inf
        %v2536 = vrot.slane %v2535, 4
        %v2537 = vmax.f32 %v2535, %v2536
        %v2538 = vrot.slane %v2537, 2
        %v2539 = vmax.f32 %v2537, %v2538
        %v2540 = vrot.slane %v2539, 1
        %v2541 = vmax.f32 %v2539, %v2540
        %v2542 = vsel %vm2338, %v2167, -inf
        %v2543 = vrot.slane %v2542, 4
        %v2544 = vmax.f32 %v2542, %v2543
        %v2545 = vrot.slane %v2544, 2
        %v2546 = vmax.f32 %v2544, %v2545
        %v2547 = vrot.slane %v2546, 1
        %v2548 = vmax.f32 %v2546, %v2547
        %v2549 = vsel %vm2338, %v2168, -inf
        %v2550 = vrot.slane %v2549, 4
        %v2551 = vmax.f32 %v2549, %v2550
        %v2552 = vrot.slane %v2551, 2
        %v2553 = vmax.f32 %v2551, %v2552
        %v2554 = vrot.slane %v2553, 1
        %v2555 = vmax.f32 %v2553, %v2554
        %v2556 = vsel %vm2338, %v2169, -inf
        %v2557 = vrot.slane %v2556, 4
        %v2558 = vmax.f32 %v2556, %v2557
        %v2559 = vrot.slane %v2558, 2
        %v2560 = vmax.f32 %v2558, %v2559
        %v2561 = vrot.slane %v2560, 1
        %v2562 = vmax.f32 %v2560, %v2561
        %v2563 = vsel %vm2338, %v2043, -inf
        %v2564 = vrot.slane %v2563, 4
        %v2565 = vmax.f32 %v2563, %v2564
        %v2566 = vrot.slane %v2565, 2
        %v2567 = vmax.f32 %v2565, %v2566
        %v2568 = vrot.slane %v2567, 1
        %v2569 = vmax.f32 %v2567, %v2568
        %v2570 = vsel %vm2338, %v2170, -inf
        %v2571 = vrot.slane %v2570, 4
        %v2572 = vmax.f32 %v2570, %v2571
        %v2573 = vrot.slane %v2572, 2
        %v2574 = vmax.f32 %v2572, %v2573
        %v2575 = vrot.slane %v2574, 1
        %v2576 = vmax.f32 %v2574, %v2575
        %v2577 = vsel %vm2338, %v2171, -inf
        %v2578 = vrot.slane %v2577, 4
        %v2579 = vmax.f32 %v2577, %v2578
        %v2580 = vrot.slane %v2579, 2
        %v2581 = vmax.f32 %v2579, %v2580
        %v2582 = vrot.slane %v2581, 1
        %v2583 = vmax.f32 %v2581, %v2582
        %v2584 = vsel %vm2338, %v2172, -inf
        %v2585 = vrot.slane %v2584, 4
        %v2586 = vmax.f32 %v2584, %v2585
        %v2587 = vrot.slane %v2586, 2
        %v2588 = vmax.f32 %v2586, %v2587
        %v2589 = vrot.slane %v2588, 1
        %v2590 = vmax.f32 %v2588, %v2589
        %v2591 = vsel %vm2338, %v2046, -inf
        %v2592 = vrot.slane %v2591, 4
        %v2593 = vmax.f32 %v2591, %v2592
        %v2594 = vrot.slane %v2593, 2
        %v2595 = vmax.f32 %v2593, %v2594
        %v2596 = vrot.slane %v2595, 1
        %v2597 = vmax.f32 %v2595, %v2596
        %v2598 = vsel %vm2338, %v2173, -inf
        %v2599 = vrot.slane %v2598, 4
        %v2600 = vmax.f32 %v2598, %v2599
        %v2601 = vrot.slane %v2600, 2
        %v2602 = vmax.f32 %v2600, %v2601
        %v2603 = vrot.slane %v2602, 1
        %v2604 = vmax.f32 %v2602, %v2603
        %v2605 = vsel %vm2338, %v2174, -inf
        %v2606 = vrot.slane %v2605, 4
        %v2607 = vmax.f32 %v2605, %v2606
        %v2608 = vrot.slane %v2607, 2
        %v2609 = vmax.f32 %v2607, %v2608
        %v2610 = vrot.slane %v2609, 1
        %v2611 = vmax.f32 %v2609, %v2610
        %v2612 = vsel %vm2338, %v2175, -inf
        %v2613 = vrot.slane %v2612, 4
        %v2614 = vmax.f32 %v2612, %v2613
        %v2615 = vrot.slane %v2614, 2
        %v2616 = vmax.f32 %v2614, %v2615
        %v2617 = vrot.slane %v2616, 1
        %v2618 = vmax.f32 %v2616, %v2617
        %v2619 = vsel %vm2338, %v2049, -inf
        %v2620 = vrot.slane %v2619, 4
        %v2621 = vmax.f32 %v2619, %v2620
        %v2622 = vrot.slane %v2621, 2
        %v2623 = vmax.f32 %v2621, %v2622
        %v2624 = vrot.slane %v2623, 1
        %v2625 = vmax.f32 %v2623, %v2624
        %v2626 = vsel %vm2338, %v2176, -inf
        %v2627 = vrot.slane %v2626, 4
        %v2628 = vmax.f32 %v2626, %v2627
        %v2629 = vrot.slane %v2628, 2
        %v2630 = vmax.f32 %v2628, %v2629
        %v2631 = vrot.slane %v2630, 1
        %v2632 = vmax.f32 %v2630, %v2631
        %v2633 = vsel %vm2338, %v2177, -inf
        %v2634 = vrot.slane %v2633, 4
        %v2635 = vmax.f32 %v2633, %v2634
        %v2636 = vrot.slane %v2635, 2
        %v2637 = vmax.f32 %v2635, %v2636
        %v2638 = vrot.slane %v2637, 1
        %v2639 = vmax.f32 %v2637, %v2638
        %v2640 = vsel %vm2338, %v2178, -inf
        %v2641 = vrot.slane %v2640, 4
        %v2642 = vmax.f32 %v2640, %v2641
        %v2643 = vrot.slane %v2642, 2
        %v2644 = vmax.f32 %v2642, %v2643
        %v2645 = vrot.slane %v2644, 1
        %v2646 = vmax.f32 %v2644, %v2645
        %v2647 = vsel %vm2338, %v2052, -inf
        %v2648 = vrot.slane %v2647, 4
        %v2649 = vmax.f32 %v2647, %v2648
        %v2650 = vrot.slane %v2649, 2
        %v2651 = vmax.f32 %v2649, %v2650
        %v2652 = vrot.slane %v2651, 1
        %v2653 = vmax.f32 %v2651, %v2652
        %v2654 = vsel %vm2338, %v2179, -inf
        %v2655 = vrot.slane %v2654, 4
        %v2656 = vmax.f32 %v2654, %v2655
        %v2657 = vrot.slane %v2656, 2
        %v2658 = vmax.f32 %v2656, %v2657
        %v2659 = vrot.slane %v2658, 1
        %v2660 = vmax.f32 %v2658, %v2659
        %v2661 = vsel %vm2338, %v2180, -inf
        %v2662 = vrot.slane %v2661, 4
        %v2663 = vmax.f32 %v2661, %v2662
        %v2664 = vrot.slane %v2663, 2
        %v2665 = vmax.f32 %v2663, %v2664
        %v2666 = vrot.slane %v2665, 1
        %v2667 = vmax.f32 %v2665, %v2666
        %v2668 = vsel %vm2338, %v2181, -inf
        %v2669 = vrot.slane %v2668, 4
        %v2670 = vmax.f32 %v2668, %v2669
        %v2671 = vrot.slane %v2670, 2
        %v2672 = vmax.f32 %v2670, %v2671
        %v2673 = vrot.slane %v2672, 1
        %v2674 = vmax.f32 %v2672, %v2673
        %v2675 = vsel %vm2338, %v2055, -inf
        %v2676 = vrot.slane %v2675, 4
        %v2677 = vmax.f32 %v2675, %v2676
        %v2678 = vrot.slane %v2677, 2
        %v2679 = vmax.f32 %v2677, %v2678
        %v2680 = vrot.slane %v2679, 1
        %v2681 = vmax.f32 %v2679, %v2680
        %v2682 = vsel %vm2338, %v2182, -inf
        %v2683 = vrot.slane %v2682, 4
        %v2684 = vmax.f32 %v2682, %v2683
        %v2685 = vrot.slane %v2684, 2
        %v2686 = vmax.f32 %v2684, %v2685
        %v2687 = vrot.slane %v2686, 1
        %v2688 = vmax.f32 %v2686, %v2687
        %v2689 = vsel %vm2338, %v2183, -inf
        %v2690 = vrot.slane %v2689, 4
        %v2691 = vmax.f32 %v2689, %v2690
        %v2692 = vrot.slane %v2691, 2
        %v2693 = vmax.f32 %v2691, %v2692
        %v2694 = vrot.slane %v2693, 1
        %v2695 = vmax.f32 %v2693, %v2694
        %v2696 = vsel %vm2338, %v2184, -inf
        %v2697 = vrot.slane %v2696, 4
        %v2698 = vmax.f32 %v2696, %v2697
        %v2699 = vrot.slane %v2698, 2
        %v2700 = vmax.f32 %v2698, %v2699
        %v2701 = vrot.slane %v2700, 1
        %v2702 = vmax.f32 %v2700, %v2701
        %v2703 = vsel %vm2338, %v2058, -inf
        %v2704 = vrot.slane %v2703, 4
        %v2705 = vmax.f32 %v2703, %v2704
        %v2706 = vrot.slane %v2705, 2
        %v2707 = vmax.f32 %v2705, %v2706
        %v2708 = vrot.slane %v2707, 1
        %v2709 = vmax.f32 %v2707, %v2708
        %v2710 = vsel %vm2338, %v2185, -inf
        %v2711 = vrot.slane %v2710, 4
        %v2712 = vmax.f32 %v2710, %v2711
        %v2713 = vrot.slane %v2712, 2
        %v2714 = vmax.f32 %v2712, %v2713
        %v2715 = vrot.slane %v2714, 1
        %v2716 = vmax.f32 %v2714, %v2715
        %v2717 = vsel %vm2338, %v2186, -inf
        %v2718 = vrot.slane %v2717, 4
        %v2719 = vmax.f32 %v2717, %v2718
        %v2720 = vrot.slane %v2719, 2
        %v2721 = vmax.f32 %v2719, %v2720
        %v2722 = vrot.slane %v2721, 1
        %v2723 = vmax.f32 %v2721, %v2722
        %v2724 = vsel %vm2338, %v2187, -inf
        %v2725 = vrot.slane %v2724, 4
        %v2726 = vmax.f32 %v2724, %v2725
        %v2727 = vrot.slane %v2726, 2
        %v2728 = vmax.f32 %v2726, %v2727
        %v2729 = vrot.slane %v2728, 1
        %v2730 = vmax.f32 %v2728, %v2729
        %v2731 = vsel %vm2338, %v2061, -inf
        %v2732 = vrot.slane %v2731, 4
        %v2733 = vmax.f32 %v2731, %v2732
        %v2734 = vrot.slane %v2733, 2
        %v2735 = vmax.f32 %v2733, %v2734
        %v2736 = vrot.slane %v2735, 1
        %v2737 = vmax.f32 %v2735, %v2736
        %v2738 = vsel %vm2338, %v2188, -inf
        %v2739 = vrot.slane %v2738, 4
        %v2740 = vmax.f32 %v2738, %v2739
        %v2741 = vrot.slane %v2740, 2
        %v2742 = vmax.f32 %v2740, %v2741
        %v2743 = vrot.slane %v2742, 1
        %v2744 = vmax.f32 %v2742, %v2743
        %v2745 = vsel %vm2338, %v2189, -inf
        %v2746 = vrot.slane %v2745, 4
        %v2747 = vmax.f32 %v2745, %v2746
        %v2748 = vrot.slane %v2747, 2
        %v2749 = vmax.f32 %v2747, %v2748
        %v2750 = vrot.slane %v2749, 1
        %v2751 = vmax.f32 %v2749, %v2750
        %v2752 = vsel %vm2338, %v2190, -inf
        %v2753 = vrot.slane %v2752, 4
        %v2754 = vmax.f32 %v2752, %v2753
        %v2755 = vrot.slane %v2754, 2
        %v2756 = vmax.f32 %v2754, %v2755
        %v2757 = vrot.slane %v2756, 1
        %v2758 = vmax.f32 %v2756, %v2757
        %v2759 = vsel %vm2338, %v2064, -inf
        %v2760 = vrot.slane %v2759, 4
        %v2761 = vmax.f32 %v2759, %v2760
        %v2762 = vrot.slane %v2761, 2
        %v2763 = vmax.f32 %v2761, %v2762
        %v2764 = vrot.slane %v2763, 1
        %v2765 = vmax.f32 %v2763, %v2764
        %v2766 = vsel %vm2338, %v2191, -inf
        %v2767 = vrot.slane %v2766, 4
        %v2768 = vmax.f32 %v2766, %v2767
        %v2769 = vrot.slane %v2768, 2
        %v2770 = vmax.f32 %v2768, %v2769
        %v2771 = vrot.slane %v2770, 1
        %v2772 = vmax.f32 %v2770, %v2771
        %v2773 = vsel %vm2338, %v2192, -inf
        %v2774 = vrot.slane %v2773, 4
        %v2775 = vmax.f32 %v2773, %v2774
        %v2776 = vrot.slane %v2775, 2
        %v2777 = vmax.f32 %v2775, %v2776
        %v2778 = vrot.slane %v2777, 1
        %v2779 = vmax.f32 %v2777, %v2778
        %v2780 = vsel %vm2338, %v2193, -inf
        %v2781 = vrot.slane %v2780, 4
        %v2782 = vmax.f32 %v2780, %v2781
        %v2783 = vrot.slane %v2782, 2
        %v2784 = vmax.f32 %v2782, %v2783
        %v2785 = vrot.slane %v2784, 1
        %v2786 = vmax.f32 %v2784, %v2785
        %v2787 = vsel %vm2338, %v2067, -inf
        %v2788 = vrot.slane %v2787, 4
        %v2789 = vmax.f32 %v2787, %v2788
        %v2790 = vrot.slane %v2789, 2
        %v2791 = vmax.f32 %v2789, %v2790
        %v2792 = vrot.slane %v2791, 1
        %v2793 = vmax.f32 %v2791, %v2792
        %v2794 = vsel %vm2338, %v2194, -inf
        %v2795 = vrot.slane %v2794, 4
        %v2796 = vmax.f32 %v2794, %v2795
        %v2797 = vrot.slane %v2796, 2
        %v2798 = vmax.f32 %v2796, %v2797
        %v2799 = vrot.slane %v2798, 1
        %v2800 = vmax.f32 %v2798, %v2799
        %v2801 = vsel %vm2338, %v2195, -inf
        %v2802 = vrot.slane %v2801, 4
        %v2803 = vmax.f32 %v2801, %v2802
        %v2804 = vrot.slane %v2803, 2
        %v2805 = vmax.f32 %v2803, %v2804
        %v2806 = vrot.slane %v2805, 1
        %v2807 = vmax.f32 %v2805, %v2806
        %v2808 = vsel %vm2338, %v2196, -inf
        %v2809 = vrot.slane %v2808, 4
        %v2810 = vmax.f32 %v2808, %v2809
        %v2811 = vrot.slane %v2810, 2
        %v2812 = vmax.f32 %v2810, %v2811
        %v2813 = vrot.slane %v2812, 1
        %v2814 = vmax.f32 %v2812, %v2813
        %v2815 = vsel %vm2338, %v2070, -inf
        %v2816 = vrot.slane %v2815, 4
        %v2817 = vmax.f32 %v2815, %v2816
        %v2818 = vrot.slane %v2817, 2
        %v2819 = vmax.f32 %v2817, %v2818
        %v2820 = vrot.slane %v2819, 1
        %v2821 = vmax.f32 %v2819, %v2820
        %v2822 = vsel %vm2338, %v2197, -inf
        %v2823 = vrot.slane %v2822, 4
        %v2824 = vmax.f32 %v2822, %v2823
        %v2825 = vrot.slane %v2824, 2
        %v2826 = vmax.f32 %v2824, %v2825
        %v2827 = vrot.slane %v2826, 1
        %v2828 = vmax.f32 %v2826, %v2827
        %v2829 = vsel %vm2338, %v2198, -inf
        %v2830 = vrot.slane %v2829, 4
        %v2831 = vmax.f32 %v2829, %v2830
        %v2832 = vrot.slane %v2831, 2
        %v2833 = vmax.f32 %v2831, %v2832
        %v2834 = vrot.slane %v2833, 1
        %v2835 = vmax.f32 %v2833, %v2834
        %v2836 = vsel %vm2338, %v2199, -inf
        %v2837 = vrot.slane %v2836, 4
        %v2838 = vmax.f32 %v2836, %v2837
        %v2839 = vrot.slane %v2838, 2
        %v2840 = vmax.f32 %v2838, %v2839
        %v2841 = vrot.slane %v2840, 1
        %v2842 = vmax.f32 %v2840, %v2841
        %v2843 = vsel %vm2338, %v2073, -inf
        %v2844 = vrot.slane %v2843, 4
        %v2845 = vmax.f32 %v2843, %v2844
        %v2846 = vrot.slane %v2845, 2
        %v2847 = vmax.f32 %v2845, %v2846
        %v2848 = vrot.slane %v2847, 1
        %v2849 = vmax.f32 %v2847, %v2848
        %v2850 = vsel %vm2338, %v2200, -inf
        %v2851 = vrot.slane %v2850, 4
        %v2852 = vmax.f32 %v2850, %v2851
        %v2853 = vrot.slane %v2852, 2
        %v2854 = vmax.f32 %v2852, %v2853
        %v2855 = vrot.slane %v2854, 1
        %v2856 = vmax.f32 %v2854, %v2855
        %v2857 = vsel %vm2338, %v2201, -inf
        %v2858 = vrot.slane %v2857, 4
        %v2859 = vmax.f32 %v2857, %v2858
        %v2860 = vrot.slane %v2859, 2
        %v2861 = vmax.f32 %v2859, %v2860
        %v2862 = vrot.slane %v2861, 1
        %v2863 = vmax.f32 %v2861, %v2862
        %v2864 = vsel %vm2338, %v2202, -inf
        %v2865 = vrot.slane %v2864, 4
        %v2866 = vmax.f32 %v2864, %v2865
        %v2867 = vrot.slane %v2866, 2
        %v2868 = vmax.f32 %v2866, %v2867
        %v2869 = vrot.slane %v2868, 1
        %v2870 = vmax.f32 %v2868, %v2869
        %v2871 = vsel %vm2338, %v2076, -inf
        %v2872 = vrot.slane %v2871, 4
        %v2873 = vmax.f32 %v2871, %v2872
        %v2874 = vrot.slane %v2873, 2
        %v2875 = vmax.f32 %v2873, %v2874
        %v2876 = vrot.slane %v2875, 1
        %v2877 = vmax.f32 %v2875, %v2876
        %v2878 = vsel %vm2338, %v2203, -inf
        %v2879 = vrot.slane %v2878, 4
        %v2880 = vmax.f32 %v2878, %v2879
        %v2881 = vrot.slane %v2880, 2
        %v2882 = vmax.f32 %v2880, %v2881
        %v2883 = vrot.slane %v2882, 1
        %v2884 = vmax.f32 %v2882, %v2883
        %v2885 = vsel %vm2338, %v2204, -inf
        %v2886 = vrot.slane %v2885, 4
        %v2887 = vmax.f32 %v2885, %v2886
        %v2888 = vrot.slane %v2887, 2
        %v2889 = vmax.f32 %v2887, %v2888
        %v2890 = vrot.slane %v2889, 1
        %v2891 = vmax.f32 %v2889, %v2890
        %v2892 = vsel %vm2338, %v2205, -inf
        %v2893 = vrot.slane %v2892, 4
        %v2894 = vmax.f32 %v2892, %v2893
        %v2895 = vrot.slane %v2894, 2
        %v2896 = vmax.f32 %v2894, %v2895
        %v2897 = vrot.slane %v2896, 1
        %v2898 = vmax.f32 %v2896, %v2897
        %v2899 = vsel %vm2338, %v2079, -inf
        %v2900 = vrot.slane %v2899, 4
        %v2901 = vmax.f32 %v2899, %v2900
        %v2902 = vrot.slane %v2901, 2
        %v2903 = vmax.f32 %v2901, %v2902
        %v2904 = vrot.slane %v2903, 1
        %v2905 = vmax.f32 %v2903, %v2904
        %v2906 = vsel %vm2338, %v2206, -inf
        %v2907 = vrot.slane %v2906, 4
        %v2908 = vmax.f32 %v2906, %v2907
        %v2909 = vrot.slane %v2908, 2
        %v2910 = vmax.f32 %v2908, %v2909
        %v2911 = vrot.slane %v2910, 1
        %v2912 = vmax.f32 %v2910, %v2911
        %v2913 = vsel %vm2338, %v2207, -inf
        %v2914 = vrot.slane %v2913, 4
        %v2915 = vmax.f32 %v2913, %v2914
        %v2916 = vrot.slane %v2915, 2
        %v2917 = vmax.f32 %v2915, %v2916
        %v2918 = vrot.slane %v2917, 1
        %v2919 = vmax.f32 %v2917, %v2918
        %v2920 = vsel %vm2338, %v2208, -inf
        %v2921 = vrot.slane %v2920, 4
        %v2922 = vmax.f32 %v2920, %v2921
        %v2923 = vrot.slane %v2922, 2
        %v2924 = vmax.f32 %v2922, %v2923
        %v2925 = vrot.slane %v2924, 1
        %v2926 = vmax.f32 %v2924, %v2925
        %v2927 = vsel %vm2338, %v2082, -inf
        %v2928 = vrot.slane %v2927, 4
        %v2929 = vmax.f32 %v2927, %v2928
        %v2930 = vrot.slane %v2929, 2
        %v2931 = vmax.f32 %v2929, %v2930
        %v2932 = vrot.slane %v2931, 1
        %v2933 = vmax.f32 %v2931, %v2932
        %v2934 = vsel %vm2338, %v2209, -inf
        %v2935 = vrot.slane %v2934, 4
        %v2936 = vmax.f32 %v2934, %v2935
        %v2937 = vrot.slane %v2936, 2
        %v2938 = vmax.f32 %v2936, %v2937
        %v2939 = vrot.slane %v2938, 1
        %v2940 = vmax.f32 %v2938, %v2939
        %v2941 = vsel %vm2338, %v2210, -inf
        %v2942 = vrot.slane %v2941, 4
        %v2943 = vmax.f32 %v2941, %v2942
        %v2944 = vrot.slane %v2943, 2
        %v2945 = vmax.f32 %v2943, %v2944
        %v2946 = vrot.slane %v2945, 1
        %v2947 = vmax.f32 %v2945, %v2946
        %v2948 = vsel %vm2338, %v2211, -inf
        %v2949 = vrot.slane %v2948, 4
        %v2950 = vmax.f32 %v2948, %v2949
        %v2951 = vrot.slane %v2950, 2
        %v2952 = vmax.f32 %v2950, %v2951
        %v2953 = vrot.slane %v2952, 1
        %v2954 = vmax.f32 %v2952, %v2953
        %v2955 = vsel %vm2338, %v2085, -inf
        %v2956 = vrot.slane %v2955, 4
        %v2957 = vmax.f32 %v2955, %v2956
        %v2958 = vrot.slane %v2957, 2
        %v2959 = vmax.f32 %v2957, %v2958
        %v2960 = vrot.slane %v2959, 1
        %v2961 = vmax.f32 %v2959, %v2960
        %v2962 = vsel %vm2338, %v2212, -inf
        %v2963 = vrot.slane %v2962, 4
        %v2964 = vmax.f32 %v2962, %v2963
        %v2965 = vrot.slane %v2964, 2
        %v2966 = vmax.f32 %v2964, %v2965
        %v2967 = vrot.slane %v2966, 1
        %v2968 = vmax.f32 %v2966, %v2967
        %v2969 = vsel %vm2338, %v2213, -inf
        %v2970 = vrot.slane %v2969, 4
        %v2971 = vmax.f32 %v2969, %v2970
        %v2972 = vrot.slane %v2971, 2
        %v2973 = vmax.f32 %v2971, %v2972
        %v2974 = vrot.slane %v2973, 1
        %v2975 = vmax.f32 %v2973, %v2974
        %v2976 = vsel %vm2338, %v2214, -inf
        %v2977 = vrot.slane %v2976, 4
        %v2978 = vmax.f32 %v2976, %v2977
        %v2979 = vrot.slane %v2978, 2
        %v2980 = vmax.f32 %v2978, %v2979
        %v2981 = vrot.slane %v2980, 1
        %v2982 = vmax.f32 %v2980, %v2981
        %v2983 = vsel %vm2338, %v2088, -inf
        %v2984 = vrot.slane %v2983, 4
        %v2985 = vmax.f32 %v2983, %v2984
        %v2986 = vrot.slane %v2985, 2
        %v2987 = vmax.f32 %v2985, %v2986
        %v2988 = vrot.slane %v2987, 1
        %v2989 = vmax.f32 %v2987, %v2988
        %v2990 = vsel %vm2338, %v2215, -inf
        %v2991 = vrot.slane %v2990, 4
        %v2992 = vmax.f32 %v2990, %v2991
        %v2993 = vrot.slane %v2992, 2
        %v2994 = vmax.f32 %v2992, %v2993
        %v2995 = vrot.slane %v2994, 1
        %v2996 = vmax.f32 %v2994, %v2995
        %v2997 = vsel %vm2338, %v2216, -inf
        %v2998 = vrot.slane %v2997, 4
        %v2999 = vmax.f32 %v2997, %v2998
        %v3000 = vrot.slane %v2999, 2
        %v3001 = vmax.f32 %v2999, %v3000
        %v3002 = vrot.slane %v3001, 1
        %v3003 = vmax.f32 %v3001, %v3002
        %v3004 = vsel %vm2338, %v2217, -inf
        %v3005 = vrot.slane %v3004, 4
        %v3006 = vmax.f32 %v3004, %v3005
        %v3007 = vrot.slane %v3006, 2
        %v3008 = vmax.f32 %v3006, %v3007
        %v3009 = vrot.slane %v3008, 1
        %v3010 = vmax.f32 %v3008, %v3009
        %v3011 = vsel %vm2338, %v2091, -inf
        %v3012 = vrot.slane %v3011, 4
        %v3013 = vmax.f32 %v3011, %v3012
        %v3014 = vrot.slane %v3013, 2
        %v3015 = vmax.f32 %v3013, %v3014
        %v3016 = vrot.slane %v3015, 1
        %v3017 = vmax.f32 %v3015, %v3016
        %v3018 = vsel %vm2338, %v2218, -inf
        %v3019 = vrot.slane %v3018, 4
        %v3020 = vmax.f32 %v3018, %v3019
        %v3021 = vrot.slane %v3020, 2
        %v3022 = vmax.f32 %v3020, %v3021
        %v3023 = vrot.slane %v3022, 1
        %v3024 = vmax.f32 %v3022, %v3023
        %v3025 = vsel %vm2338, %v2219, -inf
        %v3026 = vrot.slane %v3025, 4
        %v3027 = vmax.f32 %v3025, %v3026
        %v3028 = vrot.slane %v3027, 2
        %v3029 = vmax.f32 %v3027, %v3028
        %v3030 = vrot.slane %v3029, 1
        %v3031 = vmax.f32 %v3029, %v3030
        %v3032 = vsel %vm2338, %v2220, -inf
        %v3033 = vrot.slane %v3032, 4
        %v3034 = vmax.f32 %v3032, %v3033
        %v3035 = vrot.slane %v3034, 2
        %v3036 = vmax.f32 %v3034, %v3035
        %v3037 = vrot.slane %v3036, 1
        %v3038 = vmax.f32 %v3036, %v3037
        %v3039 = vsel %vm2338, %v2094, -inf
        %v3040 = vrot.slane %v3039, 4
        %v3041 = vmax.f32 %v3039, %v3040
        %v3042 = vrot.slane %v3041, 2
        %v3043 = vmax.f32 %v3041, %v3042
        %v3044 = vrot.slane %v3043, 1
        %v3045 = vmax.f32 %v3043, %v3044
        %v3046 = vsel %vm2338, %v2221, -inf
        %v3047 = vrot.slane %v3046, 4
        %v3048 = vmax.f32 %v3046, %v3047
        %v3049 = vrot.slane %v3048, 2
        %v3050 = vmax.f32 %v3048, %v3049
        %v3051 = vrot.slane %v3050, 1
        %v3052 = vmax.f32 %v3050, %v3051
        %v3053 = vsel %vm2338, %v2222, -inf
        %v3054 = vrot.slane %v3053, 4
        %v3055 = vmax.f32 %v3053, %v3054
        %v3056 = vrot.slane %v3055, 2
        %v3057 = vmax.f32 %v3055, %v3056
        %v3058 = vrot.slane %v3057, 1
        %v3059 = vmax.f32 %v3057, %v3058
        %v3060 = vsel %vm2338, %v2223, -inf
        %v3061 = vrot.slane %v3060, 4
        %v3062 = vmax.f32 %v3060, %v3061
        %v3063 = vrot.slane %v3062, 2
        %v3064 = vmax.f32 %v3062, %v3063
        %v3065 = vrot.slane %v3064, 1
        %v3066 = vmax.f32 %v3064, %v3065
        %v3067 = vsel %vm2338, %v2097, -inf
        %v3068 = vrot.slane %v3067, 4
        %v3069 = vmax.f32 %v3067, %v3068
        %v3070 = vrot.slane %v3069, 2
        %v3071 = vmax.f32 %v3069, %v3070
        %v3072 = vrot.slane %v3071, 1
        %v3073 = vmax.f32 %v3071, %v3072
        %v3074 = vsel %vm2338, %v2224, -inf
        %v3075 = vrot.slane %v3074, 4
        %v3076 = vmax.f32 %v3074, %v3075
        %v3077 = vrot.slane %v3076, 2
        %v3078 = vmax.f32 %v3076, %v3077
        %v3079 = vrot.slane %v3078, 1
        %v3080 = vmax.f32 %v3078, %v3079
        %v3081 = vsel %vm2338, %v2225, -inf
        %v3082 = vrot.slane %v3081, 4
        %v3083 = vmax.f32 %v3081, %v3082
        %v3084 = vrot.slane %v3083, 2
        %v3085 = vmax.f32 %v3083, %v3084
        %v3086 = vrot.slane %v3085, 1
        %v3087 = vmax.f32 %v3085, %v3086
        %v3088 = vsel %vm2338, %v2226, -inf
        %v3089 = vrot.slane %v3088, 4
        %v3090 = vmax.f32 %v3088, %v3089
        %v3091 = vrot.slane %v3090, 2
        %v3092 = vmax.f32 %v3090, %v3091
        %v3093 = vrot.slane %v3092, 1
        %v3094 = vmax.f32 %v3092, %v3093
        %v3095 = vsel %vm2338, %v2100, -inf
        %v3096 = vrot.slane %v3095, 4
        %v3097 = vmax.f32 %v3095, %v3096
        %v3098 = vrot.slane %v3097, 2
        %v3099 = vmax.f32 %v3097, %v3098
        %v3100 = vrot.slane %v3099, 1
        %v3101 = vmax.f32 %v3099, %v3100
        %v3102 = vsel %vm2338, %v2227, -inf
        %v3103 = vrot.slane %v3102, 4
        %v3104 = vmax.f32 %v3102, %v3103
        %v3105 = vrot.slane %v3104, 2
        %v3106 = vmax.f32 %v3104, %v3105
        %v3107 = vrot.slane %v3106, 1
        %v3108 = vmax.f32 %v3106, %v3107
        %v3109 = vsel %vm2338, %v2228, -inf
        %v3110 = vrot.slane %v3109, 4
        %v3111 = vmax.f32 %v3109, %v3110
        %v3112 = vrot.slane %v3111, 2
        %v3113 = vmax.f32 %v3111, %v3112
        %v3114 = vrot.slane %v3113, 1
        %v3115 = vmax.f32 %v3113, %v3114
        %v3116 = vsel %vm2338, %v2229, -inf
        %v3117 = vrot.slane %v3116, 4
        %v3118 = vmax.f32 %v3116, %v3117
        %v3119 = vrot.slane %v3118, 2
        %v3120 = vmax.f32 %v3118, %v3119
        %v3121 = vrot.slane %v3120, 1
        %v3122 = vmax.f32 %v3120, %v3121
        %v3123 = vsel %vm2338, %v2103, -inf
        %v3124 = vrot.slane %v3123, 4
        %v3125 = vmax.f32 %v3123, %v3124
        %v3126 = vrot.slane %v3125, 2
        %v3127 = vmax.f32 %v3125, %v3126
        %v3128 = vrot.slane %v3127, 1
        %v3129 = vmax.f32 %v3127, %v3128
        %v3130 = vsel %vm2338, %v2230, -inf
        %v3131 = vrot.slane %v3130, 4
        %v3132 = vmax.f32 %v3130, %v3131
        %v3133 = vrot.slane %v3132, 2
        %v3134 = vmax.f32 %v3132, %v3133
        %v3135 = vrot.slane %v3134, 1
        %v3136 = vmax.f32 %v3134, %v3135
        %v3137 = vsel %vm2338, %v2231, -inf
        %v3138 = vrot.slane %v3137, 4
        %v3139 = vmax.f32 %v3137, %v3138
        %v3140 = vrot.slane %v3139, 2
        %v3141 = vmax.f32 %v3139, %v3140
        %v3142 = vrot.slane %v3141, 1
        %v3143 = vmax.f32 %v3141, %v3142
        %v3144 = vsel %vm2338, %v2232, -inf
        %v3145 = vrot.slane %v3144, 4
        %v3146 = vmax.f32 %v3144, %v3145
        %v3147 = vrot.slane %v3146, 2
        %v3148 = vmax.f32 %v3146, %v3147
        %v3149 = vrot.slane %v3148, 1
        %v3150 = vmax.f32 %v3148, %v3149
        %v3151 = vsel %vm2338, %v2106, -inf
        %v3152 = vrot.slane %v3151, 4
        %v3153 = vmax.f32 %v3151, %v3152
        %v3154 = vrot.slane %v3153, 2
        %v3155 = vmax.f32 %v3153, %v3154
        %v3156 = vrot.slane %v3155, 1
        %v3157 = vmax.f32 %v3155, %v3156
        %v3158 = vsel %vm2338, %v2233, -inf
        %v3159 = vrot.slane %v3158, 4
        %v3160 = vmax.f32 %v3158, %v3159
        %v3161 = vrot.slane %v3160, 2
        %v3162 = vmax.f32 %v3160, %v3161
        %v3163 = vrot.slane %v3162, 1
        %v3164 = vmax.f32 %v3162, %v3163
        %v3165 = vsel %vm2338, %v2234, -inf
        %v3166 = vrot.slane %v3165, 4
        %v3167 = vmax.f32 %v3165, %v3166
        %v3168 = vrot.slane %v3167, 2
        %v3169 = vmax.f32 %v3167, %v3168
        %v3170 = vrot.slane %v3169, 1
        %v3171 = vmax.f32 %v3169, %v3170
        %v3172 = vsel %vm2338, %v2235, -inf
        %v3173 = vrot.slane %v3172, 4
        %v3174 = vmax.f32 %v3172, %v3173
        %v3175 = vrot.slane %v3174, 2
        %v3176 = vmax.f32 %v3174, %v3175
        %v3177 = vrot.slane %v3176, 1
        %v3178 = vmax.f32 %v3176, %v3177
        %v3179 = vsel %vm2338, %v2109, -inf
        %v3180 = vrot.slane %v3179, 4
        %v3181 = vmax.f32 %v3179, %v3180
        %v3182 = vrot.slane %v3181, 2
        %v3183 = vmax.f32 %v3181, %v3182
        %v3184 = vrot.slane %v3183, 1
        %v3185 = vmax.f32 %v3183, %v3184
        %v3186 = vsel %vm2338, %v2236, -inf
        %v3187 = vrot.slane %v3186, 4
        %v3188 = vmax.f32 %v3186, %v3187
        %v3189 = vrot.slane %v3188, 2
        %v3190 = vmax.f32 %v3188, %v3189
        %v3191 = vrot.slane %v3190, 1
        %v3192 = vmax.f32 %v3190, %v3191
        %v3193 = vsel %vm2338, %v2237, -inf
        %v3194 = vrot.slane %v3193, 4
        %v3195 = vmax.f32 %v3193, %v3194
        %v3196 = vrot.slane %v3195, 2
        %v3197 = vmax.f32 %v3195, %v3196
        %v3198 = vrot.slane %v3197, 1
        %v3199 = vmax.f32 %v3197, %v3198
        %v3200 = vsel %vm2338, %v2238, -inf
        %v3201 = vrot.slane %v3200, 4
        %v3202 = vmax.f32 %v3200, %v3201
        %v3203 = vrot.slane %v3202, 2
        %v3204 = vmax.f32 %v3202, %v3203
        %v3205 = vrot.slane %v3204, 1
        %v3206 = vmax.f32 %v3204, %v3205
        %v3207 = vsel %vm2338, %v2112, -inf
        %v3208 = vrot.slane %v3207, 4
        %v3209 = vmax.f32 %v3207, %v3208
        %v3210 = vrot.slane %v3209, 2
        %v3211 = vmax.f32 %v3209, %v3210
        %v3212 = vrot.slane %v3211, 1
        %v3213 = vmax.f32 %v3211, %v3212
        %v3214 = vsel %vm2338, %v2239, -inf
        %v3215 = vrot.slane %v3214, 4
        %v3216 = vmax.f32 %v3214, %v3215
        %v3217 = vrot.slane %v3216, 2
        %v3218 = vmax.f32 %v3216, %v3217
        %v3219 = vrot.slane %v3218, 1
        %v3220 = vmax.f32 %v3218, %v3219
        %v3221 = vsel %vm2338, %v2240, -inf
        %v3222 = vrot.slane %v3221, 4
        %v3223 = vmax.f32 %v3221, %v3222
        %v3224 = vrot.slane %v3223, 2
        %v3225 = vmax.f32 %v3223, %v3224
        %v3226 = vrot.slane %v3225, 1
        %v3227 = vmax.f32 %v3225, %v3226
        %v3228 = vsel %vm2338, %v2241, -inf
        %v3229 = vrot.slane %v3228, 4
        %v3230 = vmax.f32 %v3228, %v3229
        %v3231 = vrot.slane %v3230, 2
        %v3232 = vmax.f32 %v3230, %v3231
        %v3233 = vrot.slane %v3232, 1
        %v3234 = vmax.f32 %v3232, %v3233
        %v3235 = vsel %vm1730, %v2345, -inf
        %v3236 = vsel %vm1730, %v2401, -inf
        %v3237 = vmax.f32 %v3235, %v3236
        %v3238 = vsel %vm1730, %v2352, -inf
        %v3239 = vsel %vm1730, %v2408, -inf
        %v3240 = vmax.f32 %v3238, %v3239
        %v3241 = vsel %vm1730, %v2359, -inf
        %v3242 = vsel %vm1730, %v2415, -inf
        %v3243 = vmax.f32 %v3241, %v3242
        %v3244 = vsel %vm1730, %v2366, -inf
        %v3245 = vsel %vm1730, %v2422, -inf
        %v3246 = vmax.f32 %v3244, %v3245
        %v3247 = vsel %vm1730, %v2373, -inf
        %v3248 = vsel %vm1730, %v2429, -inf
        %v3249 = vmax.f32 %v3247, %v3248
        %v3250 = vsel %vm1730, %v2380, -inf
        %v3251 = vsel %vm1730, %v2436, -inf
        %v3252 = vmax.f32 %v3250, %v3251
        %v3253 = vsel %vm1730, %v2387, -inf
        %v3254 = vsel %vm1730, %v2443, -inf
        %v3255 = vmax.f32 %v3253, %v3254
        %v3256 = vsel %vm1730, %v2394, -inf
        %v3257 = vsel %vm1730, %v2450, -inf
        %v3258 = vmax.f32 %v3256, %v3257
        %v3259 = vsel %vm1730, %v2457, -inf
        %v3260 = vsel %vm1730, %v2513, -inf
        %v3261 = vmax.f32 %v3259, %v3260
        %v3262 = vsel %vm1730, %v2464, -inf
        %v3263 = vsel %vm1730, %v2520, -inf
        %v3264 = vmax.f32 %v3262, %v3263
        %v3265 = vsel %vm1730, %v2471, -inf
        %v3266 = vsel %vm1730, %v2527, -inf
        %v3267 = vmax.f32 %v3265, %v3266
        %v3268 = vsel %vm1730, %v2478, -inf
        %v3269 = vsel %vm1730, %v2534, -inf
        %v3270 = vmax.f32 %v3268, %v3269
        %v3271 = vsel %vm1730, %v2485, -inf
        %v3272 = vsel %vm1730, %v2541, -inf
        %v3273 = vmax.f32 %v3271, %v3272
        %v3274 = vsel %vm1730, %v2492, -inf
        %v3275 = vsel %vm1730, %v2548, -inf
        %v3276 = vmax.f32 %v3274, %v3275
        %v3277 = vsel %vm1730, %v2499, -inf
        %v3278 = vsel %vm1730, %v2555, -inf
        %v3279 = vmax.f32 %v3277, %v3278
        %v3280 = vsel %vm1730, %v2506, -inf
        %v3281 = vsel %vm1730, %v2562, -inf
        %v3282 = vmax.f32 %v3280, %v3281
        %v3283 = vsel %vm1730, %v2569, -inf
        %v3284 = vsel %vm1730, %v2625, -inf
        %v3285 = vmax.f32 %v3283, %v3284
        %v3286 = vsel %vm1730, %v2576, -inf
        %v3287 = vsel %vm1730, %v2632, -inf
        %v3288 = vmax.f32 %v3286, %v3287
        %v3289 = vsel %vm1730, %v2583, -inf
        %v3290 = vsel %vm1730, %v2639, -inf
        %v3291 = vmax.f32 %v3289, %v3290
        %v3292 = vsel %vm1730, %v2590, -inf
        %v3293 = vsel %vm1730, %v2646, -inf
        %v3294 = vmax.f32 %v3292, %v3293
        %v3295 = vsel %vm1730, %v2597, -inf
        %v3296 = vsel %vm1730, %v2653, -inf
        %v3297 = vmax.f32 %v3295, %v3296
        %v3298 = vsel %vm1730, %v2604, -inf
        %v3299 = vsel %vm1730, %v2660, -inf
        %v3300 = vmax.f32 %v3298, %v3299
        %v3301 = vsel %vm1730, %v2611, -inf
        %v3302 = vsel %vm1730, %v2667, -inf
        %v3303 = vmax.f32 %v3301, %v3302
        %v3304 = vsel %vm1730, %v2618, -inf
        %v3305 = vsel %vm1730, %v2674, -inf
        %v3306 = vmax.f32 %v3304, %v3305
        %v3307 = vsel %vm1730, %v2681, -inf
        %v3308 = vsel %vm1730, %v2737, -inf
        %v3309 = vmax.f32 %v3307, %v3308
        %v3310 = vsel %vm1730, %v2688, -inf
        %v3311 = vsel %vm1730, %v2744, -inf
        %v3312 = vmax.f32 %v3310, %v3311
        %v3313 = vsel %vm1730, %v2695, -inf
        %v3314 = vsel %vm1730, %v2751, -inf
        %v3315 = vmax.f32 %v3313, %v3314
        %v3316 = vsel %vm1730, %v2702, -inf
        %v3317 = vsel %vm1730, %v2758, -inf
        %v3318 = vmax.f32 %v3316, %v3317
        %v3319 = vsel %vm1730, %v2709, -inf
        %v3320 = vsel %vm1730, %v2765, -inf
        %v3321 = vmax.f32 %v3319, %v3320
        %v3322 = vsel %vm1730, %v2716, -inf
        %v3323 = vsel %vm1730, %v2772, -inf
        %v3324 = vmax.f32 %v3322, %v3323
        %v3325 = vsel %vm1730, %v2723, -inf
        %v3326 = vsel %vm1730, %v2779, -inf
        %v3327 = vmax.f32 %v3325, %v3326
        %v3328 = vsel %vm1730, %v2730, -inf
        %v3329 = vsel %vm1730, %v2786, -inf
        %v3330 = vmax.f32 %v3328, %v3329
        %v3331 = vsel %vm1730, %v2793, -inf
        %v3332 = vsel %vm1730, %v2849, -inf
        %v3333 = vmax.f32 %v3331, %v3332
        %v3334 = vsel %vm1730, %v2800, -inf
        %v3335 = vsel %vm1730, %v2856, -inf
        %v3336 = vmax.f32 %v3334, %v3335
        %v3337 = vsel %vm1730, %v2807, -inf
        %v3338 = vsel %vm1730, %v2863, -inf
        %v3339 = vmax.f32 %v3337, %v3338
        %v3340 = vsel %vm1730, %v2814, -inf
        %v3341 = vsel %vm1730, %v2870, -inf
        %v3342 = vmax.f32 %v3340, %v3341
        %v3343 = vsel %vm1730, %v2821, -inf
        %v3344 = vsel %vm1730, %v2877, -inf
        %v3345 = vmax.f32 %v3343, %v3344
        %v3346 = vsel %vm1730, %v2828, -inf
        %v3347 = vsel %vm1730, %v2884, -inf
        %v3348 = vmax.f32 %v3346, %v3347
        %v3349 = vsel %vm1730, %v2835, -inf
        %v3350 = vsel %vm1730, %v2891, -inf
        %v3351 = vmax.f32 %v3349, %v3350
        %v3352 = vsel %vm1730, %v2842, -inf
        %v3353 = vsel %vm1730, %v2898, -inf
        %v3354 = vmax.f32 %v3352, %v3353
        %v3355 = vsel %vm1730, %v2905, -inf
        %v3356 = vsel %vm1730, %v2961, -inf
        %v3357 = vmax.f32 %v3355, %v3356
        %v3358 = vsel %vm1730, %v2912, -inf
        %v3359 = vsel %vm1730, %v2968, -inf
        %v3360 = vmax.f32 %v3358, %v3359
        %v3361 = vsel %vm1730, %v2919, -inf
        %v3362 = vsel %vm1730, %v2975, -inf
        %v3363 = vmax.f32 %v3361, %v3362
        %v3364 = vsel %vm1730, %v2926, -inf
        %v3365 = vsel %vm1730, %v2982, -inf
        %v3366 = vmax.f32 %v3364, %v3365
        %v3367 = vsel %vm1730, %v2933, -inf
        %v3368 = vsel %vm1730, %v2989, -inf
        %v3369 = vmax.f32 %v3367, %v3368
        %v3370 = vsel %vm1730, %v2940, -inf
        %v3371 = vsel %vm1730, %v2996, -inf
        %v3372 = vmax.f32 %v3370, %v3371
        %v3373 = vsel %vm1730, %v2947, -inf
        %v3374 = vsel %vm1730, %v3003, -inf
        %v3375 = vmax.f32 %v3373, %v3374
        %v3376 = vsel %vm1730, %v2954, -inf
        %v3377 = vsel %vm1730, %v3010, -inf
        %v3378 = vmax.f32 %v3376, %v3377
        %v3379 = vsel %vm1730, %v3017, -inf
        %v3380 = vsel %vm1730, %v3073, -inf
        %v3381 = vmax.f32 %v3379, %v3380
        %v3382 = vsel %vm1730, %v3024, -inf
        %v3383 = vsel %vm1730, %v3080, -inf
        %v3384 = vmax.f32 %v3382, %v3383
        %v3385 = vsel %vm1730, %v3031, -inf
        %v3386 = vsel %vm1730, %v3087, -inf
        %v3387 = vmax.f32 %v3385, %v3386
        %v3388 = vsel %vm1730, %v3038, -inf
        %v3389 = vsel %vm1730, %v3094, -inf
        %v3390 = vmax.f32 %v3388, %v3389
        %v3391 = vsel %vm1730, %v3045, -inf
        %v3392 = vsel %vm1730, %v3101, -inf
        %v3393 = vmax.f32 %v3391, %v3392
        %v3394 = vsel %vm1730, %v3052, -inf
        %v3395 = vsel %vm1730, %v3108, -inf
        %v3396 = vmax.f32 %v3394, %v3395
        %v3397 = vsel %vm1730, %v3059, -inf
        %v3398 = vsel %vm1730, %v3115, -inf
        %v3399 = vmax.f32 %v3397, %v3398
        %v3400 = vsel %vm1730, %v3066, -inf
        %v3401 = vsel %vm1730, %v3122, -inf
        %v3402 = vmax.f32 %v3400, %v3401
        %v3403 = vsel %vm1730, %v3129, -inf
        %v3404 = vsel %vm1730, %v3185, -inf
        %v3405 = vmax.f32 %v3403, %v3404
        %v3406 = vsel %vm1730, %v3136, -inf
        %v3407 = vsel %vm1730, %v3192, -inf
        %v3408 = vmax.f32 %v3406, %v3407
        %v3409 = vsel %vm1730, %v3143, -inf
        %v3410 = vsel %vm1730, %v3199, -inf
        %v3411 = vmax.f32 %v3409, %v3410
        %v3412 = vsel %vm1730, %v3150, -inf
        %v3413 = vsel %vm1730, %v3206, -inf
        %v3414 = vmax.f32 %v3412, %v3413
        %v3415 = vsel %vm1730, %v3157, -inf
        %v3416 = vsel %vm1730, %v3213, -inf
        %v3417 = vmax.f32 %v3415, %v3416
        %v3418 = vsel %vm1730, %v3164, -inf
        %v3419 = vsel %vm1730, %v3220, -inf
        %v3420 = vmax.f32 %v3418, %v3419
        %v3421 = vsel %vm1730, %v3171, -inf
        %v3422 = vsel %vm1730, %v3227, -inf
        %v3423 = vmax.f32 %v3421, %v3422
        %v3424 = vsel %vm1730, %v3178, -inf
        %v3425 = vsel %vm1730, %v3234, -inf
        %v3426 = vmax.f32 %v3424, %v3425
        %v3428 = vperm.slane %v317, 0
        %v3430 = vmul.f32 %v3237, %v3428
        %v3431 = vmul.f32 %v3240, %v3428
        %v3432 = vmul.f32 %v3243, %v3428
        %v3433 = vmul.f32 %v3246, %v3428
        %v3434 = vmul.f32 %v3249, %v3428
        %v3435 = vmul.f32 %v3252, %v3428
        %v3436 = vmul.f32 %v3255, %v3428
        %v3437 = vmul.f32 %v3258, %v3428
        %v3438 = vmul.f32 %v3261, %v3428
        %v3439 = vmul.f32 %v3264, %v3428
        %v3440 = vmul.f32 %v3267, %v3428
        %v3441 = vmul.f32 %v3270, %v3428
        %v3442 = vmul.f32 %v3273, %v3428
        %v3443 = vmul.f32 %v3276, %v3428
        %v3444 = vmul.f32 %v3279, %v3428
        %v3445 = vmul.f32 %v3282, %v3428
        %v3446 = vmul.f32 %v3285, %v3428
        %v3447 = vmul.f32 %v3288, %v3428
        %v3448 = vmul.f32 %v3291, %v3428
        %v3449 = vmul.f32 %v3294, %v3428
        %v3450 = vmul.f32 %v3297, %v3428
        %v3451 = vmul.f32 %v3300, %v3428
        %v3452 = vmul.f32 %v3303, %v3428
        %v3453 = vmul.f32 %v3306, %v3428
        %v3454 = vmul.f32 %v3309, %v3428
        %v3455 = vmul.f32 %v3312, %v3428
        %v3456 = vmul.f32 %v3315, %v3428
        %v3457 = vmul.f32 %v3318, %v3428
        %v3458 = vmul.f32 %v3321, %v3428
        %v3459 = vmul.f32 %v3324, %v3428
        %v3460 = vmul.f32 %v3327, %v3428
        %v3461 = vmul.f32 %v3330, %v3428
        %v3462 = vmul.f32 %v3333, %v3428
        %v3463 = vmul.f32 %v3336, %v3428
        %v3464 = vmul.f32 %v3339, %v3428
        %v3465 = vmul.f32 %v3342, %v3428
        %v3466 = vmul.f32 %v3345, %v3428
        %v3467 = vmul.f32 %v3348, %v3428
        %v3468 = vmul.f32 %v3351, %v3428
        %v3469 = vmul.f32 %v3354, %v3428
        %v3470 = vmul.f32 %v3357, %v3428
        %v3471 = vmul.f32 %v3360, %v3428
        %v3472 = vmul.f32 %v3363, %v3428
        %v3473 = vmul.f32 %v3366, %v3428
        %v3474 = vmul.f32 %v3369, %v3428
        %v3475 = vmul.f32 %v3372, %v3428
        %v3476 = vmul.f32 %v3375, %v3428
        %v3477 = vmul.f32 %v3378, %v3428
        %v3478 = vmul.f32 %v3381, %v3428
        %v3479 = vmul.f32 %v3384, %v3428
        %v3480 = vmul.f32 %v3387, %v3428
        %v3481 = vmul.f32 %v3390, %v3428
        %v3482 = vmul.f32 %v3393, %v3428
        %v3483 = vmul.f32 %v3396, %v3428
        %v3484 = vmul.f32 %v3399, %v3428
        %v3485 = vmul.f32 %v3402, %v3428
        %v3486 = vmul.f32 %v3405, %v3428
        %v3487 = vmul.f32 %v3408, %v3428
        %v3488 = vmul.f32 %v3411, %v3428
        %v3489 = vmul.f32 %v3414, %v3428
        %v3490 = vmul.f32 %v3417, %v3428
        %v3491 = vmul.f32 %v3420, %v3428
        %v3492 = vmul.f32 %v3423, %v3428
        %v3493 = vmul.f32 %v3426, %v3428
        %v3495 = vperm.slane %v318, 0
        %v3497 = vadd.f32 %v3430, %v3495
        %v3498 = vadd.f32 %v3431, %v3495
        %v3499 = vadd.f32 %v3432, %v3495
        %v3500 = vadd.f32 %v3433, %v3495
        %v3501 = vadd.f32 %v3434, %v3495
        %v3502 = vadd.f32 %v3435, %v3495
        %v3503 = vadd.f32 %v3436, %v3495
        %v3504 = vadd.f32 %v3437, %v3495
        %v3505 = vadd.f32 %v3438, %v3495
        %v3506 = vadd.f32 %v3439, %v3495
        %v3507 = vadd.f32 %v3440, %v3495
        %v3508 = vadd.f32 %v3441, %v3495
        %v3509 = vadd.f32 %v3442, %v3495
        %v3510 = vadd.f32 %v3443, %v3495
        %v3511 = vadd.f32 %v3444, %v3495
        %v3512 = vadd.f32 %v3445, %v3495
        %v3513 = vadd.f32 %v3446, %v3495
        %v3514 = vadd.f32 %v3447, %v3495
        %v3515 = vadd.f32 %v3448, %v3495
        %v3516 = vadd.f32 %v3449, %v3495
        %v3517 = vadd.f32 %v3450, %v3495
        %v3518 = vadd.f32 %v3451, %v3495
        %v3519 = vadd.f32 %v3452, %v3495
        %v3520 = vadd.f32 %v3453, %v3495
        %v3521 = vadd.f32 %v3454, %v3495
        %v3522 = vadd.f32 %v3455, %v3495
        %v3523 = vadd.f32 %v3456, %v3495
        %v3524 = vadd.f32 %v3457, %v3495
        %v3525 = vadd.f32 %v3458, %v3495
        %v3526 = vadd.f32 %v3459, %v3495
        %v3527 = vadd.f32 %v3460, %v3495
        %v3528 = vadd.f32 %v3461, %v3495
        %v3529 = vadd.f32 %v3462, %v3495
        %v3530 = vadd.f32 %v3463, %v3495
        %v3531 = vadd.f32 %v3464, %v3495
        %v3532 = vadd.f32 %v3465, %v3495
        %v3533 = vadd.f32 %v3466, %v3495
        %v3534 = vadd.f32 %v3467, %v3495
        %v3535 = vadd.f32 %v3468, %v3495
        %v3536 = vadd.f32 %v3469, %v3495
        %v3537 = vadd.f32 %v3470, %v3495
        %v3538 = vadd.f32 %v3471, %v3495
        %v3539 = vadd.f32 %v3472, %v3495
        %v3540 = vadd.f32 %v3473, %v3495
        %v3541 = vadd.f32 %v3474, %v3495
        %v3542 = vadd.f32 %v3475, %v3495
        %v3543 = vadd.f32 %v3476, %v3495
        %v3544 = vadd.f32 %v3477, %v3495
        %v3545 = vadd.f32 %v3478, %v3495
        %v3546 = vadd.f32 %v3479, %v3495
        %v3547 = vadd.f32 %v3480, %v3495
        %v3548 = vadd.f32 %v3481, %v3495
        %v3549 = vadd.f32 %v3482, %v3495
        %v3550 = vadd.f32 %v3483, %v3495
        %v3551 = vadd.f32 %v3484, %v3495
        %v3552 = vadd.f32 %v3485, %v3495
        %v3553 = vadd.f32 %v3486, %v3495
        %v3554 = vadd.f32 %v3487, %v3495
        %v3555 = vadd.f32 %v3488, %v3495
        %v3556 = vadd.f32 %v3489, %v3495
        %v3557 = vadd.f32 %v3490, %v3495
        %v3558 = vadd.f32 %v3491, %v3495
        %v3559 = vadd.f32 %v3492, %v3495
        %v3560 = vadd.f32 %v3493, %v3495
        %v3561 = vmax.f32 %v3497, 0.0
        %v3562 = vmax.f32 %v3498, 0.0
        %v3563 = vmax.f32 %v3499, 0.0
        %v3564 = vmax.f32 %v3500, 0.0
        %v3565 = vmax.f32 %v3501, 0.0
        %v3566 = vmax.f32 %v3502, 0.0
        %v3567 = vmax.f32 %v3503, 0.0
        %v3568 = vmax.f32 %v3504, 0.0
        %v3569 = vmax.f32 %v3505, 0.0
        %v3570 = vmax.f32 %v3506, 0.0
        %v3571 = vmax.f32 %v3507, 0.0
        %v3572 = vmax.f32 %v3508, 0.0
        %v3573 = vmax.f32 %v3509, 0.0
        %v3574 = vmax.f32 %v3510, 0.0
        %v3575 = vmax.f32 %v3511, 0.0
        %v3576 = vmax.f32 %v3512, 0.0
        %v3577 = vmax.f32 %v3513, 0.0
        %v3578 = vmax.f32 %v3514, 0.0
        %v3579 = vmax.f32 %v3515, 0.0
        %v3580 = vmax.f32 %v3516, 0.0
        %v3581 = vmax.f32 %v3517, 0.0
        %v3582 = vmax.f32 %v3518, 0.0
        %v3583 = vmax.f32 %v3519, 0.0
        %v3584 = vmax.f32 %v3520, 0.0
        %v3585 = vmax.f32 %v3521, 0.0
        %v3586 = vmax.f32 %v3522, 0.0
        %v3587 = vmax.f32 %v3523, 0.0
        %v3588 = vmax.f32 %v3524, 0.0
        %v3589 = vmax.f32 %v3525, 0.0
        %v3590 = vmax.f32 %v3526, 0.0
        %v3591 = vmax.f32 %v3527, 0.0
        %v3592 = vmax.f32 %v3528, 0.0
        %v3593 = vmax.f32 %v3529, 0.0
        %v3594 = vmax.f32 %v3530, 0.0
        %v3595 = vmax.f32 %v3531, 0.0
        %v3596 = vmax.f32 %v3532, 0.0
        %v3597 = vmax.f32 %v3533, 0.0
        %v3598 = vmax.f32 %v3534, 0.0
        %v3599 = vmax.f32 %v3535, 0.0
        %v3600 = vmax.f32 %v3536, 0.0
        %v3601 = vmax.f32 %v3537, 0.0
        %v3602 = vmax.f32 %v3538, 0.0
        %v3603 = vmax.f32 %v3539, 0.0
        %v3604 = vmax.f32 %v3540, 0.0
        %v3605 = vmax.f32 %v3541, 0.0
        %v3606 = vmax.f32 %v3542, 0.0
        %v3607 = vmax.f32 %v3543, 0.0
        %v3608 = vmax.f32 %v3544, 0.0
        %v3609 = vmax.f32 %v3545, 0.0
        %v3610 = vmax.f32 %v3546, 0.0
        %v3611 = vmax.f32 %v3547, 0.0
        %v3612 = vmax.f32 %v3548, 0.0
        %v3613 = vmax.f32 %v3549, 0.0
        %v3614 = vmax.f32 %v3550, 0.0
        %v3615 = vmax.f32 %v3551, 0.0
        %v3616 = vmax.f32 %v3552, 0.0
        %v3617 = vmax.f32 %v3553, 0.0
        %v3618 = vmax.f32 %v3554, 0.0
        %v3619 = vmax.f32 %v3555, 0.0
        %v3620 = vmax.f32 %v3556, 0.0
        %v3621 = vmax.f32 %v3557, 0.0
        %v3622 = vmax.f32 %v3558, 0.0
        %v3623 = vmax.f32 %v3559, 0.0
        %v3624 = vmax.f32 %v3560, 0.0
        %v3689 = vrot.slane %v3562, 7
        %vm3690 = vcmask 1041409
        %v3691 = vsel %vm3690, %v3689, %v3561
        %v3692 = vrot.slane %v3563, 6
        %vm3693 = vcmask 1042434
        %v3694 = vsel %vm3693, %v3692, %v3691
        %v3695 = vrot.slane %v3564, 5
        %vm3696 = vcmask 1043459
        %v3697 = vsel %vm3696, %v3695, %v3694
        %v3698 = vrot.slane %v3565, 4
        %vm3699 = vcmask 1044484
        %v3700 = vsel %vm3699, %v3698, %v3697
        %v3701 = vrot.slane %v3566, 3
        %vm3702 = vcmask 1045509
        %v3703 = vsel %vm3702, %v3701, %v3700
        %v3704 = vrot.slane %v3567, 2
        %vm3705 = vcmask 1046534
        %v3706 = vsel %vm3705, %v3704, %v3703
        %v3707 = vrot.slane %v3568, 1
        %vm3708 = vcmask 1047559
        %v3709 = vsel %vm3708, %v3707, %v3706
        %v3710 = vrot.slane %v3570, 7
        %v3711 = vsel %vm3690, %v3710, %v3569
        %v3712 = vrot.slane %v3571, 6
        %v3713 = vsel %vm3693, %v3712, %v3711
        %v3714 = vrot.slane %v3572, 5
        %v3715 = vsel %vm3696, %v3714, %v3713
        %v3716 = vrot.slane %v3573, 4
        %v3717 = vsel %vm3699, %v3716, %v3715
        %v3718 = vrot.slane %v3574, 3
        %v3719 = vsel %vm3702, %v3718, %v3717
        %v3720 = vrot.slane %v3575, 2
        %v3721 = vsel %vm3705, %v3720, %v3719
        %v3722 = vrot.slane %v3576, 1
        %v3723 = vsel %vm3708, %v3722, %v3721
        %v3724 = vrot.slane %v3578, 7
        %v3725 = vsel %vm3690, %v3724, %v3577
        %v3726 = vrot.slane %v3579, 6
        %v3727 = vsel %vm3693, %v3726, %v3725
        %v3728 = vrot.slane %v3580, 5
        %v3729 = vsel %vm3696, %v3728, %v3727
        %v3730 = vrot.slane %v3581, 4
        %v3731 = vsel %vm3699, %v3730, %v3729
        %v3732 = vrot.slane %v3582, 3
        %v3733 = vsel %vm3702, %v3732, %v3731
        %v3734 = vrot.slane %v3583, 2
        %v3735 = vsel %vm3705, %v3734, %v3733
        %v3736 = vrot.slane %v3584, 1
        %v3737 = vsel %vm3708, %v3736, %v3735
        %v3738 = vrot.slane %v3586, 7
        %v3739 = vsel %vm3690, %v3738, %v3585
        %v3740 = vrot.slane %v3587, 6
        %v3741 = vsel %vm3693, %v3740, %v3739
        %v3742 = vrot.slane %v3588, 5
        %v3743 = vsel %vm3696, %v3742, %v3741
        %v3744 = vrot.slane %v3589, 4
        %v3745 = vsel %vm3699, %v3744, %v3743
        %v3746 = vrot.slane %v3590, 3
        %v3747 = vsel %vm3702, %v3746, %v3745
        %v3748 = vrot.slane %v3591, 2
        %v3749 = vsel %vm3705, %v3748, %v3747
        %v3750 = vrot.slane %v3592, 1
        %v3751 = vsel %vm3708, %v3750, %v3749
        %v3752 = vrot.slane %v3594, 7
        %v3753 = vsel %vm3690, %v3752, %v3593
        %v3754 = vrot.slane %v3595, 6
        %v3755 = vsel %vm3693, %v3754, %v3753
        %v3756 = vrot.slane %v3596, 5
        %v3757 = vsel %vm3696, %v3756, %v3755
        %v3758 = vrot.slane %v3597, 4
        %v3759 = vsel %vm3699, %v3758, %v3757
        %v3760 = vrot.slane %v3598, 3
        %v3761 = vsel %vm3702, %v3760, %v3759
        %v3762 = vrot.slane %v3599, 2
        %v3763 = vsel %vm3705, %v3762, %v3761
        %v3764 = vrot.slane %v3600, 1
        %v3765 = vsel %vm3708, %v3764, %v3763
        %v3766 = vrot.slane %v3602, 7
        %v3767 = vsel %vm3690, %v3766, %v3601
        %v3768 = vrot.slane %v3603, 6
        %v3769 = vsel %vm3693, %v3768, %v3767
        %v3770 = vrot.slane %v3604, 5
        %v3771 = vsel %vm3696, %v3770, %v3769
        %v3772 = vrot.slane %v3605, 4
        %v3773 = vsel %vm3699, %v3772, %v3771
        %v3774 = vrot.slane %v3606, 3
        %v3775 = vsel %vm3702, %v3774, %v3773
        %v3776 = vrot.slane %v3607, 2
        %v3777 = vsel %vm3705, %v3776, %v3775
        %v3778 = vrot.slane %v3608, 1
        %v3779 = vsel %vm3708, %v3778, %v3777
        %v3780 = vrot.slane %v3610, 7
        %v3781 = vsel %vm3690, %v3780, %v3609
        %v3782 = vrot.slane %v3611, 6
        %v3783 = vsel %vm3693, %v3782, %v3781
        %v3784 = vrot.slane %v3612, 5
        %v3785 = vsel %vm3696, %v3784, %v3783
        %v3786 = vrot.slane %v3613, 4
        %v3787 = vsel %vm3699, %v3786, %v3785
        %v3788 = vrot.slane %v3614, 3
        %v3789 = vsel %vm3702, %v3788, %v3787
        %v3790 = vrot.slane %v3615, 2
        %v3791 = vsel %vm3705, %v3790, %v3789
        %v3792 = vrot.slane %v3616, 1
        %v3793 = vsel %vm3708, %v3792, %v3791
        %v3794 = vrot.slane %v3618, 7
        %v3795 = vsel %vm3690, %v3794, %v3617
        %v3796 = vrot.slane %v3619, 6
        %v3797 = vsel %vm3693, %v3796, %v3795
        %v3798 = vrot.slane %v3620, 5
        %v3799 = vsel %vm3696, %v3798, %v3797
        %v3800 = vrot.slane %v3621, 4
        %v3801 = vsel %vm3699, %v3800, %v3799
        %v3802 = vrot.slane %v3622, 3
        %v3803 = vsel %vm3702, %v3802, %v3801
        %v3804 = vrot.slane %v3623, 2
        %v3805 = vsel %vm3705, %v3804, %v3803
        %v3806 = vrot.slane %v3624, 1
        %v3807 = vsel %vm3708, %v3806, %v3805
        %v3816 = vrot.slane %v3737, 4
        %vm3817 = vcmask 1047556
        %v3818 = vsel %vm3817, %v3816, %v3709
        %v3819 = vrot.slane %v3709, 4
        %v3820 = vsel %vm3817, %v3737, %v3819
        %v3822 = vunpack.c.l.s4 1983009808
        %v3823 = vunpack.c.0.s8 %v3822
        %v3824 = vperm.slane %v3818, %v3823
        %v3826 = vunpack.c.l.s4 1983009808
        %v3827 = vunpack.c.0.s8 %v3826
        %v3828 = vperm.slane %v3820, %v3827
        %v3829 = vrot.slane %v3751, 4
        %v3830 = vsel %vm3817, %v3829, %v3723
        %v3831 = vrot.slane %v3723, 4
        %v3832 = vsel %vm3817, %v3751, %v3831
        %v3834 = vunpack.c.l.s4 1983009808
        %v3835 = vunpack.c.0.s8 %v3834
        %v3836 = vperm.slane %v3830, %v3835
        %v3838 = vunpack.c.l.s4 1983009808
        %v3839 = vunpack.c.0.s8 %v3838
        %v3840 = vperm.slane %v3832, %v3839
        %v3841 = vrot.slane %v3793, 4
        %v3842 = vsel %vm3817, %v3841, %v3765
        %v3843 = vrot.slane %v3765, 4
        %v3844 = vsel %vm3817, %v3793, %v3843
        %v3846 = vunpack.c.l.s4 1983009808
        %v3847 = vunpack.c.0.s8 %v3846
        %v3848 = vperm.slane %v3842, %v3847
        %v3850 = vunpack.c.l.s4 1983009808
        %v3851 = vunpack.c.0.s8 %v3850
        %v3852 = vperm.slane %v3844, %v3851
        %v3853 = vrot.slane %v3807, 4
        %v3854 = vsel %vm3817, %v3853, %v3779
        %v3855 = vrot.slane %v3779, 4
        %v3856 = vsel %vm3817, %v3807, %v3855
        %v3858 = vunpack.c.l.s4 1983009808
        %v3859 = vunpack.c.0.s8 %v3858
        %v3860 = vperm.slane %v3854, %v3859
        %v3862 = vunpack.c.l.s4 1983009808
        %v3863 = vunpack.c.0.s8 %v3862
        %v3864 = vperm.slane %v3856, %v3863
        %v3865 = vrot.slane %v3836, 4
        %v3866 = vsel %vm3817, %v3865, %v3824
        %v3867 = vrot.slane %v3824, 4
        %v3868 = vsel %vm3817, %v3836, %v3867
        %v3870 = vunpack.c.l.s4 1934713408
        %v3871 = vunpack.c.0.s8 %v3870
        %v3872 = vperm.slane %v3866, %v3871
        %v3874 = vunpack.c.l.s4 1934713408
        %v3875 = vunpack.c.0.s8 %v3874
        %v3876 = vperm.slane %v3868, %v3875
        %v3877 = vrot.slane %v3840, 4
        %v3878 = vsel %vm3817, %v3877, %v3828
        %v3879 = vrot.slane %v3828, 4
        %v3880 = vsel %vm3817, %v3840, %v3879
        %v3882 = vunpack.c.l.s4 1934713408
        %v3883 = vunpack.c.0.s8 %v3882
        %v3884 = vperm.slane %v3878, %v3883
        %v3886 = vunpack.c.l.s4 1934713408
        %v3887 = vunpack.c.0.s8 %v3886
        %v3888 = vperm.slane %v3880, %v3887
        %v3889 = vrot.slane %v3860, 4
        %v3890 = vsel %vm3817, %v3889, %v3848
        %v3891 = vrot.slane %v3848, 4
        %v3892 = vsel %vm3817, %v3860, %v3891
        %v3894 = vunpack.c.l.s4 1934713408
        %v3895 = vunpack.c.0.s8 %v3894
        %v3896 = vperm.slane %v3890, %v3895
        %v3898 = vunpack.c.l.s4 1934713408
        %v3899 = vunpack.c.0.s8 %v3898
        %v3900 = vperm.slane %v3892, %v3899
        %v3901 = vrot.slane %v3864, 4
        %v3902 = vsel %vm3817, %v3901, %v3852
        %v3903 = vrot.slane %v3852, 4
        %v3904 = vsel %vm3817, %v3864, %v3903
        %v3906 = vunpack.c.l.s4 1934713408
        %v3907 = vunpack.c.0.s8 %v3906
        %v3908 = vperm.slane %v3902, %v3907
        %v3910 = vunpack.c.l.s4 1934713408
        %v3911 = vunpack.c.0.s8 %v3910
        %v3912 = vperm.slane %v3904, %v3911
        %v3913 = vrot.slane %v3896, 4
        %v3914 = vsel %vm3817, %v3913, %v3872
        %v3915 = vrot.slane %v3872, 4
        %v3916 = vsel %vm3817, %v3896, %v3915
        %v3917 = vrot.slane %v3900, 4
        %v3918 = vsel %vm3817, %v3917, %v3876
        %v3919 = vrot.slane %v3876, 4
        %v3920 = vsel %vm3817, %v3900, %v3919
        %v3921 = vrot.slane %v3908, 4
        %v3922 = vsel %vm3817, %v3921, %v3884
        %v3923 = vrot.slane %v3884, 4
        %v3924 = vsel %vm3817, %v3908, %v3923
        %v3925 = vrot.slane %v3912, 4
        %v3926 = vsel %vm3817, %v3925, %v3888
        %v3927 = vrot.slane %v3888, 4
        %v3928 = vsel %vm3817, %v3912, %v3927
        %3930 = vrot.lane.b32.xlu0 %v3916, 16
        %v3931 = vpop.permute.xlu0 %3930
        %3934 = vrot.lane.b32.xlu0 %v3918, 32
        %v3935 = vpop.permute.xlu0 %3934
        %3938 = vrot.lane.b32.xlu0 %v3920, 48
        %v3939 = vpop.permute.xlu0 %3938
        %3942 = vrot.lane.b32.xlu0 %v3922, 64
        %v3943 = vpop.permute.xlu0 %3942
        %3946 = vrot.lane.b32.xlu0 %v3924, 80
        %v3947 = vpop.permute.xlu0 %3946
        %3950 = vrot.lane.b32.xlu0 %v3926, 96
        %v3951 = vpop.permute.xlu0 %3950
        %3954 = vrot.lane.b32.xlu0 %v3928, 112
        %v3955 = vpop.permute.xlu0 %3954
        %v3957 = vsel %vm1730, %v3914, %v3931
        %v3958 = vsel %vm1862, %v3957, %v3935
        %vm3959 = vcmask 392192
        %v3960 = vsel %vm3959, %v3958, %v3939
        %vm3961 = vcmask 523264
        %v3962 = vsel %vm3961, %v3960, %v3943
        %vm3963 = vcmask 654336
        %v3964 = vsel %vm3963, %v3962, %v3947
        %vm3965 = vcmask 785408
        %v3966 = vsel %vm3965, %v3964, %v3951
        %vm3967 = vcmask 916480
        %v3968 = vsel %vm3967, %v3966, %v3955
        %3969 = vst [vmem:[%s190] sm:$0xff] %v3968
        %s3970 = sand.u32 %s115, 1
        %s3971 = scalar_lea.sflag [#allocation4], %s3970
        %s3972 = sand.u32 %s115, 1
        %s3973 = smul.addr %s3972, 8
        %s3974 = scalar_lea.vmem [#allocation3], %s3973
        // Predicated region
        $region37: #{tpu_custom_call.1} parent=35 // pred_check
          %p3975 = pneg %p125
        $region38: #{tpu_custom_call.1} parent=35 // pred_check_branch
          %3977 = sbr.rel (%p3975) target = $region40
        $region39: #{tpu_custom_call.1} parent=35 // pred_region
          %3979 = vsyncadd %s3971, 0
          %s3980 = smul.addr %s18, 8
          %s3981 = scalar_lea.hbm %s4, %s3980
          %s3983 = sshll.u32 %s3974, 4
          %s3984 = int_to_ptr.vmem [resolvable:$true] %s3983
          %s3985 = sshll.u32 %s3981, 4
          %s3986 = int_to_ptr.hbm [resolvable:$true] %s3985
          %3988 = dma.vmem_to_hbm [thread:$0]  %s3984, 128, %s3986, %s3971
        $region40: #{tpu_custom_call.1} parent=35 // pred_fallthru
          _
      $region36: #{tpu_custom_call.1} parent=5 // pred_fallthru
        _
      %p3989 = scmp.le.s32.totalorder 2, %s13
      // Predicated region
      $region41: #{tpu_custom_call.1} parent=5 // pred_check
        %p3990 = pneg %p3989
      $region42: #{tpu_custom_call.1} parent=5 // pred_check_branch
        %3992 = sbr.rel (%p3990) target = $region44
      $region43: #{tpu_custom_call.1} parent=5 // pred_region
        %s3993 = ssub.s32 %s13, 2
        // Predicated region
        $region45: #{tpu_custom_call.1} parent=43 // pred_check
          %p3994 = pneg %p131
        $region46: #{tpu_custom_call.1} parent=43 // pred_check_branch
          %3996 = sbr.rel (%p3994) target = $region48
        $region47: #{tpu_custom_call.1} parent=43 // pred_region
          %s3997 = sand.u32 %s116, 1
          %s3998 = scalar_lea.sflag [#allocation4], %s3997
          %s3999 = sand.u32 %s116, 1
          %s4000 = smul.addr %s3999, 8
          %s4001 = scalar_lea.vmem [#allocation3], %s4000
          %4003 = dma.done %s3998, 128
        $region48: #{tpu_custom_call.1} parent=43 // pred_fallthru
          _
      $region44: #{tpu_custom_call.1} parent=5 // pred_fallthru
        _
    $region6: #{tpu_custom_call.1} parent=1 // loop_footer
      %s17 = sadd.s32 1, %s13
    $region7: #{tpu_custom_call.1} parent=1 // loop_footer_branch
      %12 = sbr.rel target = $region3
    $region8: #{tpu_custom_call.1} parent=1 // loop_exit
      _
    %4004 = vsyncpa [#allocation4], 1
    %s4005 = scalar_lea.sflag [#allocation4], 1
    %4006 = vsyncpa %s4005, 1

</llo_original>
